<compile_context>
chip_gen: v6e
topology: v6e:2x2x1
jax: 0.10.0
libtpu: 0.0.40
codegen_flags: <defaults>
</compile_context>

<pallas_src>
import functools

import jax
import jax.numpy as jnp
from jax import lax
from jax.experimental import pallas as pl
from jax.experimental.pallas import tpu as pltpu


def _sigmoid(v):
    # Single-EUP sigmoid: 0.5 * tanh(0.5 * x) + 0.5  (numerically stable).
    return 0.5 * jnp.tanh(0.5 * v) + 0.5


def _encoder_kernel(hidden_dims, seq_len, *refs):
    """Fused multi-layer LSTM encoder, batch=1.

    refs layout:
      x_ref                                  (S, D_in)   bf16
      per layer l: wih_ref (D_l, 4*H_l)      (bf16 for l==0, f32 otherwise)
                   whh_ref (H_l, 4*H_l)      f32
                   b_ref   (1,   4*H_l)      f32   (b_ih + b_hh)
      out_ref                                (1, out_dim) f32
      xp_ref  scratch                        (S, 4*H_0)   f32
    """
    num_layers = len(hidden_dims)

    x_ref = refs[0]
    w_refs = []
    pos = 1
    for _ in range(num_layers):
        w_refs.append((refs[pos], refs[pos + 1], refs[pos + 2]))
        pos += 3
    out_ref = refs[pos]
    xp_ref = refs[pos + 1]

    wih0_ref, _, b0_ref = w_refs[0]

    # ---- batched layer-0 input projection: ONE lane-dense MXU matmul ------
    # bf16 inputs, f32 accumulation, bias fused.  All four gates in lanes.
    xp_ref[...] = (
        jnp.dot(x_ref[...], wih0_ref[...], preferred_element_type=jnp.float32)
        + b0_ref[...]
    )

    # ---- hoist recurrent weights / biases into vregs (loaded once) --------
    whh_vals = [w_refs[l][1][...] for l in range(num_layers)]
    wih_vals = [None] + [w_refs[l][0][...] for l in range(1, num_layers)]
    b_vals = [None] + [w_refs[l][2][...] for l in range(1, num_layers)]

    # ---- fused recurrence over time: all layers per step -------------------
    init = tuple(
        (jnp.zeros((1, h), jnp.float32), jnp.zeros((1, h), jnp.float32))
        for h in hidden_dims
    )

    def step(t, carry):
        new_carry = []
        layer_in = None  # layer 0 reads its precomputed projection instead
        for l in range(num_layers):
            h = hidden_dims[l]
            h_prev, c_prev = carry[l]
            if l == 0:
                pre = xp_ref[pl.ds(t, 1), :]                       # (1, 4H)
            else:
                pre = (jnp.dot(layer_in, wih_vals[l],
                               preferred_element_type=jnp.float32)
                       + b_vals[l])
            gates = pre + jnp.dot(h_prev, whh_vals[l],
                                  preferred_element_type=jnp.float32)
            # PyTorch gate order along 4H: i | f | g | o  (static lane slices)
            i_g = _sigmoid(gates[:, 0 * h:1 * h])
            f_g = _sigmoid(gates[:, 1 * h:2 * h])
            g_g = jnp.tanh(gates[:, 2 * h:3 * h])
            o_g = _sigmoid(gates[:, 3 * h:4 * h])
            c_new = f_g * c_prev + i_g * g_g
            h_new = o_g * jnp.tanh(c_new)
            new_carry.append((h_new, c_new))
            # h_activ (Sigmoid) is applied to the layer *output* only (never
            # to the recurrent carry), and only between layers — exactly like
            # the PyTorch module applying it to `x`.
            if l < num_layers - 1:
                layer_in = _sigmoid(h_new)
        return tuple(new_carry)

    # Fully unroll short static sequences; cap the factor for long ones.
    unroll = True if seq_len <= 32 else 8
    final = lax.fori_loop(0, seq_len, step, init, unroll=unroll)

    # out_activ(h_n): only the last hidden state of the last layer is emitted.
    out_ref[...] = jnp.tanh(final[num_layers - 1][0])


def init_encoder_params(key, input_dim, out_dim, h_dims):
    """Deterministic PyTorch-style uniform(-1/sqrt(H), 1/sqrt(H)) init,
    in PyTorch layout: w_ih (4H, D_in), w_hh (4H, H), b_* (4H,)."""
    layer_dims = [input_dim] + list(h_dims) + [out_dim]
    params = []
    for idx in range(len(layer_dims) - 1):
        d_in, h = layer_dims[idx], layer_dims[idx + 1]
        k = 1.0 / jnp.sqrt(jnp.float32(h))
        key, k1, k2, k3, k4 = jax.random.split(key, 5)
        params.append(dict(
            w_ih=jax.random.uniform(k1, (4 * h, d_in), jnp.float32, -k, k),
            w_hh=jax.random.uniform(k2, (4 * h, h), jnp.float32, -k, k),
            b_ih=jax.random.uniform(k3, (4 * h,), jnp.float32, -k, k),
            b_hh=jax.random.uniform(k4, (4 * h,), jnp.float32, -k, k),
        ))
    return params


def prepare_encoder_params(params):
    """One-time conversion to kernel layout: gate-concatenated, transposed
    weights (D, 4H) / (H, 4H) and pre-summed bias (1, 4H).  Layer-0 W_ih is
    stored in bf16 (MXU input); all other weights and all biases stay f32."""
    prepared = []
    for l, p in enumerate(params):
        four_h = p["w_ih"].shape[0]
        wih = p["w_ih"].T                                     # (D, 4H) i|f|g|o
        whh = p["w_hh"].T.astype(jnp.float32)                 # (H, 4H)
        b = (p["b_ih"] + p["b_hh"]).reshape(1, four_h).astype(jnp.float32)
        wih = wih.astype(jnp.bfloat16 if l == 0 else jnp.float32)
        prepared.append(dict(wih=wih, whh=whh, b=b))
    return prepared


def encoder_forward(x, prepared):
    """Equivalent of Encoder.forward with h_activ=Sigmoid, out_activ=Tanh.

    x: (seq_len, input_dim).  Returns (out_dim,) = tanh(h_n).squeeze().
    """
    seq_len, _ = x.shape
    hidden_dims = tuple(int(p["whh"].shape[0]) for p in prepared)
    out_dim = hidden_dims[-1]
    h0 = hidden_dims[0]

    kernel = functools.partial(_encoder_kernel, hidden_dims, int(seq_len))

    flat_inputs = [x.astype(jnp.bfloat16)]
    for p in prepared:
        flat_inputs += [p["wih"], p["whh"], p["b"]]

    # NOTE: for very long sequences on v7x (64 MiB VMEM) the (S, 4*H0) xproj
    # scratch could be tiled over S; at these sizes everything fits easily.
    out = pl.pallas_call(
        kernel,
        out_shape=jax.ShapeDtypeStruct((1, out_dim), jnp.float32),
        in_specs=[pl.BlockSpec(memory_space=pltpu.MemorySpace.VMEM)]
        * len(flat_inputs),
        out_specs=pl.BlockSpec(memory_space=pltpu.MemorySpace.VMEM),
        scratch_shapes=[pltpu.VMEM((seq_len, 4 * h0), jnp.float32)],
    )(*flat_inputs)
    return out[0]


if __name__ == "__main__":
    SEQ, INPUT_DIM, H_DIMS, OUT_DIM = 8, 16, [32], 8

    root = jax.random.PRNGKey(0)
    k_x, k_p = jax.random.split(root)
    x = jax.random.normal(k_x, (SEQ, INPUT_DIM), jnp.float32)
    params = init_encoder_params(k_p, INPUT_DIM, OUT_DIM, H_DIMS)
    prepared = prepare_encoder_params(params)

    z = encoder_forward(x, prepared)
    jax.block_until_ready(z)
    assert z.shape == (OUT_DIM,), z.shape
    print("KERNEL_OK")
</pallas_src>

<mosaic_0001>
module attributes {stable_mosaic.version = 11 : i64} {
  func.func @_encoder_kernel(%arg0: memref<8x16xbf16, #tpu.memory_space<vmem>>, %arg1: memref<16x128xbf16, #tpu.memory_space<vmem>>, %arg2: memref<32x128xf32, #tpu.memory_space<vmem>>, %arg3: memref<1x128xf32, #tpu.memory_space<vmem>>, %arg4: memref<32x32xf32, #tpu.memory_space<vmem>>, %arg5: memref<8x32xf32, #tpu.memory_space<vmem>>, %arg6: memref<1x32xf32, #tpu.memory_space<vmem>>, %arg7: memref<1x8xf32, #tpu.memory_space<vmem>>, %arg8: memref<8x128xf32, #tpu.memory_space<vmem>>) attributes {dimension_semantics = [], scalar_prefetch = 0 : i64, scratch_operands = 1 : i64, tpu.core_type = #tpu.core_type<tc>} {
    %c0 = arith.constant 0 : index
    %c0_0 = arith.constant 0 : index
    %0 = vector.load %arg0[%c0, %c0_0] : memref<8x16xbf16, #tpu.memory_space<vmem>>, vector<8x16xbf16>
    %c0_1 = arith.constant 0 : index
    %c0_2 = arith.constant 0 : index
    %1 = vector.load %arg1[%c0_1, %c0_2] : memref<16x128xbf16, #tpu.memory_space<vmem>>, vector<16x128xbf16>
    %cst = arith.constant dense<0.000000e+00> : vector<8x128xf32>
    %2 = tpu.matmul %0, %1, %cst {dimension_numbers = #tpu.dot_dimension_numbers<[1], [0], [0], [1], [0, 0, 1, 1], [], []>} : vector<8x16xbf16>, vector<16x128xbf16>, vector<8x128xf32> -> vector<8x128xf32>
    %c0_3 = arith.constant 0 : index
    %c0_4 = arith.constant 0 : index
    %3 = vector.load %arg3[%c0_3, %c0_4] : memref<1x128xf32, #tpu.memory_space<vmem>>, vector<1x128xf32>
    %4 = vector.broadcast %3 : vector<1x128xf32> to vector<8x128xf32>
    %5 = arith.addf %2, %4 : vector<8x128xf32>
    %c0_5 = arith.constant 0 : index
    %c0_6 = arith.constant 0 : index
    %6 = vector.load %arg8[%c0_5, %c0_6] : memref<8x128xf32, #tpu.memory_space<vmem>>, vector<8x128xf32>
    tpu.vector_store %arg8[%c0_5, %c0_6], %5 {strides = array<i32>} : memref<8x128xf32, #tpu.memory_space<vmem>>, vector<8x128xf32>,
    %c0_7 = arith.constant 0 : index
    %c0_8 = arith.constant 0 : index
    %7 = vector.load %arg2[%c0_7, %c0_8] : memref<32x128xf32, #tpu.memory_space<vmem>>, vector<32x128xf32>
    %c0_9 = arith.constant 0 : index
    %c0_10 = arith.constant 0 : index
    %8 = vector.load %arg5[%c0_9, %c0_10] : memref<8x32xf32, #tpu.memory_space<vmem>>, vector<8x32xf32>
    %c0_11 = arith.constant 0 : index
    %c0_12 = arith.constant 0 : index
    %9 = vector.load %arg4[%c0_11, %c0_12] : memref<32x32xf32, #tpu.memory_space<vmem>>, vector<32x32xf32>
    %c0_13 = arith.constant 0 : index
    %c0_14 = arith.constant 0 : index
    %10 = vector.load %arg6[%c0_13, %c0_14] : memref<1x32xf32, #tpu.memory_space<vmem>>, vector<1x32xf32>
    %cst_15 = arith.constant 0.000000e+00 : f32
    %11 = vector.broadcast %cst_15 : f32 to vector<1x32xf32>
    %cst_16 = arith.constant 0.000000e+00 : f32
    %12 = vector.broadcast %cst_16 : f32 to vector<1x32xf32>
    %cst_17 = arith.constant 0.000000e+00 : f32
    %13 = vector.broadcast %cst_17 : f32 to vector<1x8xf32>
    %cst_18 = arith.constant 0.000000e+00 : f32
    %14 = vector.broadcast %cst_18 : f32 to vector<1x8xf32>
    %c0_i32 = arith.constant 0 : i32
    %15 = arith.index_cast %c0_i32 : i32 to index
    %c0_19 = arith.constant 0 : index
    %16 = vector.load %arg8[%15, %c0_19] : memref<8x128xf32, #tpu.memory_space<vmem>>, vector<1x128xf32>
    %cst_20 = arith.constant dense<0.000000e+00> : vector<1x128xf32>
    %17 = tpu.matmul %11, %7, %cst_20 {dimension_numbers = #tpu.dot_dimension_numbers<[1], [0], [0], [1], [0, 0, 1, 1], [], []>} : vector<1x32xf32>, vector<32x128xf32>, vector<1x128xf32> -> vector<1x128xf32>
    %18 = arith.addf %16, %17 : vector<1x128xf32>
    %19 = vector.extract_strided_slice %18 {offsets = [0, 0], sizes = [1, 32], strides = [1, 1]} : vector<1x128xf32> to vector<1x32xf32>
    %cst_21 = arith.constant 5.000000e-01 : f32
    %20 = vector.broadcast %cst_21 : f32 to vector<1x32xf32>
    %21 = arith.mulf %20, %19 : vector<1x32xf32>
    %22 = math.tanh %21 : vector<1x32xf32>
    %cst_22 = arith.constant 5.000000e-01 : f32
    %23 = vector.broadcast %cst_22 : f32 to vector<1x32xf32>
    %24 = arith.mulf %23, %22 : vector<1x32xf32>
    %cst_23 = arith.constant 5.000000e-01 : f32
    %25 = vector.broadcast %cst_23 : f32 to vector<1x32xf32>
    %26 = arith.addf %24, %25 : vector<1x32xf32>
    %27 = vector.extract_strided_slice %18 {offsets = [0, 32], sizes = [1, 32], strides = [1, 1]} : vector<1x128xf32> to vector<1x32xf32>
    %cst_24 = arith.constant 5.000000e-01 : f32
    %28 = vector.broadcast %cst_24 : f32 to vector<1x32xf32>
    %29 = arith.mulf %28, %27 : vector<1x32xf32>
    %30 = math.tanh %29 : vector<1x32xf32>
    %cst_25 = arith.constant 5.000000e-01 : f32
    %31 = vector.broadcast %cst_25 : f32 to vector<1x32xf32>
    %32 = arith.mulf %31, %30 : vector<1x32xf32>
    %cst_26 = arith.constant 5.000000e-01 : f32
    %33 = vector.broadcast %cst_26 : f32 to vector<1x32xf32>
    %34 = arith.addf %32, %33 : vector<1x32xf32>
    %35 = vector.extract_strided_slice %18 {offsets = [0, 64], sizes = [1, 32], strides = [1, 1]} : vector<1x128xf32> to vector<1x32xf32>
    %36 = math.tanh %35 : vector<1x32xf32>
    %37 = vector.extract_strided_slice %18 {offsets = [0, 96], sizes = [1, 32], strides = [1, 1]} : vector<1x128xf32> to vector<1x32xf32>
    %cst_27 = arith.constant 5.000000e-01 : f32
    %38 = vector.broadcast %cst_27 : f32 to vector<1x32xf32>
    %39 = arith.mulf %38, %37 : vector<1x32xf32>
    %40 = math.tanh %39 : vector<1x32xf32>
    %cst_28 = arith.constant 5.000000e-01 : f32
    %41 = vector.broadcast %cst_28 : f32 to vector<1x32xf32>
    %42 = arith.mulf %41, %40 : vector<1x32xf32>
    %cst_29 = arith.constant 5.000000e-01 : f32
    %43 = vector.broadcast %cst_29 : f32 to vector<1x32xf32>
    %44 = arith.addf %42, %43 : vector<1x32xf32>
    %45 = arith.mulf %34, %12 : vector<1x32xf32>
    %46 = arith.mulf %26, %36 : vector<1x32xf32>
    %47 = arith.addf %45, %46 : vector<1x32xf32>
    %48 = math.tanh %47 : vector<1x32xf32>
    %49 = arith.mulf %44, %48 : vector<1x32xf32>
    %cst_30 = arith.constant 5.000000e-01 : f32
    %50 = vector.broadcast %cst_30 : f32 to vector<1x32xf32>
    %51 = arith.mulf %50, %49 : vector<1x32xf32>
    %52 = math.tanh %51 : vector<1x32xf32>
    %cst_31 = arith.constant 5.000000e-01 : f32
    %53 = vector.broadcast %cst_31 : f32 to vector<1x32xf32>
    %54 = arith.mulf %53, %52 : vector<1x32xf32>
    %cst_32 = arith.constant 5.000000e-01 : f32
    %55 = vector.broadcast %cst_32 : f32 to vector<1x32xf32>
    %56 = arith.addf %54, %55 : vector<1x32xf32>
    %cst_33 = arith.constant dense<0.000000e+00> : vector<1x32xf32>
    %57 = tpu.matmul %56, %9, %cst_33 {dimension_numbers = #tpu.dot_dimension_numbers<[1], [0], [0], [1], [0, 0, 1, 1], [], []>} : vector<1x32xf32>, vector<32x32xf32>, vector<1x32xf32> -> vector<1x32xf32>
    %58 = arith.addf %57, %10 : vector<1x32xf32>
    %cst_34 = arith.constant dense<0.000000e+00> : vector<1x32xf32>
    %59 = tpu.matmul %13, %8, %cst_34 {dimension_numbers = #tpu.dot_dimension_numbers<[1], [0], [0], [1], [0, 0, 1, 1], [], []>} : vector<1x8xf32>, vector<8x32xf32>, vector<1x32xf32> -> vector<1x32xf32>
    %60 = arith.addf %58, %59 : vector<1x32xf32>
    %61 = vector.extract_strided_slice %60 {offsets = [0, 0], sizes = [1, 8], strides = [1, 1]} : vector<1x32xf32> to vector<1x8xf32>
    %cst_35 = arith.constant 5.000000e-01 : f32
    %62 = vector.broadcast %cst_35 : f32 to vector<1x8xf32>
    %63 = arith.mulf %62, %61 : vector<1x8xf32>
    %64 = math.tanh %63 : vector<1x8xf32>
    %cst_36 = arith.constant 5.000000e-01 : f32
    %65 = vector.broadcast %cst_36 : f32 to vector<1x8xf32>
    %66 = arith.mulf %65, %64 : vector<1x8xf32>
    %cst_37 = arith.constant 5.000000e-01 : f32
    %67 = vector.broadcast %cst_37 : f32 to vector<1x8xf32>
    %68 = arith.addf %66, %67 : vector<1x8xf32>
    %69 = vector.extract_strided_slice %60 {offsets = [0, 8], sizes = [1, 8], strides = [1, 1]} : vector<1x32xf32> to vector<1x8xf32>
    %cst_38 = arith.constant 5.000000e-01 : f32
    %70 = vector.broadcast %cst_38 : f32 to vector<1x8xf32>
    %71 = arith.mulf %70, %69 : vector<1x8xf32>
    %72 = math.tanh %71 : vector<1x8xf32>
    %cst_39 = arith.constant 5.000000e-01 : f32
    %73 = vector.broadcast %cst_39 : f32 to vector<1x8xf32>
    %74 = arith.mulf %73, %72 : vector<1x8xf32>
    %cst_40 = arith.constant 5.000000e-01 : f32
    %75 = vector.broadcast %cst_40 : f32 to vector<1x8xf32>
    %76 = arith.addf %74, %75 : vector<1x8xf32>
    %77 = vector.extract_strided_slice %60 {offsets = [0, 16], sizes = [1, 8], strides = [1, 1]} : vector<1x32xf32> to vector<1x8xf32>
    %78 = math.tanh %77 : vector<1x8xf32>
    %79 = vector.extract_strided_slice %60 {offsets = [0, 24], sizes = [1, 8], strides = [1, 1]} : vector<1x32xf32> to vector<1x8xf32>
    %cst_41 = arith.constant 5.000000e-01 : f32
    %80 = vector.broadcast %cst_41 : f32 to vector<1x8xf32>
    %81 = arith.mulf %80, %79 : vector<1x8xf32>
    %82 = math.tanh %81 : vector<1x8xf32>
    %cst_42 = arith.constant 5.000000e-01 : f32
    %83 = vector.broadcast %cst_42 : f32 to vector<1x8xf32>
    %84 = arith.mulf %83, %82 : vector<1x8xf32>
    %cst_43 = arith.constant 5.000000e-01 : f32
    %85 = vector.broadcast %cst_43 : f32 to vector<1x8xf32>
    %86 = arith.addf %84, %85 : vector<1x8xf32>
    %87 = arith.mulf %76, %14 : vector<1x8xf32>
    %88 = arith.mulf %68, %78 : vector<1x8xf32>
    %89 = arith.addf %87, %88 : vector<1x8xf32>
    %90 = math.tanh %89 : vector<1x8xf32>
    %91 = arith.mulf %86, %90 : vector<1x8xf32>
    %c1_i32 = arith.constant 1 : i32
    %92 = arith.index_cast %c1_i32 : i32 to index
    %c0_44 = arith.constant 0 : index
    %93 = vector.load %arg8[%92, %c0_44] : memref<8x128xf32, #tpu.memory_space<vmem>>, vector<1x128xf32>
    %cst_45 = arith.constant dense<0.000000e+00> : vector<1x128xf32>
    %94 = tpu.matmul %49, %7, %cst_45 {dimension_numbers = #tpu.dot_dimension_numbers<[1], [0], [0], [1], [0, 0, 1, 1], [], []>} : vector<1x32xf32>, vector<32x128xf32>, vector<1x128xf32> -> vector<1x128xf32>
    %95 = arith.addf %93, %94 : vector<1x128xf32>
    %96 = vector.extract_strided_slice %95 {offsets = [0, 0], sizes = [1, 32], strides = [1, 1]} : vector<1x128xf32> to vector<1x32xf32>
    %cst_46 = arith.constant 5.000000e-01 : f32
    %97 = vector.broadcast %cst_46 : f32 to vector<1x32xf32>
    %98 = arith.mulf %97, %96 : vector<1x32xf32>
    %99 = math.tanh %98 : vector<1x32xf32>
    %cst_47 = arith.constant 5.000000e-01 : f32
    %100 = vector.broadcast %cst_47 : f32 to vector<1x32xf32>
    %101 = arith.mulf %100, %99 : vector<1x32xf32>
    %cst_48 = arith.constant 5.000000e-01 : f32
    %102 = vector.broadcast %cst_48 : f32 to vector<1x32xf32>
    %103 = arith.addf %101, %102 : vector<1x32xf32>
    %104 = vector.extract_strided_slice %95 {offsets = [0, 32], sizes = [1, 32], strides = [1, 1]} : vector<1x128xf32> to vector<1x32xf32>
    %cst_49 = arith.constant 5.000000e-01 : f32
    %105 = vector.broadcast %cst_49 : f32 to vector<1x32xf32>
    %106 = arith.mulf %105, %104 : vector<1x32xf32>
    %107 = math.tanh %106 : vector<1x32xf32>
    %cst_50 = arith.constant 5.000000e-01 : f32
    %108 = vector.broadcast %cst_50 : f32 to vector<1x32xf32>
    %109 = arith.mulf %108, %107 : vector<1x32xf32>
    %cst_51 = arith.constant 5.000000e-01 : f32
    %110 = vector.broadcast %cst_51 : f32 to vector<1x32xf32>
    %111 = arith.addf %109, %110 : vector<1x32xf32>
    %112 = vector.extract_strided_slice %95 {offsets = [0, 64], sizes = [1, 32], strides = [1, 1]} : vector<1x128xf32> to vector<1x32xf32>
    %113 = math.tanh %112 : vector<1x32xf32>
    %114 = vector.extract_strided_slice %95 {offsets = [0, 96], sizes = [1, 32], strides = [1, 1]} : vector<1x128xf32> to vector<1x32xf32>
    %cst_52 = arith.constant 5.000000e-01 : f32
    %115 = vector.broadcast %cst_52 : f32 to vector<1x32xf32>
    %116 = arith.mulf %115, %114 : vector<1x32xf32>
    %117 = math.tanh %116 : vector<1x32xf32>
    %cst_53 = arith.constant 5.000000e-01 : f32
    %118 = vector.broadcast %cst_53 : f32 to vector<1x32xf32>
    %119 = arith.mulf %118, %117 : vector<1x32xf32>
    %cst_54 = arith.constant 5.000000e-01 : f32
    %120 = vector.broadcast %cst_54 : f32 to vector<1x32xf32>
    %121 = arith.addf %119, %120 : vector<1x32xf32>
    %122 = arith.mulf %111, %47 : vector<1x32xf32>
    %123 = arith.mulf %103, %113 : vector<1x32xf32>
    %124 = arith.addf %122, %123 : vector<1x32xf32>
    %125 = math.tanh %124 : vector<1x32xf32>
    %126 = arith.mulf %121, %125 : vector<1x32xf32>
    %cst_55 = arith.constant 5.000000e-01 : f32
    %127 = vector.broadcast %cst_55 : f32 to vector<1x32xf32>
    %128 = arith.mulf %127, %126 : vector<1x32xf32>
    %129 = math.tanh %128 : vector<1x32xf32>
    %cst_56 = arith.constant 5.000000e-01 : f32
    %130 = vector.broadcast %cst_56 : f32 to vector<1x32xf32>
    %131 = arith.mulf %130, %129 : vector<1x32xf32>
    %cst_57 = arith.constant 5.000000e-01 : f32
    %132 = vector.broadcast %cst_57 : f32 to vector<1x32xf32>
    %133 = arith.addf %131, %132 : vector<1x32xf32>
    %cst_58 = arith.constant dense<0.000000e+00> : vector<1x32xf32>
    %134 = tpu.matmul %133, %9, %cst_58 {dimension_numbers = #tpu.dot_dimension_numbers<[1], [0], [0], [1], [0, 0, 1, 1], [], []>} : vector<1x32xf32>, vector<32x32xf32>, vector<1x32xf32> -> vector<1x32xf32>
    %135 = arith.addf %134, %10 : vector<1x32xf32>
    %cst_59 = arith.constant dense<0.000000e+00> : vector<1x32xf32>
    %136 = tpu.matmul %91, %8, %cst_59 {dimension_numbers = #tpu.dot_dimension_numbers<[1], [0], [0], [1], [0, 0, 1, 1], [], []>} : vector<1x8xf32>, vector<8x32xf32>, vector<1x32xf32> -> vector<1x32xf32>
    %137 = arith.addf %135, %136 : vector<1x32xf32>
    %138 = vector.extract_strided_slice %137 {offsets = [0, 0], sizes = [1, 8], strides = [1, 1]} : vector<1x32xf32> to vector<1x8xf32>
    %cst_60 = arith.constant 5.000000e-01 : f32
    %139 = vector.broadcast %cst_60 : f32 to vector<1x8xf32>
    %140 = arith.mulf %139, %138 : vector<1x8xf32>
    %141 = math.tanh %140 : vector<1x8xf32>
    %cst_61 = arith.constant 5.000000e-01 : f32
    %142 = vector.broadcast %cst_61 : f32 to vector<1x8xf32>
    %143 = arith.mulf %142, %141 : vector<1x8xf32>
    %cst_62 = arith.constant 5.000000e-01 : f32
    %144 = vector.broadcast %cst_62 : f32 to vector<1x8xf32>
    %145 = arith.addf %143, %144 : vector<1x8xf32>
    %146 = vector.extract_strided_slice %137 {offsets = [0, 8], sizes = [1, 8], strides = [1, 1]} : vector<1x32xf32> to vector<1x8xf32>
    %cst_63 = arith.constant 5.000000e-01 : f32
    %147 = vector.broadcast %cst_63 : f32 to vector<1x8xf32>
    %148 = arith.mulf %147, %146 : vector<1x8xf32>
    %149 = math.tanh %148 : vector<1x8xf32>
    %cst_64 = arith.constant 5.000000e-01 : f32
    %150 = vector.broadcast %cst_64 : f32 to vector<1x8xf32>
    %151 = arith.mulf %150, %149 : vector<1x8xf32>
    %cst_65 = arith.constant 5.000000e-01 : f32
    %152 = vector.broadcast %cst_65 : f32 to vector<1x8xf32>
    %153 = arith.addf %151, %152 : vector<1x8xf32>
    %154 = vector.extract_strided_slice %137 {offsets = [0, 16], sizes = [1, 8], strides = [1, 1]} : vector<1x32xf32> to vector<1x8xf32>
    %155 = math.tanh %154 : vector<1x8xf32>
    %156 = vector.extract_strided_slice %137 {offsets = [0, 24], sizes = [1, 8], strides = [1, 1]} : vector<1x32xf32> to vector<1x8xf32>
    %cst_66 = arith.constant 5.000000e-01 : f32
    %157 = vector.broadcast %cst_66 : f32 to vector<1x8xf32>
    %158 = arith.mulf %157, %156 : vector<1x8xf32>
    %159 = math.tanh %158 : vector<1x8xf32>
    %cst_67 = arith.constant 5.000000e-01 : f32
    %160 = vector.broadcast %cst_67 : f32 to vector<1x8xf32>
    %161 = arith.mulf %160, %159 : vector<1x8xf32>
    %cst_68 = arith.constant 5.000000e-01 : f32
    %162 = vector.broadcast %cst_68 : f32 to vector<1x8xf32>
    %163 = arith.addf %161, %162 : vector<1x8xf32>
    %164 = arith.mulf %153, %89 : vector<1x8xf32>
    %165 = arith.mulf %145, %155 : vector<1x8xf32>
    %166 = arith.addf %164, %165 : vector<1x8xf32>
    %167 = math.tanh %166 : vector<1x8xf32>
    %168 = arith.mulf %163, %167 : vector<1x8xf32>
    %c2_i32 = arith.constant 2 : i32
    %169 = arith.index_cast %c2_i32 : i32 to index
    %c0_69 = arith.constant 0 : index
    %170 = vector.load %arg8[%169, %c0_69] : memref<8x128xf32, #tpu.memory_space<vmem>>, vector<1x128xf32>
    %cst_70 = arith.constant dense<0.000000e+00> : vector<1x128xf32>
    %171 = tpu.matmul %126, %7, %cst_70 {dimension_numbers = #tpu.dot_dimension_numbers<[1], [0], [0], [1], [0, 0, 1, 1], [], []>} : vector<1x32xf32>, vector<32x128xf32>, vector<1x128xf32> -> vector<1x128xf32>
    %172 = arith.addf %170, %171 : vector<1x128xf32>
    %173 = vector.extract_strided_slice %172 {offsets = [0, 0], sizes = [1, 32], strides = [1, 1]} : vector<1x128xf32> to vector<1x32xf32>
    %cst_71 = arith.constant 5.000000e-01 : f32
    %174 = vector.broadcast %cst_71 : f32 to vector<1x32xf32>
    %175 = arith.mulf %174, %173 : vector<1x32xf32>
    %176 = math.tanh %175 : vector<1x32xf32>
    %cst_72 = arith.constant 5.000000e-01 : f32
    %177 = vector.broadcast %cst_72 : f32 to vector<1x32xf32>
    %178 = arith.mulf %177, %176 : vector<1x32xf32>
    %cst_73 = arith.constant 5.000000e-01 : f32
    %179 = vector.broadcast %cst_73 : f32 to vector<1x32xf32>
    %180 = arith.addf %178, %179 : vector<1x32xf32>
    %181 = vector.extract_strided_slice %172 {offsets = [0, 32], sizes = [1, 32], strides = [1, 1]} : vector<1x128xf32> to vector<1x32xf32>
    %cst_74 = arith.constant 5.000000e-01 : f32
    %182 = vector.broadcast %cst_74 : f32 to vector<1x32xf32>
    %183 = arith.mulf %182, %181 : vector<1x32xf32>
    %184 = math.tanh %183 : vector<1x32xf32>
    %cst_75 = arith.constant 5.000000e-01 : f32
    %185 = vector.broadcast %cst_75 : f32 to vector<1x32xf32>
    %186 = arith.mulf %185, %184 : vector<1x32xf32>
    %cst_76 = arith.constant 5.000000e-01 : f32
    %187 = vector.broadcast %cst_76 : f32 to vector<1x32xf32>
    %188 = arith.addf %186, %187 : vector<1x32xf32>
    %189 = vector.extract_strided_slice %172 {offsets = [0, 64], sizes = [1, 32], strides = [1, 1]} : vector<1x128xf32> to vector<1x32xf32>
    %190 = math.tanh %189 : vector<1x32xf32>
    %191 = vector.extract_strided_slice %172 {offsets = [0, 96], sizes = [1, 32], strides = [1, 1]} : vector<1x128xf32> to vector<1x32xf32>
    %cst_77 = arith.constant 5.000000e-01 : f32
    %192 = vector.broadcast %cst_77 : f32 to vector<1x32xf32>
    %193 = arith.mulf %192, %191 : vector<1x32xf32>
    %194 = math.tanh %193 : vector<1x32xf32>
    %cst_78 = arith.constant 5.000000e-01 : f32
    %195 = vector.broadcast %cst_78 : f32 to vector<1x32xf32>
    %196 = arith.mulf %195, %194 : vector<1x32xf32>
    %cst_79 = arith.constant 5.000000e-01 : f32
    %197 = vector.broadcast %cst_79 : f32 to vector<1x32xf32>
    %198 = arith.addf %196, %197 : vector<1x32xf32>
    %199 = arith.mulf %188, %124 : vector<1x32xf32>
    %200 = arith.mulf %180, %190 : vector<1x32xf32>
    %201 = arith.addf %199, %200 : vector<1x32xf32>
    %202 = math.tanh %201 : vector<1x32xf32>
    %203 = arith.mulf %198, %202 : vector<1x32xf32>
    %cst_80 = arith.constant 5.000000e-01 : f32
    %204 = vector.broadcast %cst_80 : f32 to vector<1x32xf32>
    %205 = arith.mulf %204, %203 : vector<1x32xf32>
    %206 = math.tanh %205 : vector<1x32xf32>
    %cst_81 = arith.constant 5.000000e-01 : f32
    %207 = vector.broadcast %cst_81 : f32 to vector<1x32xf32>
    %208 = arith.mulf %207, %206 : vector<1x32xf32>
    %cst_82 = arith.constant 5.000000e-01 : f32
    %209 = vector.broadcast %cst_82 : f32 to vector<1x32xf32>
    %210 = arith.addf %208, %209 : vector<1x32xf32>
    %cst_83 = arith.constant dense<0.000000e+00> : vector<1x32xf32>
    %211 = tpu.matmul %210, %9, %cst_83 {dimension_numbers = #tpu.dot_dimension_numbers<[1], [0], [0], [1], [0, 0, 1, 1], [], []>} : vector<1x32xf32>, vector<32x32xf32>, vector<1x32xf32> -> vector<1x32xf32>
    %212 = arith.addf %211, %10 : vector<1x32xf32>
    %cst_84 = arith.constant dense<0.000000e+00> : vector<1x32xf32>
    %213 = tpu.matmul %168, %8, %cst_84 {dimension_numbers = #tpu.dot_dimension_numbers<[1], [0], [0], [1], [0, 0, 1, 1], [], []>} : vector<1x8xf32>, vector<8x32xf32>, vector<1x32xf32> -> vector<1x32xf32>
    %214 = arith.addf %212, %213 : vector<1x32xf32>
    %215 = vector.extract_strided_slice %214 {offsets = [0, 0], sizes = [1, 8], strides = [1, 1]} : vector<1x32xf32> to vector<1x8xf32>
    %cst_85 = arith.constant 5.000000e-01 : f32
    %216 = vector.broadcast %cst_85 : f32 to vector<1x8xf32>
    %217 = arith.mulf %216, %215 : vector<1x8xf32>
    %218 = math.tanh %217 : vector<1x8xf32>
    %cst_86 = arith.constant 5.000000e-01 : f32
    %219 = vector.broadcast %cst_86 : f32 to vector<1x8xf32>
    %220 = arith.mulf %219, %218 : vector<1x8xf32>
    %cst_87 = arith.constant 5.000000e-01 : f32
    %221 = vector.broadcast %cst_87 : f32 to vector<1x8xf32>
    %222 = arith.addf %220, %221 : vector<1x8xf32>
    %223 = vector.extract_strided_slice %214 {offsets = [0, 8], sizes = [1, 8], strides = [1, 1]} : vector<1x32xf32> to vector<1x8xf32>
    %cst_88 = arith.constant 5.000000e-01 : f32
    %224 = vector.broadcast %cst_88 : f32 to vector<1x8xf32>
    %225 = arith.mulf %224, %223 : vector<1x8xf32>
    %226 = math.tanh %225 : vector<1x8xf32>
    %cst_89 = arith.constant 5.000000e-01 : f32
    %227 = vector.broadcast %cst_89 : f32 to vector<1x8xf32>
    %228 = arith.mulf %227, %226 : vector<1x8xf32>
    %cst_90 = arith.constant 5.000000e-01 : f32
    %229 = vector.broadcast %cst_90 : f32 to vector<1x8xf32>
    %230 = arith.addf %228, %229 : vector<1x8xf32>
    %231 = vector.extract_strided_slice %214 {offsets = [0, 16], sizes = [1, 8], strides = [1, 1]} : vector<1x32xf32> to vector<1x8xf32>
    %232 = math.tanh %231 : vector<1x8xf32>
    %233 = vector.extract_strided_slice %214 {offsets = [0, 24], sizes = [1, 8], strides = [1, 1]} : vector<1x32xf32> to vector<1x8xf32>
    %cst_91 = arith.constant 5.000000e-01 : f32
    %234 = vector.broadcast %cst_91 : f32 to vector<1x8xf32>
    %235 = arith.mulf %234, %233 : vector<1x8xf32>
    %236 = math.tanh %235 : vector<1x8xf32>
    %cst_92 = arith.constant 5.000000e-01 : f32
    %237 = vector.broadcast %cst_92 : f32 to vector<1x8xf32>
    %238 = arith.mulf %237, %236 : vector<1x8xf32>
    %cst_93 = arith.constant 5.000000e-01 : f32
    %239 = vector.broadcast %cst_93 : f32 to vector<1x8xf32>
    %240 = arith.addf %238, %239 : vector<1x8xf32>
    %241 = arith.mulf %230, %166 : vector<1x8xf32>
    %242 = arith.mulf %222, %232 : vector<1x8xf32>
    %243 = arith.addf %241, %242 : vector<1x8xf32>
    %244 = math.tanh %243 : vector<1x8xf32>
    %245 = arith.mulf %240, %244 : vector<1x8xf32>
    %c3_i32 = arith.constant 3 : i32
    %246 = arith.index_cast %c3_i32 : i32 to index
    %c0_94 = arith.constant 0 : index
    %247 = vector.load %arg8[%246, %c0_94] : memref<8x128xf32, #tpu.memory_space<vmem>>, vector<1x128xf32>
    %cst_95 = arith.constant dense<0.000000e+00> : vector<1x128xf32>
    %248 = tpu.matmul %203, %7, %cst_95 {dimension_numbers = #tpu.dot_dimension_numbers<[1], [0], [0], [1], [0, 0, 1, 1], [], []>} : vector<1x32xf32>, vector<32x128xf32>, vector<1x128xf32> -> vector<1x128xf32>
    %249 = arith.addf %247, %248 : vector<1x128xf32>
    %250 = vector.extract_strided_slice %249 {offsets = [0, 0], sizes = [1, 32], strides = [1, 1]} : vector<1x128xf32> to vector<1x32xf32>
    %cst_96 = arith.constant 5.000000e-01 : f32
    %251 = vector.broadcast %cst_96 : f32 to vector<1x32xf32>
    %252 = arith.mulf %251, %250 : vector<1x32xf32>
    %253 = math.tanh %252 : vector<1x32xf32>
    %cst_97 = arith.constant 5.000000e-01 : f32
    %254 = vector.broadcast %cst_97 : f32 to vector<1x32xf32>
    %255 = arith.mulf %254, %253 : vector<1x32xf32>
    %cst_98 = arith.constant 5.000000e-01 : f32
    %256 = vector.broadcast %cst_98 : f32 to vector<1x32xf32>
    %257 = arith.addf %255, %256 : vector<1x32xf32>
    %258 = vector.extract_strided_slice %249 {offsets = [0, 32], sizes = [1, 32], strides = [1, 1]} : vector<1x128xf32> to vector<1x32xf32>
    %cst_99 = arith.constant 5.000000e-01 : f32
    %259 = vector.broadcast %cst_99 : f32 to vector<1x32xf32>
    %260 = arith.mulf %259, %258 : vector<1x32xf32>
    %261 = math.tanh %260 : vector<1x32xf32>
    %cst_100 = arith.constant 5.000000e-01 : f32
    %262 = vector.broadcast %cst_100 : f32 to vector<1x32xf32>
    %263 = arith.mulf %262, %261 : vector<1x32xf32>
    %cst_101 = arith.constant 5.000000e-01 : f32
    %264 = vector.broadcast %cst_101 : f32 to vector<1x32xf32>
    %265 = arith.addf %263, %264 : vector<1x32xf32>
    %266 = vector.extract_strided_slice %249 {offsets = [0, 64], sizes = [1, 32], strides = [1, 1]} : vector<1x128xf32> to vector<1x32xf32>
    %267 = math.tanh %266 : vector<1x32xf32>
    %268 = vector.extract_strided_slice %249 {offsets = [0, 96], sizes = [1, 32], strides = [1, 1]} : vector<1x128xf32> to vector<1x32xf32>
    %cst_102 = arith.constant 5.000000e-01 : f32
    %269 = vector.broadcast %cst_102 : f32 to vector<1x32xf32>
    %270 = arith.mulf %269, %268 : vector<1x32xf32>
    %271 = math.tanh %270 : vector<1x32xf32>
    %cst_103 = arith.constant 5.000000e-01 : f32
    %272 = vector.broadcast %cst_103 : f32 to vector<1x32xf32>
    %273 = arith.mulf %272, %271 : vector<1x32xf32>
    %cst_104 = arith.constant 5.000000e-01 : f32
    %274 = vector.broadcast %cst_104 : f32 to vector<1x32xf32>
    %275 = arith.addf %273, %274 : vector<1x32xf32>
    %276 = arith.mulf %265, %201 : vector<1x32xf32>
    %277 = arith.mulf %257, %267 : vector<1x32xf32>
    %278 = arith.addf %276, %277 : vector<1x32xf32>
    %279 = math.tanh %278 : vector<1x32xf32>
    %280 = arith.mulf %275, %279 : vector<1x32xf32>
    %cst_105 = arith.constant 5.000000e-01 : f32
    %281 = vector.broadcast %cst_105 : f32 to vector<1x32xf32>
    %282 = arith.mulf %281, %280 : vector<1x32xf32>
    %283 = math.tanh %282 : vector<1x32xf32>
    %cst_106 = arith.constant 5.000000e-01 : f32
    %284 = vector.broadcast %cst_106 : f32 to vector<1x32xf32>
    %285 = arith.mulf %284, %283 : vector<1x32xf32>
    %cst_107 = arith.constant 5.000000e-01 : f32
    %286 = vector.broadcast %cst_107 : f32 to vector<1x32xf32>
    %287 = arith.addf %285, %286 : vector<1x32xf32>
    %cst_108 = arith.constant dense<0.000000e+00> : vector<1x32xf32>
    %288 = tpu.matmul %287, %9, %cst_108 {dimension_numbers = #tpu.dot_dimension_numbers<[1], [0], [0], [1], [0, 0, 1, 1], [], []>} : vector<1x32xf32>, vector<32x32xf32>, vector<1x32xf32> -> vector<1x32xf32>
    %289 = arith.addf %288, %10 : vector<1x32xf32>
    %cst_109 = arith.constant dense<0.000000e+00> : vector<1x32xf32>
    %290 = tpu.matmul %245, %8, %cst_109 {dimension_numbers = #tpu.dot_dimension_numbers<[1], [0], [0], [1], [0, 0, 1, 1], [], []>} : vector<1x8xf32>, vector<8x32xf32>, vector<1x32xf32> -> vector<1x32xf32>
    %291 = arith.addf %289, %290 : vector<1x32xf32>
    %292 = vector.extract_strided_slice %291 {offsets = [0, 0], sizes = [1, 8], strides = [1, 1]} : vector<1x32xf32> to vector<1x8xf32>
    %cst_110 = arith.constant 5.000000e-01 : f32
    %293 = vector.broadcast %cst_110 : f32 to vector<1x8xf32>
    %294 = arith.mulf %293, %292 : vector<1x8xf32>
    %295 = math.tanh %294 : vector<1x8xf32>
    %cst_111 = arith.constant 5.000000e-01 : f32
    %296 = vector.broadcast %cst_111 : f32 to vector<1x8xf32>
    %297 = arith.mulf %296, %295 : vector<1x8xf32>
    %cst_112 = arith.constant 5.000000e-01 : f32
    %298 = vector.broadcast %cst_112 : f32 to vector<1x8xf32>
    %299 = arith.addf %297, %298 : vector<1x8xf32>
    %300 = vector.extract_strided_slice %291 {offsets = [0, 8], sizes = [1, 8], strides = [1, 1]} : vector<1x32xf32> to vector<1x8xf32>
    %cst_113 = arith.constant 5.000000e-01 : f32
    %301 = vector.broadcast %cst_113 : f32 to vector<1x8xf32>
    %302 = arith.mulf %301, %300 : vector<1x8xf32>
    %303 = math.tanh %302 : vector<1x8xf32>
    %cst_114 = arith.constant 5.000000e-01 : f32
    %304 = vector.broadcast %cst_114 : f32 to vector<1x8xf32>
    %305 = arith.mulf %304, %303 : vector<1x8xf32>
    %cst_115 = arith.constant 5.000000e-01 : f32
    %306 = vector.broadcast %cst_115 : f32 to vector<1x8xf32>
    %307 = arith.addf %305, %306 : vector<1x8xf32>
    %308 = vector.extract_strided_slice %291 {offsets = [0, 16], sizes = [1, 8], strides = [1, 1]} : vector<1x32xf32> to vector<1x8xf32>
    %309 = math.tanh %308 : vector<1x8xf32>
    %310 = vector.extract_strided_slice %291 {offsets = [0, 24], sizes = [1, 8], strides = [1, 1]} : vector<1x32xf32> to vector<1x8xf32>
    %cst_116 = arith.constant 5.000000e-01 : f32
    %311 = vector.broadcast %cst_116 : f32 to vector<1x8xf32>
    %312 = arith.mulf %311, %310 : vector<1x8xf32>
    %313 = math.tanh %312 : vector<1x8xf32>
    %cst_117 = arith.constant 5.000000e-01 : f32
    %314 = vector.broadcast %cst_117 : f32 to vector<1x8xf32>
    %315 = arith.mulf %314, %313 : vector<1x8xf32>
    %cst_118 = arith.constant 5.000000e-01 : f32
    %316 = vector.broadcast %cst_118 : f32 to vector<1x8xf32>
    %317 = arith.addf %315, %316 : vector<1x8xf32>
    %318 = arith.mulf %307, %243 : vector<1x8xf32>
    %319 = arith.mulf %299, %309 : vector<1x8xf32>
    %320 = arith.addf %318, %319 : vector<1x8xf32>
    %321 = math.tanh %320 : vector<1x8xf32>
    %322 = arith.mulf %317, %321 : vector<1x8xf32>
    %c4_i32 = arith.constant 4 : i32
    %323 = arith.index_cast %c4_i32 : i32 to index
    %c0_119 = arith.constant 0 : index
    %324 = vector.load %arg8[%323, %c0_119] : memref<8x128xf32, #tpu.memory_space<vmem>>, vector<1x128xf32>
    %cst_120 = arith.constant dense<0.000000e+00> : vector<1x128xf32>
    %325 = tpu.matmul %280, %7, %cst_120 {dimension_numbers = #tpu.dot_dimension_numbers<[1], [0], [0], [1], [0, 0, 1, 1], [], []>} : vector<1x32xf32>, vector<32x128xf32>, vector<1x128xf32> -> vector<1x128xf32>
    %326 = arith.addf %324, %325 : vector<1x128xf32>
    %327 = vector.extract_strided_slice %326 {offsets = [0, 0], sizes = [1, 32], strides = [1, 1]} : vector<1x128xf32> to vector<1x32xf32>
    %cst_121 = arith.constant 5.000000e-01 : f32
    %328 = vector.broadcast %cst_121 : f32 to vector<1x32xf32>
    %329 = arith.mulf %328, %327 : vector<1x32xf32>
    %330 = math.tanh %329 : vector<1x32xf32>
    %cst_122 = arith.constant 5.000000e-01 : f32
    %331 = vector.broadcast %cst_122 : f32 to vector<1x32xf32>
    %332 = arith.mulf %331, %330 : vector<1x32xf32>
    %cst_123 = arith.constant 5.000000e-01 : f32
    %333 = vector.broadcast %cst_123 : f32 to vector<1x32xf32>
    %334 = arith.addf %332, %333 : vector<1x32xf32>
    %335 = vector.extract_strided_slice %326 {offsets = [0, 32], sizes = [1, 32], strides = [1, 1]} : vector<1x128xf32> to vector<1x32xf32>
    %cst_124 = arith.constant 5.000000e-01 : f32
    %336 = vector.broadcast %cst_124 : f32 to vector<1x32xf32>
    %337 = arith.mulf %336, %335 : vector<1x32xf32>
    %338 = math.tanh %337 : vector<1x32xf32>
    %cst_125 = arith.constant 5.000000e-01 : f32
    %339 = vector.broadcast %cst_125 : f32 to vector<1x32xf32>
    %340 = arith.mulf %339, %338 : vector<1x32xf32>
    %cst_126 = arith.constant 5.000000e-01 : f32
    %341 = vector.broadcast %cst_126 : f32 to vector<1x32xf32>
    %342 = arith.addf %340, %341 : vector<1x32xf32>
    %343 = vector.extract_strided_slice %326 {offsets = [0, 64], sizes = [1, 32], strides = [1, 1]} : vector<1x128xf32> to vector<1x32xf32>
    %344 = math.tanh %343 : vector<1x32xf32>
    %345 = vector.extract_strided_slice %326 {offsets = [0, 96], sizes = [1, 32], strides = [1, 1]} : vector<1x128xf32> to vector<1x32xf32>
    %cst_127 = arith.constant 5.000000e-01 : f32
    %346 = vector.broadcast %cst_127 : f32 to vector<1x32xf32>
    %347 = arith.mulf %346, %345 : vector<1x32xf32>
    %348 = math.tanh %347 : vector<1x32xf32>
    %cst_128 = arith.constant 5.000000e-01 : f32
    %349 = vector.broadcast %cst_128 : f32 to vector<1x32xf32>
    %350 = arith.mulf %349, %348 : vector<1x32xf32>
    %cst_129 = arith.constant 5.000000e-01 : f32
    %351 = vector.broadcast %cst_129 : f32 to vector<1x32xf32>
    %352 = arith.addf %350, %351 : vector<1x32xf32>
    %353 = arith.mulf %342, %278 : vector<1x32xf32>
    %354 = arith.mulf %334, %344 : vector<1x32xf32>
    %355 = arith.addf %353, %354 : vector<1x32xf32>
    %356 = math.tanh %355 : vector<1x32xf32>
    %357 = arith.mulf %352, %356 : vector<1x32xf32>
    %cst_130 = arith.constant 5.000000e-01 : f32
    %358 = vector.broadcast %cst_130 : f32 to vector<1x32xf32>
    %359 = arith.mulf %358, %357 : vector<1x32xf32>
    %360 = math.tanh %359 : vector<1x32xf32>
    %cst_131 = arith.constant 5.000000e-01 : f32
    %361 = vector.broadcast %cst_131 : f32 to vector<1x32xf32>
    %362 = arith.mulf %361, %360 : vector<1x32xf32>
    %cst_132 = arith.constant 5.000000e-01 : f32
    %363 = vector.broadcast %cst_132 : f32 to vector<1x32xf32>
    %364 = arith.addf %362, %363 : vector<1x32xf32>
    %cst_133 = arith.constant dense<0.000000e+00> : vector<1x32xf32>
    %365 = tpu.matmul %364, %9, %cst_133 {dimension_numbers = #tpu.dot_dimension_numbers<[1], [0], [0], [1], [0, 0, 1, 1], [], []>} : vector<1x32xf32>, vector<32x32xf32>, vector<1x32xf32> -> vector<1x32xf32>
    %366 = arith.addf %365, %10 : vector<1x32xf32>
    %cst_134 = arith.constant dense<0.000000e+00> : vector<1x32xf32>
    %367 = tpu.matmul %322, %8, %cst_134 {dimension_numbers = #tpu.dot_dimension_numbers<[1], [0], [0], [1], [0, 0, 1, 1], [], []>} : vector<1x8xf32>, vector<8x32xf32>, vector<1x32xf32> -> vector<1x32xf32>
    %368 = arith.addf %366, %367 : vector<1x32xf32>
    %369 = vector.extract_strided_slice %368 {offsets = [0, 0], sizes = [1, 8], strides = [1, 1]} : vector<1x32xf32> to vector<1x8xf32>
    %cst_135 = arith.constant 5.000000e-01 : f32
    %370 = vector.broadcast %cst_135 : f32 to vector<1x8xf32>
    %371 = arith.mulf %370, %369 : vector<1x8xf32>
    %372 = math.tanh %371 : vector<1x8xf32>
    %cst_136 = arith.constant 5.000000e-01 : f32
    %373 = vector.broadcast %cst_136 : f32 to vector<1x8xf32>
    %374 = arith.mulf %373, %372 : vector<1x8xf32>
    %cst_137 = arith.constant 5.000000e-01 : f32
    %375 = vector.broadcast %cst_137 : f32 to vector<1x8xf32>
    %376 = arith.addf %374, %375 : vector<1x8xf32>
    %377 = vector.extract_strided_slice %368 {offsets = [0, 8], sizes = [1, 8], strides = [1, 1]} : vector<1x32xf32> to vector<1x8xf32>
    %cst_138 = arith.constant 5.000000e-01 : f32
    %378 = vector.broadcast %cst_138 : f32 to vector<1x8xf32>
    %379 = arith.mulf %378, %377 : vector<1x8xf32>
    %380 = math.tanh %379 : vector<1x8xf32>
    %cst_139 = arith.constant 5.000000e-01 : f32
    %381 = vector.broadcast %cst_139 : f32 to vector<1x8xf32>
    %382 = arith.mulf %381, %380 : vector<1x8xf32>
    %cst_140 = arith.constant 5.000000e-01 : f32
    %383 = vector.broadcast %cst_140 : f32 to vector<1x8xf32>
    %384 = arith.addf %382, %383 : vector<1x8xf32>
    %385 = vector.extract_strided_slice %368 {offsets = [0, 16], sizes = [1, 8], strides = [1, 1]} : vector<1x32xf32> to vector<1x8xf32>
    %386 = math.tanh %385 : vector<1x8xf32>
    %387 = vector.extract_strided_slice %368 {offsets = [0, 24], sizes = [1, 8], strides = [1, 1]} : vector<1x32xf32> to vector<1x8xf32>
    %cst_141 = arith.constant 5.000000e-01 : f32
    %388 = vector.broadcast %cst_141 : f32 to vector<1x8xf32>
    %389 = arith.mulf %388, %387 : vector<1x8xf32>
    %390 = math.tanh %389 : vector<1x8xf32>
    %cst_142 = arith.constant 5.000000e-01 : f32
    %391 = vector.broadcast %cst_142 : f32 to vector<1x8xf32>
    %392 = arith.mulf %391, %390 : vector<1x8xf32>
    %cst_143 = arith.constant 5.000000e-01 : f32
    %393 = vector.broadcast %cst_143 : f32 to vector<1x8xf32>
    %394 = arith.addf %392, %393 : vector<1x8xf32>
    %395 = arith.mulf %384, %320 : vector<1x8xf32>
    %396 = arith.mulf %376, %386 : vector<1x8xf32>
    %397 = arith.addf %395, %396 : vector<1x8xf32>
    %398 = math.tanh %397 : vector<1x8xf32>
    %399 = arith.mulf %394, %398 : vector<1x8xf32>
    %c5_i32 = arith.constant 5 : i32
    %400 = arith.index_cast %c5_i32 : i32 to index
    %c0_144 = arith.constant 0 : index
    %401 = vector.load %arg8[%400, %c0_144] : memref<8x128xf32, #tpu.memory_space<vmem>>, vector<1x128xf32>
    %cst_145 = arith.constant dense<0.000000e+00> : vector<1x128xf32>
    %402 = tpu.matmul %357, %7, %cst_145 {dimension_numbers = #tpu.dot_dimension_numbers<[1], [0], [0], [1], [0, 0, 1, 1], [], []>} : vector<1x32xf32>, vector<32x128xf32>, vector<1x128xf32> -> vector<1x128xf32>
    %403 = arith.addf %401, %402 : vector<1x128xf32>
    %404 = vector.extract_strided_slice %403 {offsets = [0, 0], sizes = [1, 32], strides = [1, 1]} : vector<1x128xf32> to vector<1x32xf32>
    %cst_146 = arith.constant 5.000000e-01 : f32
    %405 = vector.broadcast %cst_146 : f32 to vector<1x32xf32>
    %406 = arith.mulf %405, %404 : vector<1x32xf32>
    %407 = math.tanh %406 : vector<1x32xf32>
    %cst_147 = arith.constant 5.000000e-01 : f32
    %408 = vector.broadcast %cst_147 : f32 to vector<1x32xf32>
    %409 = arith.mulf %408, %407 : vector<1x32xf32>
    %cst_148 = arith.constant 5.000000e-01 : f32
    %410 = vector.broadcast %cst_148 : f32 to vector<1x32xf32>
    %411 = arith.addf %409, %410 : vector<1x32xf32>
    %412 = vector.extract_strided_slice %403 {offsets = [0, 32], sizes = [1, 32], strides = [1, 1]} : vector<1x128xf32> to vector<1x32xf32>
    %cst_149 = arith.constant 5.000000e-01 : f32
    %413 = vector.broadcast %cst_149 : f32 to vector<1x32xf32>
    %414 = arith.mulf %413, %412 : vector<1x32xf32>
    %415 = math.tanh %414 : vector<1x32xf32>
    %cst_150 = arith.constant 5.000000e-01 : f32
    %416 = vector.broadcast %cst_150 : f32 to vector<1x32xf32>
    %417 = arith.mulf %416, %415 : vector<1x32xf32>
    %cst_151 = arith.constant 5.000000e-01 : f32
    %418 = vector.broadcast %cst_151 : f32 to vector<1x32xf32>
    %419 = arith.addf %417, %418 : vector<1x32xf32>
    %420 = vector.extract_strided_slice %403 {offsets = [0, 64], sizes = [1, 32], strides = [1, 1]} : vector<1x128xf32> to vector<1x32xf32>
    %421 = math.tanh %420 : vector<1x32xf32>
    %422 = vector.extract_strided_slice %403 {offsets = [0, 96], sizes = [1, 32], strides = [1, 1]} : vector<1x128xf32> to vector<1x32xf32>
    %cst_152 = arith.constant 5.000000e-01 : f32
    %423 = vector.broadcast %cst_152 : f32 to vector<1x32xf32>
    %424 = arith.mulf %423, %422 : vector<1x32xf32>
    %425 = math.tanh %424 : vector<1x32xf32>
    %cst_153 = arith.constant 5.000000e-01 : f32
    %426 = vector.broadcast %cst_153 : f32 to vector<1x32xf32>
    %427 = arith.mulf %426, %425 : vector<1x32xf32>
    %cst_154 = arith.constant 5.000000e-01 : f32
    %428 = vector.broadcast %cst_154 : f32 to vector<1x32xf32>
    %429 = arith.addf %427, %428 : vector<1x32xf32>
    %430 = arith.mulf %419, %355 : vector<1x32xf32>
    %431 = arith.mulf %411, %421 : vector<1x32xf32>
    %432 = arith.addf %430, %431 : vector<1x32xf32>
    %433 = math.tanh %432 : vector<1x32xf32>
    %434 = arith.mulf %429, %433 : vector<1x32xf32>
    %cst_155 = arith.constant 5.000000e-01 : f32
    %435 = vector.broadcast %cst_155 : f32 to vector<1x32xf32>
    %436 = arith.mulf %435, %434 : vector<1x32xf32>
    %437 = math.tanh %436 : vector<1x32xf32>
    %cst_156 = arith.constant 5.000000e-01 : f32
    %438 = vector.broadcast %cst_156 : f32 to vector<1x32xf32>
    %439 = arith.mulf %438, %437 : vector<1x32xf32>
    %cst_157 = arith.constant 5.000000e-01 : f32
    %440 = vector.broadcast %cst_157 : f32 to vector<1x32xf32>
    %441 = arith.addf %439, %440 : vector<1x32xf32>
    %cst_158 = arith.constant dense<0.000000e+00> : vector<1x32xf32>
    %442 = tpu.matmul %441, %9, %cst_158 {dimension_numbers = #tpu.dot_dimension_numbers<[1], [0], [0], [1], [0, 0, 1, 1], [], []>} : vector<1x32xf32>, vector<32x32xf32>, vector<1x32xf32> -> vector<1x32xf32>
    %443 = arith.addf %442, %10 : vector<1x32xf32>
    %cst_159 = arith.constant dense<0.000000e+00> : vector<1x32xf32>
    %444 = tpu.matmul %399, %8, %cst_159 {dimension_numbers = #tpu.dot_dimension_numbers<[1], [0], [0], [1], [0, 0, 1, 1], [], []>} : vector<1x8xf32>, vector<8x32xf32>, vector<1x32xf32> -> vector<1x32xf32>
    %445 = arith.addf %443, %444 : vector<1x32xf32>
    %446 = vector.extract_strided_slice %445 {offsets = [0, 0], sizes = [1, 8], strides = [1, 1]} : vector<1x32xf32> to vector<1x8xf32>
    %cst_160 = arith.constant 5.000000e-01 : f32
    %447 = vector.broadcast %cst_160 : f32 to vector<1x8xf32>
    %448 = arith.mulf %447, %446 : vector<1x8xf32>
    %449 = math.tanh %448 : vector<1x8xf32>
    %cst_161 = arith.constant 5.000000e-01 : f32
    %450 = vector.broadcast %cst_161 : f32 to vector<1x8xf32>
    %451 = arith.mulf %450, %449 : vector<1x8xf32>
    %cst_162 = arith.constant 5.000000e-01 : f32
    %452 = vector.broadcast %cst_162 : f32 to vector<1x8xf32>
    %453 = arith.addf %451, %452 : vector<1x8xf32>
    %454 = vector.extract_strided_slice %445 {offsets = [0, 8], sizes = [1, 8], strides = [1, 1]} : vector<1x32xf32> to vector<1x8xf32>
    %cst_163 = arith.constant 5.000000e-01 : f32
    %455 = vector.broadcast %cst_163 : f32 to vector<1x8xf32>
    %456 = arith.mulf %455, %454 : vector<1x8xf32>
    %457 = math.tanh %456 : vector<1x8xf32>
    %cst_164 = arith.constant 5.000000e-01 : f32
    %458 = vector.broadcast %cst_164 : f32 to vector<1x8xf32>
    %459 = arith.mulf %458, %457 : vector<1x8xf32>
    %cst_165 = arith.constant 5.000000e-01 : f32
    %460 = vector.broadcast %cst_165 : f32 to vector<1x8xf32>
    %461 = arith.addf %459, %460 : vector<1x8xf32>
    %462 = vector.extract_strided_slice %445 {offsets = [0, 16], sizes = [1, 8], strides = [1, 1]} : vector<1x32xf32> to vector<1x8xf32>
    %463 = math.tanh %462 : vector<1x8xf32>
    %464 = vector.extract_strided_slice %445 {offsets = [0, 24], sizes = [1, 8], strides = [1, 1]} : vector<1x32xf32> to vector<1x8xf32>
    %cst_166 = arith.constant 5.000000e-01 : f32
    %465 = vector.broadcast %cst_166 : f32 to vector<1x8xf32>
    %466 = arith.mulf %465, %464 : vector<1x8xf32>
    %467 = math.tanh %466 : vector<1x8xf32>
    %cst_167 = arith.constant 5.000000e-01 : f32
    %468 = vector.broadcast %cst_167 : f32 to vector<1x8xf32>
    %469 = arith.mulf %468, %467 : vector<1x8xf32>
    %cst_168 = arith.constant 5.000000e-01 : f32
    %470 = vector.broadcast %cst_168 : f32 to vector<1x8xf32>
    %471 = arith.addf %469, %470 : vector<1x8xf32>
    %472 = arith.mulf %461, %397 : vector<1x8xf32>
    %473 = arith.mulf %453, %463 : vector<1x8xf32>
    %474 = arith.addf %472, %473 : vector<1x8xf32>
    %475 = math.tanh %474 : vector<1x8xf32>
    %476 = arith.mulf %471, %475 : vector<1x8xf32>
    %c6_i32 = arith.constant 6 : i32
    %477 = arith.index_cast %c6_i32 : i32 to index
    %c0_169 = arith.constant 0 : index
    %478 = vector.load %arg8[%477, %c0_169] : memref<8x128xf32, #tpu.memory_space<vmem>>, vector<1x128xf32>
    %cst_170 = arith.constant dense<0.000000e+00> : vector<1x128xf32>
    %479 = tpu.matmul %434, %7, %cst_170 {dimension_numbers = #tpu.dot_dimension_numbers<[1], [0], [0], [1], [0, 0, 1, 1], [], []>} : vector<1x32xf32>, vector<32x128xf32>, vector<1x128xf32> -> vector<1x128xf32>
    %480 = arith.addf %478, %479 : vector<1x128xf32>
    %481 = vector.extract_strided_slice %480 {offsets = [0, 0], sizes = [1, 32], strides = [1, 1]} : vector<1x128xf32> to vector<1x32xf32>
    %cst_171 = arith.constant 5.000000e-01 : f32
    %482 = vector.broadcast %cst_171 : f32 to vector<1x32xf32>
    %483 = arith.mulf %482, %481 : vector<1x32xf32>
    %484 = math.tanh %483 : vector<1x32xf32>
    %cst_172 = arith.constant 5.000000e-01 : f32
    %485 = vector.broadcast %cst_172 : f32 to vector<1x32xf32>
    %486 = arith.mulf %485, %484 : vector<1x32xf32>
    %cst_173 = arith.constant 5.000000e-01 : f32
    %487 = vector.broadcast %cst_173 : f32 to vector<1x32xf32>
    %488 = arith.addf %486, %487 : vector<1x32xf32>
    %489 = vector.extract_strided_slice %480 {offsets = [0, 32], sizes = [1, 32], strides = [1, 1]} : vector<1x128xf32> to vector<1x32xf32>
    %cst_174 = arith.constant 5.000000e-01 : f32
    %490 = vector.broadcast %cst_174 : f32 to vector<1x32xf32>
    %491 = arith.mulf %490, %489 : vector<1x32xf32>
    %492 = math.tanh %491 : vector<1x32xf32>
    %cst_175 = arith.constant 5.000000e-01 : f32
    %493 = vector.broadcast %cst_175 : f32 to vector<1x32xf32>
    %494 = arith.mulf %493, %492 : vector<1x32xf32>
    %cst_176 = arith.constant 5.000000e-01 : f32
    %495 = vector.broadcast %cst_176 : f32 to vector<1x32xf32>
    %496 = arith.addf %494, %495 : vector<1x32xf32>
    %497 = vector.extract_strided_slice %480 {offsets = [0, 64], sizes = [1, 32], strides = [1, 1]} : vector<1x128xf32> to vector<1x32xf32>
    %498 = math.tanh %497 : vector<1x32xf32>
    %499 = vector.extract_strided_slice %480 {offsets = [0, 96], sizes = [1, 32], strides = [1, 1]} : vector<1x128xf32> to vector<1x32xf32>
    %cst_177 = arith.constant 5.000000e-01 : f32
    %500 = vector.broadcast %cst_177 : f32 to vector<1x32xf32>
    %501 = arith.mulf %500, %499 : vector<1x32xf32>
    %502 = math.tanh %501 : vector<1x32xf32>
    %cst_178 = arith.constant 5.000000e-01 : f32
    %503 = vector.broadcast %cst_178 : f32 to vector<1x32xf32>
    %504 = arith.mulf %503, %502 : vector<1x32xf32>
    %cst_179 = arith.constant 5.000000e-01 : f32
    %505 = vector.broadcast %cst_179 : f32 to vector<1x32xf32>
    %506 = arith.addf %504, %505 : vector<1x32xf32>
    %507 = arith.mulf %496, %432 : vector<1x32xf32>
    %508 = arith.mulf %488, %498 : vector<1x32xf32>
    %509 = arith.addf %507, %508 : vector<1x32xf32>
    %510 = math.tanh %509 : vector<1x32xf32>
    %511 = arith.mulf %506, %510 : vector<1x32xf32>
    %cst_180 = arith.constant 5.000000e-01 : f32
    %512 = vector.broadcast %cst_180 : f32 to vector<1x32xf32>
    %513 = arith.mulf %512, %511 : vector<1x32xf32>
    %514 = math.tanh %513 : vector<1x32xf32>
    %cst_181 = arith.constant 5.000000e-01 : f32
    %515 = vector.broadcast %cst_181 : f32 to vector<1x32xf32>
    %516 = arith.mulf %515, %514 : vector<1x32xf32>
    %cst_182 = arith.constant 5.000000e-01 : f32
    %517 = vector.broadcast %cst_182 : f32 to vector<1x32xf32>
    %518 = arith.addf %516, %517 : vector<1x32xf32>
    %cst_183 = arith.constant dense<0.000000e+00> : vector<1x32xf32>
    %519 = tpu.matmul %518, %9, %cst_183 {dimension_numbers = #tpu.dot_dimension_numbers<[1], [0], [0], [1], [0, 0, 1, 1], [], []>} : vector<1x32xf32>, vector<32x32xf32>, vector<1x32xf32> -> vector<1x32xf32>
    %520 = arith.addf %519, %10 : vector<1x32xf32>
    %cst_184 = arith.constant dense<0.000000e+00> : vector<1x32xf32>
    %521 = tpu.matmul %476, %8, %cst_184 {dimension_numbers = #tpu.dot_dimension_numbers<[1], [0], [0], [1], [0, 0, 1, 1], [], []>} : vector<1x8xf32>, vector<8x32xf32>, vector<1x32xf32> -> vector<1x32xf32>
    %522 = arith.addf %520, %521 : vector<1x32xf32>
    %523 = vector.extract_strided_slice %522 {offsets = [0, 0], sizes = [1, 8], strides = [1, 1]} : vector<1x32xf32> to vector<1x8xf32>
    %cst_185 = arith.constant 5.000000e-01 : f32
    %524 = vector.broadcast %cst_185 : f32 to vector<1x8xf32>
    %525 = arith.mulf %524, %523 : vector<1x8xf32>
    %526 = math.tanh %525 : vector<1x8xf32>
    %cst_186 = arith.constant 5.000000e-01 : f32
    %527 = vector.broadcast %cst_186 : f32 to vector<1x8xf32>
    %528 = arith.mulf %527, %526 : vector<1x8xf32>
    %cst_187 = arith.constant 5.000000e-01 : f32
    %529 = vector.broadcast %cst_187 : f32 to vector<1x8xf32>
    %530 = arith.addf %528, %529 : vector<1x8xf32>
    %531 = vector.extract_strided_slice %522 {offsets = [0, 8], sizes = [1, 8], strides = [1, 1]} : vector<1x32xf32> to vector<1x8xf32>
    %cst_188 = arith.constant 5.000000e-01 : f32
    %532 = vector.broadcast %cst_188 : f32 to vector<1x8xf32>
    %533 = arith.mulf %532, %531 : vector<1x8xf32>
    %534 = math.tanh %533 : vector<1x8xf32>
    %cst_189 = arith.constant 5.000000e-01 : f32
    %535 = vector.broadcast %cst_189 : f32 to vector<1x8xf32>
    %536 = arith.mulf %535, %534 : vector<1x8xf32>
    %cst_190 = arith.constant 5.000000e-01 : f32
    %537 = vector.broadcast %cst_190 : f32 to vector<1x8xf32>
    %538 = arith.addf %536, %537 : vector<1x8xf32>
    %539 = vector.extract_strided_slice %522 {offsets = [0, 16], sizes = [1, 8], strides = [1, 1]} : vector<1x32xf32> to vector<1x8xf32>
    %540 = math.tanh %539 : vector<1x8xf32>
    %541 = vector.extract_strided_slice %522 {offsets = [0, 24], sizes = [1, 8], strides = [1, 1]} : vector<1x32xf32> to vector<1x8xf32>
    %cst_191 = arith.constant 5.000000e-01 : f32
    %542 = vector.broadcast %cst_191 : f32 to vector<1x8xf32>
    %543 = arith.mulf %542, %541 : vector<1x8xf32>
    %544 = math.tanh %543 : vector<1x8xf32>
    %cst_192 = arith.constant 5.000000e-01 : f32
    %545 = vector.broadcast %cst_192 : f32 to vector<1x8xf32>
    %546 = arith.mulf %545, %544 : vector<1x8xf32>
    %cst_193 = arith.constant 5.000000e-01 : f32
    %547 = vector.broadcast %cst_193 : f32 to vector<1x8xf32>
    %548 = arith.addf %546, %547 : vector<1x8xf32>
    %549 = arith.mulf %538, %474 : vector<1x8xf32>
    %550 = arith.mulf %530, %540 : vector<1x8xf32>
    %551 = arith.addf %549, %550 : vector<1x8xf32>
    %552 = math.tanh %551 : vector<1x8xf32>
    %553 = arith.mulf %548, %552 : vector<1x8xf32>
    %c7_i32 = arith.constant 7 : i32
    %554 = arith.index_cast %c7_i32 : i32 to index
    %c0_194 = arith.constant 0 : index
    %555 = vector.load %arg8[%554, %c0_194] : memref<8x128xf32, #tpu.memory_space<vmem>>, vector<1x128xf32>
    %cst_195 = arith.constant dense<0.000000e+00> : vector<1x128xf32>
    %556 = tpu.matmul %511, %7, %cst_195 {dimension_numbers = #tpu.dot_dimension_numbers<[1], [0], [0], [1], [0, 0, 1, 1], [], []>} : vector<1x32xf32>, vector<32x128xf32>, vector<1x128xf32> -> vector<1x128xf32>
    %557 = arith.addf %555, %556 : vector<1x128xf32>
    %558 = vector.extract_strided_slice %557 {offsets = [0, 0], sizes = [1, 32], strides = [1, 1]} : vector<1x128xf32> to vector<1x32xf32>
    %cst_196 = arith.constant 5.000000e-01 : f32
    %559 = vector.broadcast %cst_196 : f32 to vector<1x32xf32>
    %560 = arith.mulf %559, %558 : vector<1x32xf32>
    %561 = math.tanh %560 : vector<1x32xf32>
    %cst_197 = arith.constant 5.000000e-01 : f32
    %562 = vector.broadcast %cst_197 : f32 to vector<1x32xf32>
    %563 = arith.mulf %562, %561 : vector<1x32xf32>
    %cst_198 = arith.constant 5.000000e-01 : f32
    %564 = vector.broadcast %cst_198 : f32 to vector<1x32xf32>
    %565 = arith.addf %563, %564 : vector<1x32xf32>
    %566 = vector.extract_strided_slice %557 {offsets = [0, 32], sizes = [1, 32], strides = [1, 1]} : vector<1x128xf32> to vector<1x32xf32>
    %cst_199 = arith.constant 5.000000e-01 : f32
    %567 = vector.broadcast %cst_199 : f32 to vector<1x32xf32>
    %568 = arith.mulf %567, %566 : vector<1x32xf32>
    %569 = math.tanh %568 : vector<1x32xf32>
    %cst_200 = arith.constant 5.000000e-01 : f32
    %570 = vector.broadcast %cst_200 : f32 to vector<1x32xf32>
    %571 = arith.mulf %570, %569 : vector<1x32xf32>
    %cst_201 = arith.constant 5.000000e-01 : f32
    %572 = vector.broadcast %cst_201 : f32 to vector<1x32xf32>
    %573 = arith.addf %571, %572 : vector<1x32xf32>
    %574 = vector.extract_strided_slice %557 {offsets = [0, 64], sizes = [1, 32], strides = [1, 1]} : vector<1x128xf32> to vector<1x32xf32>
    %575 = math.tanh %574 : vector<1x32xf32>
    %576 = vector.extract_strided_slice %557 {offsets = [0, 96], sizes = [1, 32], strides = [1, 1]} : vector<1x128xf32> to vector<1x32xf32>
    %cst_202 = arith.constant 5.000000e-01 : f32
    %577 = vector.broadcast %cst_202 : f32 to vector<1x32xf32>
    %578 = arith.mulf %577, %576 : vector<1x32xf32>
    %579 = math.tanh %578 : vector<1x32xf32>
    %cst_203 = arith.constant 5.000000e-01 : f32
    %580 = vector.broadcast %cst_203 : f32 to vector<1x32xf32>
    %581 = arith.mulf %580, %579 : vector<1x32xf32>
    %cst_204 = arith.constant 5.000000e-01 : f32
    %582 = vector.broadcast %cst_204 : f32 to vector<1x32xf32>
    %583 = arith.addf %581, %582 : vector<1x32xf32>
    %584 = arith.mulf %573, %509 : vector<1x32xf32>
    %585 = arith.mulf %565, %575 : vector<1x32xf32>
    %586 = arith.addf %584, %585 : vector<1x32xf32>
    %587 = math.tanh %586 : vector<1x32xf32>
    %588 = arith.mulf %583, %587 : vector<1x32xf32>
    %cst_205 = arith.constant 5.000000e-01 : f32
    %589 = vector.broadcast %cst_205 : f32 to vector<1x32xf32>
    %590 = arith.mulf %589, %588 : vector<1x32xf32>
    %591 = math.tanh %590 : vector<1x32xf32>
    %cst_206 = arith.constant 5.000000e-01 : f32
    %592 = vector.broadcast %cst_206 : f32 to vector<1x32xf32>
    %593 = arith.mulf %592, %591 : vector<1x32xf32>
    %cst_207 = arith.constant 5.000000e-01 : f32
    %594 = vector.broadcast %cst_207 : f32 to vector<1x32xf32>
    %595 = arith.addf %593, %594 : vector<1x32xf32>
    %cst_208 = arith.constant dense<0.000000e+00> : vector<1x32xf32>
    %596 = tpu.matmul %595, %9, %cst_208 {dimension_numbers = #tpu.dot_dimension_numbers<[1], [0], [0], [1], [0, 0, 1, 1], [], []>} : vector<1x32xf32>, vector<32x32xf32>, vector<1x32xf32> -> vector<1x32xf32>
    %597 = arith.addf %596, %10 : vector<1x32xf32>
    %cst_209 = arith.constant dense<0.000000e+00> : vector<1x32xf32>
    %598 = tpu.matmul %553, %8, %cst_209 {dimension_numbers = #tpu.dot_dimension_numbers<[1], [0], [0], [1], [0, 0, 1, 1], [], []>} : vector<1x8xf32>, vector<8x32xf32>, vector<1x32xf32> -> vector<1x32xf32>
    %599 = arith.addf %597, %598 : vector<1x32xf32>
    %600 = vector.extract_strided_slice %599 {offsets = [0, 0], sizes = [1, 8], strides = [1, 1]} : vector<1x32xf32> to vector<1x8xf32>
    %cst_210 = arith.constant 5.000000e-01 : f32
    %601 = vector.broadcast %cst_210 : f32 to vector<1x8xf32>
    %602 = arith.mulf %601, %600 : vector<1x8xf32>
    %603 = math.tanh %602 : vector<1x8xf32>
    %cst_211 = arith.constant 5.000000e-01 : f32
    %604 = vector.broadcast %cst_211 : f32 to vector<1x8xf32>
    %605 = arith.mulf %604, %603 : vector<1x8xf32>
    %cst_212 = arith.constant 5.000000e-01 : f32
    %606 = vector.broadcast %cst_212 : f32 to vector<1x8xf32>
    %607 = arith.addf %605, %606 : vector<1x8xf32>
    %608 = vector.extract_strided_slice %599 {offsets = [0, 8], sizes = [1, 8], strides = [1, 1]} : vector<1x32xf32> to vector<1x8xf32>
    %cst_213 = arith.constant 5.000000e-01 : f32
    %609 = vector.broadcast %cst_213 : f32 to vector<1x8xf32>
    %610 = arith.mulf %609, %608 : vector<1x8xf32>
    %611 = math.tanh %610 : vector<1x8xf32>
    %cst_214 = arith.constant 5.000000e-01 : f32
    %612 = vector.broadcast %cst_214 : f32 to vector<1x8xf32>
    %613 = arith.mulf %612, %611 : vector<1x8xf32>
    %cst_215 = arith.constant 5.000000e-01 : f32
    %614 = vector.broadcast %cst_215 : f32 to vector<1x8xf32>
    %615 = arith.addf %613, %614 : vector<1x8xf32>
    %616 = vector.extract_strided_slice %599 {offsets = [0, 16], sizes = [1, 8], strides = [1, 1]} : vector<1x32xf32> to vector<1x8xf32>
    %617 = math.tanh %616 : vector<1x8xf32>
    %618 = vector.extract_strided_slice %599 {offsets = [0, 24], sizes = [1, 8], strides = [1, 1]} : vector<1x32xf32> to vector<1x8xf32>
    %cst_216 = arith.constant 5.000000e-01 : f32
    %619 = vector.broadcast %cst_216 : f32 to vector<1x8xf32>
    %620 = arith.mulf %619, %618 : vector<1x8xf32>
    %621 = math.tanh %620 : vector<1x8xf32>
    %cst_217 = arith.constant 5.000000e-01 : f32
    %622 = vector.broadcast %cst_217 : f32 to vector<1x8xf32>
    %623 = arith.mulf %622, %621 : vector<1x8xf32>
    %cst_218 = arith.constant 5.000000e-01 : f32
    %624 = vector.broadcast %cst_218 : f32 to vector<1x8xf32>
    %625 = arith.addf %623, %624 : vector<1x8xf32>
    %626 = arith.mulf %615, %551 : vector<1x8xf32>
    %627 = arith.mulf %607, %617 : vector<1x8xf32>
    %628 = arith.addf %626, %627 : vector<1x8xf32>
    %629 = math.tanh %628 : vector<1x8xf32>
    %630 = arith.mulf %625, %629 : vector<1x8xf32>
    %c8_i32 = arith.constant 8 : i32
    %631 = math.tanh %630 : vector<1x8xf32>
    %c0_219 = arith.constant 0 : index
    %c0_220 = arith.constant 0 : index
    %632 = vector.load %arg7[%c0_219, %c0_220] : memref<1x8xf32, #tpu.memory_space<vmem>>, vector<1x8xf32>
    tpu.vector_store %arg7[%c0_219, %c0_220], %631 {strides = array<i32>} : memref<1x8xf32, #tpu.memory_space<vmem>>, vector<1x8xf32>,
    return
  }
}

</mosaic_0001>

<llo_original>
// kernel: tpu_custom_call.1
$region0: #{tpu_custom_call.1}
  #allocation0 [shape = 'u32[]', space=smem, size = 0x4, offset = 0x4, fixed_abs, tag = 'smem constant byte address 0x4 - core index']
  #allocation1 [shape = 'u32[144,128]{1,0:T(1,128)}', space=vmem, size = 0x12000, scoped, tag = 'internal scratch']
  #allocation2 [shape = 'f32[8,128]{1,0:T(8,128)}', space=vmem, size = 0x1000, scoped, tag = 'scratch operand']
  %s0 = inlined_call_operand.hbm [shape: bf16[8,16], index: 0, kind: input, shape index: {}]
  %s1 = inlined_call_operand.hbm [shape: bf16[16,128], index: 1, kind: input, shape index: {}]
  %s2 = inlined_call_operand.hbm [shape: f32[32,128], index: 2, kind: input, shape index: {}]
  %s3 = inlined_call_operand.vmem [shape: f32[1,128], index: 3, kind: input, shape index: {}]
  %s4 = inlined_call_operand.hbm [shape: f32[32,32], index: 4, kind: input, shape index: {}]
  %s5 = inlined_call_operand.vmem [shape: f32[8,32], index: 5, kind: input, shape index: {}]
  %s6 = inlined_call_operand.vmem [shape: f32[1,32], index: 6, kind: input, shape index: {}]
  %s7 = inlined_call_operand.hbm [shape: f32[1,8], index: 7, kind: output, shape index: {}]
  %s8 = sld [smem:[#allocation0]]
  $region54: #{tpu_custom_call.1} parent=0
    _
  %s10 = ssub.s32 1, %s8
  %s11 = scalar_select 0, %s10, %s8
  $region1: #{tpu_custom_call.1} parent=0
    #allocation3 [shape = 'u8[2048]{0}', space=vmem, size = 0x800, scoped, tag = 'input window, operand 0, single buffered']
    #allocation4 [shape = 's32[1]{0}', space=sflag, size = 0x4, scoped, tag = 'scoped memory for tpu_custom_call.1']
    #allocation5 [shape = 's32[1]{0}', space=sflag, size = 0x4, scoped, tag = 'scoped memory for tpu_custom_call.1']
    #allocation6 [shape = 'u8[4096]{0}', space=vmem, size = 0x1000, scoped, tag = 'input window, operand 1, single buffered']
    #allocation7 [shape = 's32[1]{0}', space=sflag, size = 0x4, scoped, tag = 'scoped memory for tpu_custom_call.1']
    #allocation8 [shape = 'u8[16384]{0}', space=vmem, size = 0x4000, scoped, tag = 'input window, operand 2, single buffered']
    #allocation9 [shape = 'u8[16384]{0}', space=vmem, size = 0x4000, scoped, tag = 'input window, operand 4, single buffered']
    #allocation10 [shape = 's32[1]{0}', space=sflag, size = 0x4, scoped, tag = 'scoped memory for tpu_custom_call.1']
    #allocation11 [shape = 'u8[512]{0}', space=vmem, size = 0x400, scoped, tag = 'output window, operand 0, single buffered']
    %12 = vsyncpa [#allocation4], 0
    %13 = vsyncpa [#allocation7], 0
    %14 = vsyncpa [#allocation10], 0
    %15 = vsyncpa [#allocation5], 0
    // Predicated region
    $region2: #{tpu_custom_call.1} parent=1 // pred_check
      _
    $region3: #{tpu_custom_call.1} parent=1 // pred_check_branch
      %17 = sbr.rel (0) target = $region5
    $region4: #{tpu_custom_call.1} parent=1 // pred_region
      %s19 = ssub.s32 64, 64
      %20 = vsyncadd [#allocation4], %s19
      %s22 = sshll.u32 [#allocation3], 4
      %s23 = int_to_ptr.vmem [resolvable:$true] %s22
      %25 = dma.hbm_to_vmem [thread:$0]  %s0, 64, %s23, [#allocation4]
    $region5: #{tpu_custom_call.1} parent=1 // pred_fallthru
      _
    // Predicated region
    $region6: #{tpu_custom_call.1} parent=1 // pred_check
      _
    $region7: #{tpu_custom_call.1} parent=1 // pred_check_branch
      %27 = sbr.rel (0) target = $region9
    $region8: #{tpu_custom_call.1} parent=1 // pred_region
      %s29 = ssub.s32 128, 128
      %30 = vsyncadd [#allocation7], %s29
      %s31 = sshll.u32 [#allocation6], 4
      %s32 = int_to_ptr.vmem [resolvable:$true] %s31
      %37 = dma.hbm_to_vmem [thread:$0]  %s1, 128, %s32, [#allocation7], 64, 64, 4
    $region9: #{tpu_custom_call.1} parent=1 // pred_fallthru
      _
    // Predicated region
    $region10: #{tpu_custom_call.1} parent=1 // pred_check
      _
    $region11: #{tpu_custom_call.1} parent=1 // pred_check_branch
      %39 = sbr.rel (0) target = $region13
    $region12: #{tpu_custom_call.1} parent=1 // pred_region
      %s41 = ssub.s32 512, 512
      %42 = vsyncadd [#allocation7], %s41
      %s43 = sshll.u32 [#allocation8], 4
      %s44 = int_to_ptr.vmem [resolvable:$true] %s43
      %49 = dma.hbm_to_vmem [thread:$0]  %s2, 512, %s44, [#allocation7], 128, 128, 8
    $region13: #{tpu_custom_call.1} parent=1 // pred_fallthru
      _
    // Predicated region
    $region14: #{tpu_custom_call.1} parent=1 // pred_check
      _
    $region15: #{tpu_custom_call.1} parent=1 // pred_check_branch
      %51 = sbr.rel (0) target = $region17
    $region16: #{tpu_custom_call.1} parent=1 // pred_region
      _
    $region17: #{tpu_custom_call.1} parent=1 // pred_fallthru
      _
    // Predicated region
    $region18: #{tpu_custom_call.1} parent=1 // pred_check
      _
    $region19: #{tpu_custom_call.1} parent=1 // pred_check_branch
      %53 = sbr.rel (0) target = $region21
    $region20: #{tpu_custom_call.1} parent=1 // pred_region
      %s55 = ssub.s32 512, 512
      %56 = vsyncadd [#allocation10], %s55
      %s57 = sshll.u32 [#allocation9], 4
      %s58 = int_to_ptr.vmem [resolvable:$true] %s57
      %63 = dma.hbm_to_vmem [thread:$0]  %s4, 512, %s58, [#allocation10], 128, 128, 8
    $region21: #{tpu_custom_call.1} parent=1 // pred_fallthru
      _
    // Predicated region
    $region22: #{tpu_custom_call.1} parent=1 // pred_check
      _
    $region23: #{tpu_custom_call.1} parent=1 // pred_check_branch
      %65 = sbr.rel (0) target = $region25
    $region24: #{tpu_custom_call.1} parent=1 // pred_region
      _
    $region25: #{tpu_custom_call.1} parent=1 // pred_fallthru
      _
    // Predicated region
    $region26: #{tpu_custom_call.1} parent=1 // pred_check
      _
    $region27: #{tpu_custom_call.1} parent=1 // pred_check_branch
      %67 = sbr.rel (0) target = $region29
    $region28: #{tpu_custom_call.1} parent=1 // pred_region
      _
    $region29: #{tpu_custom_call.1} parent=1 // pred_fallthru
      _
    // Predicated region
    $region30: #{tpu_custom_call.1} parent=1 // pred_check
      _
    $region31: #{tpu_custom_call.1} parent=1 // pred_check_branch
      %69 = sbr.rel (0) target = $region33
    $region32: #{tpu_custom_call.1} parent=1 // pred_region
      %70 = dma.done [#allocation4], 64
    $region33: #{tpu_custom_call.1} parent=1 // pred_fallthru
      _
    // Predicated region
    $region34: #{tpu_custom_call.1} parent=1 // pred_check
      _
    $region35: #{tpu_custom_call.1} parent=1 // pred_check_branch
      %72 = sbr.rel (0) target = $region37
    $region36: #{tpu_custom_call.1} parent=1 // pred_region
      %73 = dma.done [#allocation7], 128
    $region37: #{tpu_custom_call.1} parent=1 // pred_fallthru
      _
    // Predicated region
    $region38: #{tpu_custom_call.1} parent=1 // pred_check
      _
    $region39: #{tpu_custom_call.1} parent=1 // pred_check_branch
      %75 = sbr.rel (0) target = $region41
    $region40: #{tpu_custom_call.1} parent=1 // pred_region
      %76 = dma.done [#allocation7], 512
    $region41: #{tpu_custom_call.1} parent=1 // pred_fallthru
      _
    // Predicated region
    $region42: #{tpu_custom_call.1} parent=1 // pred_check
      _
    $region43: #{tpu_custom_call.1} parent=1 // pred_check_branch
      %78 = sbr.rel (0) target = $region45
    $region44: #{tpu_custom_call.1} parent=1 // pred_region
      %79 = dma.done [#allocation10], 512
    $region45: #{tpu_custom_call.1} parent=1 // pred_fallthru
      _
    %v81 = vld [vmem:[#allocation3] sm:$0xf]
    %v82 = vld [vmem:[#allocation6] sm:$0xf]
    %v83 = vld [vmem:[#allocation6 + $0x4] sm:$0xf]
    %v84 = vld [vmem:[%s3] sm:$0x1]
    %v86 = vlaneseq
    %v87 = vshrl.u32 %v86, 7
    %v88 = vsub.s32 0, %v87
    %v89 = vrot.slane %v84, %v88
    %v93 = vunpack.c.l.b16 %v82
    %v94 = vunpack.c.l.b16 %v83
    %v95 = vpack.c.b16 %v94, %v93
    %vm97 = vcmask 130048
    %v99 = vsel %vm97, %v81, 0
    %101 = vmatprep.subr.bf16.mxu0 0
    %102 = vmatpush1.bf16.msra.mxu0 0
    %103 = vmatprep.subr.bf16.mxu0 0
    %104 = vmatpush1.bf16.msra.mxu0 0
    %105 = vmatprep.subr.bf16.mxu0 0
    %106 = vmatpush1.bf16.msra.mxu0 0
    %107 = vmatprep.subr.bf16.mxu0 0
    %108 = vmatpush1.bf16.msra.mxu0 0
    %109 = vmatprep.subr.bf16.mxu0 0
    %110 = vmatpush1.bf16.msra.mxu0 0
    %111 = vmatprep.subr.bf16.mxu0 0
    %112 = vmatpush1.bf16.msra.mxu0 0
    %113 = vmatprep.subr.bf16.mxu0 0
    %114 = vmatpush1.bf16.msra.mxu0 0
    %115 = vmatprep.subr.bf16.mxu0 0
    %116 = vmatpush1.bf16.msra.mxu0 %v95
    %117 = vmatprep.subr.bf16.mxu0 0
    %118 = vmatpush2.bf16.msra.mxu0 0
    %119 = vmatprep.subr.bf16.mxu0 0
    %120 = vmatpush2.bf16.msra.mxu0 0
    %121 = vmatprep.subr.bf16.mxu0 0
    %122 = vmatpush2.bf16.msra.mxu0 0
    %123 = vmatprep.subr.bf16.mxu0 0
    %124 = vmatpush2.bf16.msra.mxu0 0
    %125 = vmatprep.subr.bf16.mxu0 0
    %126 = vmatpush2.bf16.msra.mxu0 0
    %127 = vmatprep.subr.bf16.mxu0 0
    %128 = vmatpush2.bf16.msra.mxu0 0
    %129 = vmatprep.subr.bf16.mxu0 0
    %130 = vmatpush2.bf16.msra.mxu0 0
    %131 = vmatprep.subr.bf16.mxu0 0
    %132 = vmatpush2.bf16.msra.mxu0 0
    %133 = vmatprep.mubr.bf16.mxu0 0
    %134 = vmatmul.mubr.bf16.gmra.mxu0 %v99
    %v135 = vpop.f32.mrf.mxu0
    %v136 = vadd.f32 %v89, %v135
    %v137 = vpop.f32.mrf.mxu0
    %v138 = vpop.f32.mrf.mxu0
    %v139 = vpop.f32.mrf.mxu0
    %140 = vdwg.mxu0
    %141 = vst [vmem:[#allocation2] sm:$0xff] %v136
    %v142 = vld [vmem:[#allocation8] sm:$0xff]
    %v143 = vld [vmem:[#allocation8 + $0x8] sm:$0xff]
    %v144 = vld [vmem:[#allocation8 + $0x10] sm:$0xff]
    %v145 = vld [vmem:[#allocation8 + $0x18] sm:$0xff]
    %v146 = vld [vmem:[%s5] sm:$0xff]
    %v147 = vld [vmem:[#allocation9] sm:$0xff]
    %v148 = vld [vmem:[#allocation9 + $0x8] sm:$0xff]
    %v149 = vld [vmem:[#allocation9 + $0x10] sm:$0xff]
    %v150 = vld [vmem:[#allocation9 + $0x18] sm:$0xff]
    %v151 = vld [vmem:[%s6] sm:$0x1]
    %v152 = vld [vmem:[#allocation2] sm:$0x1]
    %vm153 = vcmask 261120
    %v155 = vsel %vm153, 0.0, 0
    %157 = vmatprep.subr.mxu0 0.0
    %158 = vmatpush1.msra.mxu0 0.0
    %159 = vmatprep.subr.mxu0 0.0
    %160 = vmatpush1.msra.mxu0 0.0
    %161 = vmatprep.subr.mxu0 0.0
    %162 = vmatpush1.msra.mxu0 0.0
    %163 = vmatprep.subr.mxu0 0.0
    %164 = vmatpush1.msra.mxu0 0.0
    %165 = vmatprep.subr.mxu0 0.0
    %166 = vmatpush1.msra.mxu0 0.0
    %167 = vmatprep.subr.mxu0 0.0
    %168 = vmatpush1.msra.mxu0 0.0
    %169 = vmatprep.subr.mxu0 0.0
    %170 = vmatpush1.msra.mxu0 0.0
    %171 = vmatprep.subr.mxu0 0.0
    %172 = vmatpush1.msra.mxu0 0.0
    %173 = vmatprep.subr.mxu0 0.0
    %174 = vmatpush1.msra.mxu0 0.0
    %175 = vmatprep.subr.mxu0 0.0
    %176 = vmatpush1.msra.mxu0 0.0
    %177 = vmatprep.subr.mxu0 0.0
    %178 = vmatpush1.msra.mxu0 0.0
    %179 = vmatprep.subr.mxu0 0.0
    %180 = vmatpush1.msra.mxu0 0.0
    %181 = vmatprep.subr.mxu0 0.0
    %182 = vmatpush1.msra.mxu0 %v145
    %183 = vmatprep.subr.mxu0 0.0
    %184 = vmatpush1.msra.mxu0 %v144
    %185 = vmatprep.subr.mxu0 0.0
    %186 = vmatpush1.msra.mxu0 %v143
    %187 = vmatprep.subr.mxu0 0.0
    %188 = vmatpush1.msra.mxu0 %v142
    %189 = vmatprep.subr.mxu0 0.0
    %190 = vmatpush2.msra.mxu0 0.0
    %191 = vmatprep.subr.mxu0 0.0
    %192 = vmatpush2.msra.mxu0 0.0
    %193 = vmatprep.subr.mxu0 0.0
    %194 = vmatpush2.msra.mxu0 0.0
    %195 = vmatprep.subr.mxu0 0.0
    %196 = vmatpush2.msra.mxu0 0.0
    %197 = vmatprep.subr.mxu0 0.0
    %198 = vmatpush2.msra.mxu0 0.0
    %199 = vmatprep.subr.mxu0 0.0
    %200 = vmatpush2.msra.mxu0 0.0
    %201 = vmatprep.subr.mxu0 0.0
    %202 = vmatpush2.msra.mxu0 0.0
    %203 = vmatprep.subr.mxu0 0.0
    %204 = vmatpush2.msra.mxu0 0.0
    %205 = vmatprep.subr.mxu0 0.0
    %206 = vmatpush2.msra.mxu0 0.0
    %207 = vmatprep.subr.mxu0 0.0
    %208 = vmatpush2.msra.mxu0 0.0
    %209 = vmatprep.subr.mxu0 0.0
    %210 = vmatpush2.msra.mxu0 0.0
    %211 = vmatprep.subr.mxu0 0.0
    %212 = vmatpush2.msra.mxu0 0.0
    %213 = vmatprep.subr.mxu0 0.0
    %214 = vmatpush2.msra.mxu0 0.0
    %215 = vmatprep.subr.mxu0 0.0
    %216 = vmatpush2.msra.mxu0 0.0
    %217 = vmatprep.subr.mxu0 0.0
    %218 = vmatpush2.msra.mxu0 0.0
    %219 = vmatprep.subr.mxu0 0.0
    %220 = vmatpush2.msra.mxu0 0.0
    %221 = vmatprep.mubr.f32.mxu0 0.0
    %222 = vmatmul.mubr.f32.gmra.mxu0 %v155
    %v223 = vpop.f32.mrf.mxu0
    %v224 = vadd.f32 0.0, %v223
    %v225 = vpop.f32.mrf.mxu0
    %226 = vdwg.mxu0
    %v227 = vadd.f32 %v152, %v224
    %v228 = vmul.f32 %v227, 0.5
    %v229 = vtanh.pop %v228
    %v230 = vmul.f32 %v229, 0.5
    %v231 = vadd.f32 %v230, 0.5
    %v232 = vtanh.pop %v227
    %v233 = vmul.f32 %v231, 0.0
    %235 = vrot.lane.b32.xlu0 %v232, 64
    %v236 = vpop.permute.xlu0 %235
    %v238 = vmul.f32 %v231, %v236
    %240 = vrot.lane.b32.xlu0 %v238, 32
    %v241 = vpop.permute.xlu0 %240
    %v243 = vadd.f32 %v233, %v241
    %v244 = vtanh.pop %v243
    %246 = vrot.lane.b32.xlu0 %v244, 64
    %v247 = vpop.permute.xlu0 %246
    %v249 = vmul.f32 %v231, %v247
    %v250 = vmul.f32 %v249, 0.5
    %v251 = vtanh.pop %v250
    %v252 = vmul.f32 %v251, 0.5
    %v253 = vadd.f32 %v252, 0.5
    %255 = vrot.lane.b32.xlu0 %v253, 32
    %v256 = vpop.permute.xlu0 %255
    %v257 = vsel %vm153, %v256, 0
    %259 = vmatprep.subr.mxu0 0.0
    %260 = vmatpush1.msra.mxu0 0.0
    %261 = vmatprep.subr.mxu0 0.0
    %262 = vmatpush1.msra.mxu0 0.0
    %263 = vmatprep.subr.mxu0 0.0
    %264 = vmatpush1.msra.mxu0 0.0
    %265 = vmatprep.subr.mxu0 0.0
    %266 = vmatpush1.msra.mxu0 0.0
    %267 = vmatprep.subr.mxu0 0.0
    %268 = vmatpush1.msra.mxu0 0.0
    %269 = vmatprep.subr.mxu0 0.0
    %270 = vmatpush1.msra.mxu0 0.0
    %271 = vmatprep.subr.mxu0 0.0
    %272 = vmatpush1.msra.mxu0 0.0
    %273 = vmatprep.subr.mxu0 0.0
    %274 = vmatpush1.msra.mxu0 0.0
    %275 = vmatprep.subr.mxu0 0.0
    %276 = vmatpush1.msra.mxu0 0.0
    %277 = vmatprep.subr.mxu0 0.0
    %278 = vmatpush1.msra.mxu0 0.0
    %279 = vmatprep.subr.mxu0 0.0
    %280 = vmatpush1.msra.mxu0 0.0
    %281 = vmatprep.subr.mxu0 0.0
    %282 = vmatpush1.msra.mxu0 0.0
    %283 = vmatprep.subr.mxu0 0.0
    %284 = vmatpush1.msra.mxu0 %v150
    %285 = vmatprep.subr.mxu0 0.0
    %286 = vmatpush1.msra.mxu0 %v149
    %287 = vmatprep.subr.mxu0 0.0
    %288 = vmatpush1.msra.mxu0 %v148
    %289 = vmatprep.subr.mxu0 0.0
    %290 = vmatpush1.msra.mxu0 %v147
    %291 = vmatprep.subr.mxu0 0.0
    %292 = vmatpush2.msra.mxu0 0.0
    %293 = vmatprep.subr.mxu0 0.0
    %294 = vmatpush2.msra.mxu0 0.0
    %295 = vmatprep.subr.mxu0 0.0
    %296 = vmatpush2.msra.mxu0 0.0
    %297 = vmatprep.subr.mxu0 0.0
    %298 = vmatpush2.msra.mxu0 0.0
    %299 = vmatprep.subr.mxu0 0.0
    %300 = vmatpush2.msra.mxu0 0.0
    %301 = vmatprep.subr.mxu0 0.0
    %302 = vmatpush2.msra.mxu0 0.0
    %303 = vmatprep.subr.mxu0 0.0
    %304 = vmatpush2.msra.mxu0 0.0
    %305 = vmatprep.subr.mxu0 0.0
    %306 = vmatpush2.msra.mxu0 0.0
    %307 = vmatprep.subr.mxu0 0.0
    %308 = vmatpush2.msra.mxu0 0.0
    %309 = vmatprep.subr.mxu0 0.0
    %310 = vmatpush2.msra.mxu0 0.0
    %311 = vmatprep.subr.mxu0 0.0
    %312 = vmatpush2.msra.mxu0 0.0
    %313 = vmatprep.subr.mxu0 0.0
    %314 = vmatpush2.msra.mxu0 0.0
    %315 = vmatprep.subr.mxu0 0.0
    %316 = vmatpush2.msra.mxu0 0.0
    %317 = vmatprep.subr.mxu0 0.0
    %318 = vmatpush2.msra.mxu0 0.0
    %319 = vmatprep.subr.mxu0 0.0
    %320 = vmatpush2.msra.mxu0 0.0
    %321 = vmatprep.subr.mxu0 0.0
    %322 = vmatpush2.msra.mxu0 0.0
    %323 = vmatprep.mubr.f32.mxu0 0.0
    %324 = vmatmul.mubr.f32.gmra.mxu0 %v257
    %v325 = vpop.f32.mrf.mxu0
    %v326 = vadd.f32 %v151, %v325
    %v327 = vpop.f32.mrf.mxu0
    %328 = vdwg.mxu0
    %vm329 = vcmask 64512
    %v330 = vsel %vm329, 0.0, 0
    %332 = vmatprep.subr.mxu0 0.0
    %333 = vmatpush1.msra.mxu0 0.0
    %334 = vmatprep.subr.mxu0 0.0
    %335 = vmatpush1.msra.mxu0 0.0
    %336 = vmatprep.subr.mxu0 0.0
    %337 = vmatpush1.msra.mxu0 0.0
    %338 = vmatprep.subr.mxu0 0.0
    %339 = vmatpush1.msra.mxu0 0.0
    %340 = vmatprep.subr.mxu0 0.0
    %341 = vmatpush1.msra.mxu0 0.0
    %342 = vmatprep.subr.mxu0 0.0
    %343 = vmatpush1.msra.mxu0 0.0
    %344 = vmatprep.subr.mxu0 0.0
    %345 = vmatpush1.msra.mxu0 0.0
    %346 = vmatprep.subr.mxu0 0.0
    %347 = vmatpush1.msra.mxu0 0.0
    %348 = vmatprep.subr.mxu0 0.0
    %349 = vmatpush1.msra.mxu0 0.0
    %350 = vmatprep.subr.mxu0 0.0
    %351 = vmatpush1.msra.mxu0 0.0
    %352 = vmatprep.subr.mxu0 0.0
    %353 = vmatpush1.msra.mxu0 0.0
    %354 = vmatprep.subr.mxu0 0.0
    %355 = vmatpush1.msra.mxu0 0.0
    %356 = vmatprep.subr.mxu0 0.0
    %357 = vmatpush1.msra.mxu0 0.0
    %358 = vmatprep.subr.mxu0 0.0
    %359 = vmatpush1.msra.mxu0 0.0
    %360 = vmatprep.subr.mxu0 0.0
    %361 = vmatpush1.msra.mxu0 0.0
    %362 = vmatprep.subr.mxu0 0.0
    %363 = vmatpush1.msra.mxu0 %v146
    %364 = vmatprep.subr.mxu0 0.0
    %365 = vmatpush2.msra.mxu0 0.0
    %366 = vmatprep.subr.mxu0 0.0
    %367 = vmatpush2.msra.mxu0 0.0
    %368 = vmatprep.subr.mxu0 0.0
    %369 = vmatpush2.msra.mxu0 0.0
    %370 = vmatprep.subr.mxu0 0.0
    %371 = vmatpush2.msra.mxu0 0.0
    %372 = vmatprep.subr.mxu0 0.0
    %373 = vmatpush2.msra.mxu0 0.0
    %374 = vmatprep.subr.mxu0 0.0
    %375 = vmatpush2.msra.mxu0 0.0
    %376 = vmatprep.subr.mxu0 0.0
    %377 = vmatpush2.msra.mxu0 0.0
    %378 = vmatprep.subr.mxu0 0.0
    %379 = vmatpush2.msra.mxu0 0.0
    %380 = vmatprep.subr.mxu0 0.0
    %381 = vmatpush2.msra.mxu0 0.0
    %382 = vmatprep.subr.mxu0 0.0
    %383 = vmatpush2.msra.mxu0 0.0
    %384 = vmatprep.subr.mxu0 0.0
    %385 = vmatpush2.msra.mxu0 0.0
    %386 = vmatprep.subr.mxu0 0.0
    %387 = vmatpush2.msra.mxu0 0.0
    %388 = vmatprep.subr.mxu0 0.0
    %389 = vmatpush2.msra.mxu0 0.0
    %390 = vmatprep.subr.mxu0 0.0
    %391 = vmatpush2.msra.mxu0 0.0
    %392 = vmatprep.subr.mxu0 0.0
    %393 = vmatpush2.msra.mxu0 0.0
    %394 = vmatprep.subr.mxu0 0.0
    %395 = vmatpush2.msra.mxu0 0.0
    %396 = vmatprep.mubr.f32.mxu0 0.0
    %397 = vmatmul.mubr.f32.gmra.mxu0 %v330
    %v398 = vpop.f32.mrf.mxu0
    %v399 = vadd.f32 0.0, %v398
    %v400 = vpop.f32.mrf.mxu0
    %401 = vdwg.mxu0
    %v402 = vadd.f32 %v326, %v399
    %v403 = vmul.f32 %v402, 0.5
    %v404 = vtanh.pop %v403
    %v405 = vmul.f32 %v404, 0.5
    %v406 = vadd.f32 %v405, 0.5
    %v407 = vtanh.pop %v402
    %v408 = vmul.f32 %v406, 0.0
    %410 = vrot.lane.b32.xlu0 %v407, 112
    %v411 = vpop.permute.xlu0 %410
    %v413 = vmul.f32 %v406, %v411
    %415 = vrot.lane.b32.xlu0 %v413, 8
    %v416 = vpop.permute.xlu0 %415
    %v418 = vadd.f32 %v408, %v416
    %v419 = vtanh.pop %v418
    %421 = vrot.lane.b32.xlu0 %v419, 16
    %v422 = vpop.permute.xlu0 %421
    %v424 = vmul.f32 %v406, %v422
    %v425 = vld [vmem:[#allocation2 + $0x1] sm:$0x1]
    %427 = vrot.lane.b32.xlu0 %v249, 32
    %v428 = vpop.permute.xlu0 %427
    %v429 = vsel %vm153, %v428, 0
    %431 = vmatprep.subr.mxu0 0.0
    %432 = vmatpush1.msra.mxu0 0.0
    %433 = vmatprep.subr.mxu0 0.0
    %434 = vmatpush1.msra.mxu0 0.0
    %435 = vmatprep.subr.mxu0 0.0
    %436 = vmatpush1.msra.mxu0 0.0
    %437 = vmatprep.subr.mxu0 0.0
    %438 = vmatpush1.msra.mxu0 0.0
    %439 = vmatprep.subr.mxu0 0.0
    %440 = vmatpush1.msra.mxu0 0.0
    %441 = vmatprep.subr.mxu0 0.0
    %442 = vmatpush1.msra.mxu0 0.0
    %443 = vmatprep.subr.mxu0 0.0
    %444 = vmatpush1.msra.mxu0 0.0
    %445 = vmatprep.subr.mxu0 0.0
    %446 = vmatpush1.msra.mxu0 0.0
    %447 = vmatprep.subr.mxu0 0.0
    %448 = vmatpush1.msra.mxu0 0.0
    %449 = vmatprep.subr.mxu0 0.0
    %450 = vmatpush1.msra.mxu0 0.0
    %451 = vmatprep.subr.mxu0 0.0
    %452 = vmatpush1.msra.mxu0 0.0
    %453 = vmatprep.subr.mxu0 0.0
    %454 = vmatpush1.msra.mxu0 0.0
    %455 = vmatprep.subr.mxu0 0.0
    %456 = vmatpush1.msra.mxu0 %v145
    %457 = vmatprep.subr.mxu0 0.0
    %458 = vmatpush1.msra.mxu0 %v144
    %459 = vmatprep.subr.mxu0 0.0
    %460 = vmatpush1.msra.mxu0 %v143
    %461 = vmatprep.subr.mxu0 0.0
    %462 = vmatpush1.msra.mxu0 %v142
    %463 = vmatprep.subr.mxu0 0.0
    %464 = vmatpush2.msra.mxu0 0.0
    %465 = vmatprep.subr.mxu0 0.0
    %466 = vmatpush2.msra.mxu0 0.0
    %467 = vmatprep.subr.mxu0 0.0
    %468 = vmatpush2.msra.mxu0 0.0
    %469 = vmatprep.subr.mxu0 0.0
    %470 = vmatpush2.msra.mxu0 0.0
    %471 = vmatprep.subr.mxu0 0.0
    %472 = vmatpush2.msra.mxu0 0.0
    %473 = vmatprep.subr.mxu0 0.0
    %474 = vmatpush2.msra.mxu0 0.0
    %475 = vmatprep.subr.mxu0 0.0
    %476 = vmatpush2.msra.mxu0 0.0
    %477 = vmatprep.subr.mxu0 0.0
    %478 = vmatpush2.msra.mxu0 0.0
    %479 = vmatprep.subr.mxu0 0.0
    %480 = vmatpush2.msra.mxu0 0.0
    %481 = vmatprep.subr.mxu0 0.0
    %482 = vmatpush2.msra.mxu0 0.0
    %483 = vmatprep.subr.mxu0 0.0
    %484 = vmatpush2.msra.mxu0 0.0
    %485 = vmatprep.subr.mxu0 0.0
    %486 = vmatpush2.msra.mxu0 0.0
    %487 = vmatprep.subr.mxu0 0.0
    %488 = vmatpush2.msra.mxu0 0.0
    %489 = vmatprep.subr.mxu0 0.0
    %490 = vmatpush2.msra.mxu0 0.0
    %491 = vmatprep.subr.mxu0 0.0
    %492 = vmatpush2.msra.mxu0 0.0
    %493 = vmatprep.subr.mxu0 0.0
    %494 = vmatpush2.msra.mxu0 0.0
    %495 = vmatprep.mubr.f32.mxu0 0.0
    %496 = vmatmul.mubr.f32.gmra.mxu0 %v429
    %v497 = vpop.f32.mrf.mxu0
    %v498 = vadd.f32 0.0, %v497
    %v499 = vpop.f32.mrf.mxu0
    %500 = vdwg.mxu0
    %v501 = vadd.f32 %v425, %v498
    %v502 = vmul.f32 %v501, 0.5
    %v503 = vtanh.pop %v502
    %v504 = vmul.f32 %v503, 0.5
    %v505 = vadd.f32 %v504, 0.5
    %v506 = vtanh.pop %v501
    %v507 = vmul.f32 %v505, %v243
    %509 = vrot.lane.b32.xlu0 %v506, 64
    %v510 = vpop.permute.xlu0 %509
    %v512 = vmul.f32 %v505, %v510
    %514 = vrot.lane.b32.xlu0 %v512, 32
    %v515 = vpop.permute.xlu0 %514
    %v517 = vadd.f32 %v507, %v515
    %v518 = vtanh.pop %v517
    %520 = vrot.lane.b32.xlu0 %v518, 64
    %v521 = vpop.permute.xlu0 %520
    %v523 = vmul.f32 %v505, %v521
    %v524 = vmul.f32 %v523, 0.5
    %v525 = vtanh.pop %v524
    %v526 = vmul.f32 %v525, 0.5
    %v527 = vadd.f32 %v526, 0.5
    %529 = vrot.lane.b32.xlu0 %v527, 32
    %v530 = vpop.permute.xlu0 %529
    %v531 = vsel %vm153, %v530, 0
    %533 = vmatprep.subr.mxu0 0.0
    %534 = vmatpush1.msra.mxu0 0.0
    %535 = vmatprep.subr.mxu0 0.0
    %536 = vmatpush1.msra.mxu0 0.0
    %537 = vmatprep.subr.mxu0 0.0
    %538 = vmatpush1.msra.mxu0 0.0
    %539 = vmatprep.subr.mxu0 0.0
    %540 = vmatpush1.msra.mxu0 0.0
    %541 = vmatprep.subr.mxu0 0.0
    %542 = vmatpush1.msra.mxu0 0.0
    %543 = vmatprep.subr.mxu0 0.0
    %544 = vmatpush1.msra.mxu0 0.0
    %545 = vmatprep.subr.mxu0 0.0
    %546 = vmatpush1.msra.mxu0 0.0
    %547 = vmatprep.subr.mxu0 0.0
    %548 = vmatpush1.msra.mxu0 0.0
    %549 = vmatprep.subr.mxu0 0.0
    %550 = vmatpush1.msra.mxu0 0.0
    %551 = vmatprep.subr.mxu0 0.0
    %552 = vmatpush1.msra.mxu0 0.0
    %553 = vmatprep.subr.mxu0 0.0
    %554 = vmatpush1.msra.mxu0 0.0
    %555 = vmatprep.subr.mxu0 0.0
    %556 = vmatpush1.msra.mxu0 0.0
    %557 = vmatprep.subr.mxu0 0.0
    %558 = vmatpush1.msra.mxu0 %v150
    %559 = vmatprep.subr.mxu0 0.0
    %560 = vmatpush1.msra.mxu0 %v149
    %561 = vmatprep.subr.mxu0 0.0
    %562 = vmatpush1.msra.mxu0 %v148
    %563 = vmatprep.subr.mxu0 0.0
    %564 = vmatpush1.msra.mxu0 %v147
    %565 = vmatprep.subr.mxu0 0.0
    %566 = vmatpush2.msra.mxu0 0.0
    %567 = vmatprep.subr.mxu0 0.0
    %568 = vmatpush2.msra.mxu0 0.0
    %569 = vmatprep.subr.mxu0 0.0
    %570 = vmatpush2.msra.mxu0 0.0
    %571 = vmatprep.subr.mxu0 0.0
    %572 = vmatpush2.msra.mxu0 0.0
    %573 = vmatprep.subr.mxu0 0.0
    %574 = vmatpush2.msra.mxu0 0.0
    %575 = vmatprep.subr.mxu0 0.0
    %576 = vmatpush2.msra.mxu0 0.0
    %577 = vmatprep.subr.mxu0 0.0
    %578 = vmatpush2.msra.mxu0 0.0
    %579 = vmatprep.subr.mxu0 0.0
    %580 = vmatpush2.msra.mxu0 0.0
    %581 = vmatprep.subr.mxu0 0.0
    %582 = vmatpush2.msra.mxu0 0.0
    %583 = vmatprep.subr.mxu0 0.0
    %584 = vmatpush2.msra.mxu0 0.0
    %585 = vmatprep.subr.mxu0 0.0
    %586 = vmatpush2.msra.mxu0 0.0
    %587 = vmatprep.subr.mxu0 0.0
    %588 = vmatpush2.msra.mxu0 0.0
    %589 = vmatprep.subr.mxu0 0.0
    %590 = vmatpush2.msra.mxu0 0.0
    %591 = vmatprep.subr.mxu0 0.0
    %592 = vmatpush2.msra.mxu0 0.0
    %593 = vmatprep.subr.mxu0 0.0
    %594 = vmatpush2.msra.mxu0 0.0
    %595 = vmatprep.subr.mxu0 0.0
    %596 = vmatpush2.msra.mxu0 0.0
    %597 = vmatprep.mubr.f32.mxu0 0.0
    %598 = vmatmul.mubr.f32.gmra.mxu0 %v531
    %v599 = vpop.f32.mrf.mxu0
    %v600 = vadd.f32 %v151, %v599
    %v601 = vpop.f32.mrf.mxu0
    %602 = vdwg.mxu0
    %604 = vrot.lane.b32.xlu0 %v424, 104
    %v605 = vpop.permute.xlu0 %604
    %v606 = vsel %vm329, %v605, 0
    %608 = vmatprep.subr.mxu0 0.0
    %609 = vmatpush1.msra.mxu0 0.0
    %610 = vmatprep.subr.mxu0 0.0
    %611 = vmatpush1.msra.mxu0 0.0
    %612 = vmatprep.subr.mxu0 0.0
    %613 = vmatpush1.msra.mxu0 0.0
    %614 = vmatprep.subr.mxu0 0.0
    %615 = vmatpush1.msra.mxu0 0.0
    %616 = vmatprep.subr.mxu0 0.0
    %617 = vmatpush1.msra.mxu0 0.0
    %618 = vmatprep.subr.mxu0 0.0
    %619 = vmatpush1.msra.mxu0 0.0
    %620 = vmatprep.subr.mxu0 0.0
    %621 = vmatpush1.msra.mxu0 0.0
    %622 = vmatprep.subr.mxu0 0.0
    %623 = vmatpush1.msra.mxu0 0.0
    %624 = vmatprep.subr.mxu0 0.0
    %625 = vmatpush1.msra.mxu0 0.0
    %626 = vmatprep.subr.mxu0 0.0
    %627 = vmatpush1.msra.mxu0 0.0
    %628 = vmatprep.subr.mxu0 0.0
    %629 = vmatpush1.msra.mxu0 0.0
    %630 = vmatprep.subr.mxu0 0.0
    %631 = vmatpush1.msra.mxu0 0.0
    %632 = vmatprep.subr.mxu0 0.0
    %633 = vmatpush1.msra.mxu0 0.0
    %634 = vmatprep.subr.mxu0 0.0
    %635 = vmatpush1.msra.mxu0 0.0
    %636 = vmatprep.subr.mxu0 0.0
    %637 = vmatpush1.msra.mxu0 0.0
    %638 = vmatprep.subr.mxu0 0.0
    %639 = vmatpush1.msra.mxu0 %v146
    %640 = vmatprep.subr.mxu0 0.0
    %641 = vmatpush2.msra.mxu0 0.0
    %642 = vmatprep.subr.mxu0 0.0
    %643 = vmatpush2.msra.mxu0 0.0
    %644 = vmatprep.subr.mxu0 0.0
    %645 = vmatpush2.msra.mxu0 0.0
    %646 = vmatprep.subr.mxu0 0.0
    %647 = vmatpush2.msra.mxu0 0.0
    %648 = vmatprep.subr.mxu0 0.0
    %649 = vmatpush2.msra.mxu0 0.0
    %650 = vmatprep.subr.mxu0 0.0
    %651 = vmatpush2.msra.mxu0 0.0
    %652 = vmatprep.subr.mxu0 0.0
    %653 = vmatpush2.msra.mxu0 0.0
    %654 = vmatprep.subr.mxu0 0.0
    %655 = vmatpush2.msra.mxu0 0.0
    %656 = vmatprep.subr.mxu0 0.0
    %657 = vmatpush2.msra.mxu0 0.0
    %658 = vmatprep.subr.mxu0 0.0
    %659 = vmatpush2.msra.mxu0 0.0
    %660 = vmatprep.subr.mxu0 0.0
    %661 = vmatpush2.msra.mxu0 0.0
    %662 = vmatprep.subr.mxu0 0.0
    %663 = vmatpush2.msra.mxu0 0.0
    %664 = vmatprep.subr.mxu0 0.0
    %665 = vmatpush2.msra.mxu0 0.0
    %666 = vmatprep.subr.mxu0 0.0
    %667 = vmatpush2.msra.mxu0 0.0
    %668 = vmatprep.subr.mxu0 0.0
    %669 = vmatpush2.msra.mxu0 0.0
    %670 = vmatprep.subr.mxu0 0.0
    %671 = vmatpush2.msra.mxu0 0.0
    %672 = vmatprep.mubr.f32.mxu0 0.0
    %673 = vmatmul.mubr.f32.gmra.mxu0 %v606
    %v674 = vpop.f32.mrf.mxu0
    %v675 = vadd.f32 0.0, %v674
    %v676 = vpop.f32.mrf.mxu0
    %677 = vdwg.mxu0
    %v678 = vadd.f32 %v600, %v675
    %v679 = vmul.f32 %v678, 0.5
    %v680 = vtanh.pop %v679
    %v681 = vmul.f32 %v680, 0.5
    %v682 = vadd.f32 %v681, 0.5
    %v683 = vtanh.pop %v678
    %v684 = vmul.f32 %v682, %v418
    %686 = vrot.lane.b32.xlu0 %v683, 112
    %v687 = vpop.permute.xlu0 %686
    %v689 = vmul.f32 %v682, %v687
    %691 = vrot.lane.b32.xlu0 %v689, 8
    %v692 = vpop.permute.xlu0 %691
    %v694 = vadd.f32 %v684, %v692
    %v695 = vtanh.pop %v694
    %697 = vrot.lane.b32.xlu0 %v695, 16
    %v698 = vpop.permute.xlu0 %697
    %v700 = vmul.f32 %v682, %v698
    %v701 = vld [vmem:[#allocation2 + $0x2] sm:$0x1]
    %703 = vrot.lane.b32.xlu0 %v523, 32
    %v704 = vpop.permute.xlu0 %703
    %v705 = vsel %vm153, %v704, 0
    %707 = vmatprep.subr.mxu0 0.0
    %708 = vmatpush1.msra.mxu0 0.0
    %709 = vmatprep.subr.mxu0 0.0
    %710 = vmatpush1.msra.mxu0 0.0
    %711 = vmatprep.subr.mxu0 0.0
    %712 = vmatpush1.msra.mxu0 0.0
    %713 = vmatprep.subr.mxu0 0.0
    %714 = vmatpush1.msra.mxu0 0.0
    %715 = vmatprep.subr.mxu0 0.0
    %716 = vmatpush1.msra.mxu0 0.0
    %717 = vmatprep.subr.mxu0 0.0
    %718 = vmatpush1.msra.mxu0 0.0
    %719 = vmatprep.subr.mxu0 0.0
    %720 = vmatpush1.msra.mxu0 0.0
    %721 = vmatprep.subr.mxu0 0.0
    %722 = vmatpush1.msra.mxu0 0.0
    %723 = vmatprep.subr.mxu0 0.0
    %724 = vmatpush1.msra.mxu0 0.0
    %725 = vmatprep.subr.mxu0 0.0
    %726 = vmatpush1.msra.mxu0 0.0
    %727 = vmatprep.subr.mxu0 0.0
    %728 = vmatpush1.msra.mxu0 0.0
    %729 = vmatprep.subr.mxu0 0.0
    %730 = vmatpush1.msra.mxu0 0.0
    %731 = vmatprep.subr.mxu0 0.0
    %732 = vmatpush1.msra.mxu0 %v145
    %733 = vmatprep.subr.mxu0 0.0
    %734 = vmatpush1.msra.mxu0 %v144
    %735 = vmatprep.subr.mxu0 0.0
    %736 = vmatpush1.msra.mxu0 %v143
    %737 = vmatprep.subr.mxu0 0.0
    %738 = vmatpush1.msra.mxu0 %v142
    %739 = vmatprep.subr.mxu0 0.0
    %740 = vmatpush2.msra.mxu0 0.0
    %741 = vmatprep.subr.mxu0 0.0
    %742 = vmatpush2.msra.mxu0 0.0
    %743 = vmatprep.subr.mxu0 0.0
    %744 = vmatpush2.msra.mxu0 0.0
    %745 = vmatprep.subr.mxu0 0.0
    %746 = vmatpush2.msra.mxu0 0.0
    %747 = vmatprep.subr.mxu0 0.0
    %748 = vmatpush2.msra.mxu0 0.0
    %749 = vmatprep.subr.mxu0 0.0
    %750 = vmatpush2.msra.mxu0 0.0
    %751 = vmatprep.subr.mxu0 0.0
    %752 = vmatpush2.msra.mxu0 0.0
    %753 = vmatprep.subr.mxu0 0.0
    %754 = vmatpush2.msra.mxu0 0.0
    %755 = vmatprep.subr.mxu0 0.0
    %756 = vmatpush2.msra.mxu0 0.0
    %757 = vmatprep.subr.mxu0 0.0
    %758 = vmatpush2.msra.mxu0 0.0
    %759 = vmatprep.subr.mxu0 0.0
    %760 = vmatpush2.msra.mxu0 0.0
    %761 = vmatprep.subr.mxu0 0.0
    %762 = vmatpush2.msra.mxu0 0.0
    %763 = vmatprep.subr.mxu0 0.0
    %764 = vmatpush2.msra.mxu0 0.0
    %765 = vmatprep.subr.mxu0 0.0
    %766 = vmatpush2.msra.mxu0 0.0
    %767 = vmatprep.subr.mxu0 0.0
    %768 = vmatpush2.msra.mxu0 0.0
    %769 = vmatprep.subr.mxu0 0.0
    %770 = vmatpush2.msra.mxu0 0.0
    %771 = vmatprep.mubr.f32.mxu0 0.0
    %772 = vmatmul.mubr.f32.gmra.mxu0 %v705
    %v773 = vpop.f32.mrf.mxu0
    %v774 = vadd.f32 0.0, %v773
    %v775 = vpop.f32.mrf.mxu0
    %776 = vdwg.mxu0
    %v777 = vadd.f32 %v701, %v774
    %v778 = vmul.f32 %v777, 0.5
    %v779 = vtanh.pop %v778
    %v780 = vmul.f32 %v779, 0.5
    %v781 = vadd.f32 %v780, 0.5
    %v782 = vtanh.pop %v777
    %v783 = vmul.f32 %v781, %v517
    %785 = vrot.lane.b32.xlu0 %v782, 64
    %v786 = vpop.permute.xlu0 %785
    %v788 = vmul.f32 %v781, %v786
    %790 = vrot.lane.b32.xlu0 %v788, 32
    %v791 = vpop.permute.xlu0 %790
    %v793 = vadd.f32 %v783, %v791
    %v794 = vtanh.pop %v793
    %796 = vrot.lane.b32.xlu0 %v794, 64
    %v797 = vpop.permute.xlu0 %796
    %v799 = vmul.f32 %v781, %v797
    %v800 = vmul.f32 %v799, 0.5
    %v801 = vtanh.pop %v800
    %v802 = vmul.f32 %v801, 0.5
    %v803 = vadd.f32 %v802, 0.5
    %805 = vrot.lane.b32.xlu0 %v803, 32
    %v806 = vpop.permute.xlu0 %805
    %v807 = vsel %vm153, %v806, 0
    %809 = vmatprep.subr.mxu0 0.0
    %810 = vmatpush1.msra.mxu0 0.0
    %811 = vmatprep.subr.mxu0 0.0
    %812 = vmatpush1.msra.mxu0 0.0
    %813 = vmatprep.subr.mxu0 0.0
    %814 = vmatpush1.msra.mxu0 0.0
    %815 = vmatprep.subr.mxu0 0.0
    %816 = vmatpush1.msra.mxu0 0.0
    %817 = vmatprep.subr.mxu0 0.0
    %818 = vmatpush1.msra.mxu0 0.0
    %819 = vmatprep.subr.mxu0 0.0
    %820 = vmatpush1.msra.mxu0 0.0
    %821 = vmatprep.subr.mxu0 0.0
    %822 = vmatpush1.msra.mxu0 0.0
    %823 = vmatprep.subr.mxu0 0.0
    %824 = vmatpush1.msra.mxu0 0.0
    %825 = vmatprep.subr.mxu0 0.0
    %826 = vmatpush1.msra.mxu0 0.0
    %827 = vmatprep.subr.mxu0 0.0
    %828 = vmatpush1.msra.mxu0 0.0
    %829 = vmatprep.subr.mxu0 0.0
    %830 = vmatpush1.msra.mxu0 0.0
    %831 = vmatprep.subr.mxu0 0.0
    %832 = vmatpush1.msra.mxu0 0.0
    %833 = vmatprep.subr.mxu0 0.0
    %834 = vmatpush1.msra.mxu0 %v150
    %835 = vmatprep.subr.mxu0 0.0
    %836 = vmatpush1.msra.mxu0 %v149
    %837 = vmatprep.subr.mxu0 0.0
    %838 = vmatpush1.msra.mxu0 %v148
    %839 = vmatprep.subr.mxu0 0.0
    %840 = vmatpush1.msra.mxu0 %v147
    %841 = vmatprep.subr.mxu0 0.0
    %842 = vmatpush2.msra.mxu0 0.0
    %843 = vmatprep.subr.mxu0 0.0
    %844 = vmatpush2.msra.mxu0 0.0
    %845 = vmatprep.subr.mxu0 0.0
    %846 = vmatpush2.msra.mxu0 0.0
    %847 = vmatprep.subr.mxu0 0.0
    %848 = vmatpush2.msra.mxu0 0.0
    %849 = vmatprep.subr.mxu0 0.0
    %850 = vmatpush2.msra.mxu0 0.0
    %851 = vmatprep.subr.mxu0 0.0
    %852 = vmatpush2.msra.mxu0 0.0
    %853 = vmatprep.subr.mxu0 0.0
    %854 = vmatpush2.msra.mxu0 0.0
    %855 = vmatprep.subr.mxu0 0.0
    %856 = vmatpush2.msra.mxu0 0.0
    %857 = vmatprep.subr.mxu0 0.0
    %858 = vmatpush2.msra.mxu0 0.0
    %859 = vmatprep.subr.mxu0 0.0
    %860 = vmatpush2.msra.mxu0 0.0
    %861 = vmatprep.subr.mxu0 0.0
    %862 = vmatpush2.msra.mxu0 0.0
    %863 = vmatprep.subr.mxu0 0.0
    %864 = vmatpush2.msra.mxu0 0.0
    %865 = vmatprep.subr.mxu0 0.0
    %866 = vmatpush2.msra.mxu0 0.0
    %867 = vmatprep.subr.mxu0 0.0
    %868 = vmatpush2.msra.mxu0 0.0
    %869 = vmatprep.subr.mxu0 0.0
    %870 = vmatpush2.msra.mxu0 0.0
    %871 = vmatprep.subr.mxu0 0.0
    %872 = vmatpush2.msra.mxu0 0.0
    %873 = vmatprep.mubr.f32.mxu0 0.0
    %874 = vmatmul.mubr.f32.gmra.mxu0 %v807
    %v875 = vpop.f32.mrf.mxu0
    %v876 = vadd.f32 %v151, %v875
    %v877 = vpop.f32.mrf.mxu0
    %878 = vdwg.mxu0
    %880 = vrot.lane.b32.xlu0 %v700, 104
    %v881 = vpop.permute.xlu0 %880
    %v882 = vsel %vm329, %v881, 0
    %884 = vmatprep.subr.mxu0 0.0
    %885 = vmatpush1.msra.mxu0 0.0
    %886 = vmatprep.subr.mxu0 0.0
    %887 = vmatpush1.msra.mxu0 0.0
    %888 = vmatprep.subr.mxu0 0.0
    %889 = vmatpush1.msra.mxu0 0.0
    %890 = vmatprep.subr.mxu0 0.0
    %891 = vmatpush1.msra.mxu0 0.0
    %892 = vmatprep.subr.mxu0 0.0
    %893 = vmatpush1.msra.mxu0 0.0
    %894 = vmatprep.subr.mxu0 0.0
    %895 = vmatpush1.msra.mxu0 0.0
    %896 = vmatprep.subr.mxu0 0.0
    %897 = vmatpush1.msra.mxu0 0.0
    %898 = vmatprep.subr.mxu0 0.0
    %899 = vmatpush1.msra.mxu0 0.0
    %900 = vmatprep.subr.mxu0 0.0
    %901 = vmatpush1.msra.mxu0 0.0
    %902 = vmatprep.subr.mxu0 0.0
    %903 = vmatpush1.msra.mxu0 0.0
    %904 = vmatprep.subr.mxu0 0.0
    %905 = vmatpush1.msra.mxu0 0.0
    %906 = vmatprep.subr.mxu0 0.0
    %907 = vmatpush1.msra.mxu0 0.0
    %908 = vmatprep.subr.mxu0 0.0
    %909 = vmatpush1.msra.mxu0 0.0
    %910 = vmatprep.subr.mxu0 0.0
    %911 = vmatpush1.msra.mxu0 0.0
    %912 = vmatprep.subr.mxu0 0.0
    %913 = vmatpush1.msra.mxu0 0.0
    %914 = vmatprep.subr.mxu0 0.0
    %915 = vmatpush1.msra.mxu0 %v146
    %916 = vmatprep.subr.mxu0 0.0
    %917 = vmatpush2.msra.mxu0 0.0
    %918 = vmatprep.subr.mxu0 0.0
    %919 = vmatpush2.msra.mxu0 0.0
    %920 = vmatprep.subr.mxu0 0.0
    %921 = vmatpush2.msra.mxu0 0.0
    %922 = vmatprep.subr.mxu0 0.0
    %923 = vmatpush2.msra.mxu0 0.0
    %924 = vmatprep.subr.mxu0 0.0
    %925 = vmatpush2.msra.mxu0 0.0
    %926 = vmatprep.subr.mxu0 0.0
    %927 = vmatpush2.msra.mxu0 0.0
    %928 = vmatprep.subr.mxu0 0.0
    %929 = vmatpush2.msra.mxu0 0.0
    %930 = vmatprep.subr.mxu0 0.0
    %931 = vmatpush2.msra.mxu0 0.0
    %932 = vmatprep.subr.mxu0 0.0
    %933 = vmatpush2.msra.mxu0 0.0
    %934 = vmatprep.subr.mxu0 0.0
    %935 = vmatpush2.msra.mxu0 0.0
    %936 = vmatprep.subr.mxu0 0.0
    %937 = vmatpush2.msra.mxu0 0.0
    %938 = vmatprep.subr.mxu0 0.0
    %939 = vmatpush2.msra.mxu0 0.0
    %940 = vmatprep.subr.mxu0 0.0
    %941 = vmatpush2.msra.mxu0 0.0
    %942 = vmatprep.subr.mxu0 0.0
    %943 = vmatpush2.msra.mxu0 0.0
    %944 = vmatprep.subr.mxu0 0.0
    %945 = vmatpush2.msra.mxu0 0.0
    %946 = vmatprep.subr.mxu0 0.0
    %947 = vmatpush2.msra.mxu0 0.0
    %948 = vmatprep.mubr.f32.mxu0 0.0
    %949 = vmatmul.mubr.f32.gmra.mxu0 %v882
    %v950 = vpop.f32.mrf.mxu0
    %v951 = vadd.f32 0.0, %v950
    %v952 = vpop.f32.mrf.mxu0
    %953 = vdwg.mxu0
    %v954 = vadd.f32 %v876, %v951
    %v955 = vmul.f32 %v954, 0.5
    %v956 = vtanh.pop %v955
    %v957 = vmul.f32 %v956, 0.5
    %v958 = vadd.f32 %v957, 0.5
    %v959 = vtanh.pop %v954
    %v960 = vmul.f32 %v958, %v694
    %962 = vrot.lane.b32.xlu0 %v959, 112
    %v963 = vpop.permute.xlu0 %962
    %v965 = vmul.f32 %v958, %v963
    %967 = vrot.lane.b32.xlu0 %v965, 8
    %v968 = vpop.permute.xlu0 %967
    %v970 = vadd.f32 %v960, %v968
    %v971 = vtanh.pop %v970
    %973 = vrot.lane.b32.xlu0 %v971, 16
    %v974 = vpop.permute.xlu0 %973
    %v976 = vmul.f32 %v958, %v974
    %v977 = vld [vmem:[#allocation2 + $0x3] sm:$0x1]
    %979 = vrot.lane.b32.xlu0 %v799, 32
    %v980 = vpop.permute.xlu0 %979
    %v981 = vsel %vm153, %v980, 0
    %983 = vmatprep.subr.mxu0 0.0
    %984 = vmatpush1.msra.mxu0 0.0
    %985 = vmatprep.subr.mxu0 0.0
    %986 = vmatpush1.msra.mxu0 0.0
    %987 = vmatprep.subr.mxu0 0.0
    %988 = vmatpush1.msra.mxu0 0.0
    %989 = vmatprep.subr.mxu0 0.0
    %990 = vmatpush1.msra.mxu0 0.0
    %991 = vmatprep.subr.mxu0 0.0
    %992 = vmatpush1.msra.mxu0 0.0
    %993 = vmatprep.subr.mxu0 0.0
    %994 = vmatpush1.msra.mxu0 0.0
    %995 = vmatprep.subr.mxu0 0.0
    %996 = vmatpush1.msra.mxu0 0.0
    %997 = vmatprep.subr.mxu0 0.0
    %998 = vmatpush1.msra.mxu0 0.0
    %999 = vmatprep.subr.mxu0 0.0
    %1000 = vmatpush1.msra.mxu0 0.0
    %1001 = vmatprep.subr.mxu0 0.0
    %1002 = vmatpush1.msra.mxu0 0.0
    %1003 = vmatprep.subr.mxu0 0.0
    %1004 = vmatpush1.msra.mxu0 0.0
    %1005 = vmatprep.subr.mxu0 0.0
    %1006 = vmatpush1.msra.mxu0 0.0
    %1007 = vmatprep.subr.mxu0 0.0
    %1008 = vmatpush1.msra.mxu0 %v145
    %1009 = vmatprep.subr.mxu0 0.0
    %1010 = vmatpush1.msra.mxu0 %v144
    %1011 = vmatprep.subr.mxu0 0.0
    %1012 = vmatpush1.msra.mxu0 %v143
    %1013 = vmatprep.subr.mxu0 0.0
    %1014 = vmatpush1.msra.mxu0 %v142
    %1015 = vmatprep.subr.mxu0 0.0
    %1016 = vmatpush2.msra.mxu0 0.0
    %1017 = vmatprep.subr.mxu0 0.0
    %1018 = vmatpush2.msra.mxu0 0.0
    %1019 = vmatprep.subr.mxu0 0.0
    %1020 = vmatpush2.msra.mxu0 0.0
    %1021 = vmatprep.subr.mxu0 0.0
    %1022 = vmatpush2.msra.mxu0 0.0
    %1023 = vmatprep.subr.mxu0 0.0
    %1024 = vmatpush2.msra.mxu0 0.0
    %1025 = vmatprep.subr.mxu0 0.0
    %1026 = vmatpush2.msra.mxu0 0.0
    %1027 = vmatprep.subr.mxu0 0.0
    %1028 = vmatpush2.msra.mxu0 0.0
    %1029 = vmatprep.subr.mxu0 0.0
    %1030 = vmatpush2.msra.mxu0 0.0
    %1031 = vmatprep.subr.mxu0 0.0
    %1032 = vmatpush2.msra.mxu0 0.0
    %1033 = vmatprep.subr.mxu0 0.0
    %1034 = vmatpush2.msra.mxu0 0.0
    %1035 = vmatprep.subr.mxu0 0.0
    %1036 = vmatpush2.msra.mxu0 0.0
    %1037 = vmatprep.subr.mxu0 0.0
    %1038 = vmatpush2.msra.mxu0 0.0
    %1039 = vmatprep.subr.mxu0 0.0
    %1040 = vmatpush2.msra.mxu0 0.0
    %1041 = vmatprep.subr.mxu0 0.0
    %1042 = vmatpush2.msra.mxu0 0.0
    %1043 = vmatprep.subr.mxu0 0.0
    %1044 = vmatpush2.msra.mxu0 0.0
    %1045 = vmatprep.subr.mxu0 0.0
    %1046 = vmatpush2.msra.mxu0 0.0
    %1047 = vmatprep.mubr.f32.mxu0 0.0
    %1048 = vmatmul.mubr.f32.gmra.mxu0 %v981
    %v1049 = vpop.f32.mrf.mxu0
    %v1050 = vadd.f32 0.0, %v1049
    %v1051 = vpop.f32.mrf.mxu0
    %1052 = vdwg.mxu0
    %v1053 = vadd.f32 %v977, %v1050
    %v1054 = vmul.f32 %v1053, 0.5
    %v1055 = vtanh.pop %v1054
    %v1056 = vmul.f32 %v1055, 0.5
    %v1057 = vadd.f32 %v1056, 0.5
    %v1058 = vtanh.pop %v1053
    %v1059 = vmul.f32 %v1057, %v793
    %1061 = vrot.lane.b32.xlu0 %v1058, 64
    %v1062 = vpop.permute.xlu0 %1061
    %v1064 = vmul.f32 %v1057, %v1062
    %1066 = vrot.lane.b32.xlu0 %v1064, 32
    %v1067 = vpop.permute.xlu0 %1066
    %v1069 = vadd.f32 %v1059, %v1067
    %v1070 = vtanh.pop %v1069
    %1072 = vrot.lane.b32.xlu0 %v1070, 64
    %v1073 = vpop.permute.xlu0 %1072
    %v1075 = vmul.f32 %v1057, %v1073
    %v1076 = vmul.f32 %v1075, 0.5
    %v1077 = vtanh.pop %v1076
    %v1078 = vmul.f32 %v1077, 0.5
    %v1079 = vadd.f32 %v1078, 0.5
    %1081 = vrot.lane.b32.xlu0 %v1079, 32
    %v1082 = vpop.permute.xlu0 %1081
    %v1083 = vsel %vm153, %v1082, 0
    %1085 = vmatprep.subr.mxu0 0.0
    %1086 = vmatpush1.msra.mxu0 0.0
    %1087 = vmatprep.subr.mxu0 0.0
    %1088 = vmatpush1.msra.mxu0 0.0
    %1089 = vmatprep.subr.mxu0 0.0
    %1090 = vmatpush1.msra.mxu0 0.0
    %1091 = vmatprep.subr.mxu0 0.0
    %1092 = vmatpush1.msra.mxu0 0.0
    %1093 = vmatprep.subr.mxu0 0.0
    %1094 = vmatpush1.msra.mxu0 0.0
    %1095 = vmatprep.subr.mxu0 0.0
    %1096 = vmatpush1.msra.mxu0 0.0
    %1097 = vmatprep.subr.mxu0 0.0
    %1098 = vmatpush1.msra.mxu0 0.0
    %1099 = vmatprep.subr.mxu0 0.0
    %1100 = vmatpush1.msra.mxu0 0.0
    %1101 = vmatprep.subr.mxu0 0.0
    %1102 = vmatpush1.msra.mxu0 0.0
    %1103 = vmatprep.subr.mxu0 0.0
    %1104 = vmatpush1.msra.mxu0 0.0
    %1105 = vmatprep.subr.mxu0 0.0
    %1106 = vmatpush1.msra.mxu0 0.0
    %1107 = vmatprep.subr.mxu0 0.0
    %1108 = vmatpush1.msra.mxu0 0.0
    %1109 = vmatprep.subr.mxu0 0.0
    %1110 = vmatpush1.msra.mxu0 %v150
    %1111 = vmatprep.subr.mxu0 0.0
    %1112 = vmatpush1.msra.mxu0 %v149
    %1113 = vmatprep.subr.mxu0 0.0
    %1114 = vmatpush1.msra.mxu0 %v148
    %1115 = vmatprep.subr.mxu0 0.0
    %1116 = vmatpush1.msra.mxu0 %v147
    %1117 = vmatprep.subr.mxu0 0.0
    %1118 = vmatpush2.msra.mxu0 0.0
    %1119 = vmatprep.subr.mxu0 0.0
    %1120 = vmatpush2.msra.mxu0 0.0
    %1121 = vmatprep.subr.mxu0 0.0
    %1122 = vmatpush2.msra.mxu0 0.0
    %1123 = vmatprep.subr.mxu0 0.0
    %1124 = vmatpush2.msra.mxu0 0.0
    %1125 = vmatprep.subr.mxu0 0.0
    %1126 = vmatpush2.msra.mxu0 0.0
    %1127 = vmatprep.subr.mxu0 0.0
    %1128 = vmatpush2.msra.mxu0 0.0
    %1129 = vmatprep.subr.mxu0 0.0
    %1130 = vmatpush2.msra.mxu0 0.0
    %1131 = vmatprep.subr.mxu0 0.0
    %1132 = vmatpush2.msra.mxu0 0.0
    %1133 = vmatprep.subr.mxu0 0.0
    %1134 = vmatpush2.msra.mxu0 0.0
    %1135 = vmatprep.subr.mxu0 0.0
    %1136 = vmatpush2.msra.mxu0 0.0
    %1137 = vmatprep.subr.mxu0 0.0
    %1138 = vmatpush2.msra.mxu0 0.0
    %1139 = vmatprep.subr.mxu0 0.0
    %1140 = vmatpush2.msra.mxu0 0.0
    %1141 = vmatprep.subr.mxu0 0.0
    %1142 = vmatpush2.msra.mxu0 0.0
    %1143 = vmatprep.subr.mxu0 0.0
    %1144 = vmatpush2.msra.mxu0 0.0
    %1145 = vmatprep.subr.mxu0 0.0
    %1146 = vmatpush2.msra.mxu0 0.0
    %1147 = vmatprep.subr.mxu0 0.0
    %1148 = vmatpush2.msra.mxu0 0.0
    %1149 = vmatprep.mubr.f32.mxu0 0.0
    %1150 = vmatmul.mubr.f32.gmra.mxu0 %v1083
    %v1151 = vpop.f32.mrf.mxu0
    %v1152 = vadd.f32 %v151, %v1151
    %v1153 = vpop.f32.mrf.mxu0
    %1154 = vdwg.mxu0
    %1156 = vrot.lane.b32.xlu0 %v976, 104
    %v1157 = vpop.permute.xlu0 %1156
    %v1158 = vsel %vm329, %v1157, 0
    %1160 = vmatprep.subr.mxu0 0.0
    %1161 = vmatpush1.msra.mxu0 0.0
    %1162 = vmatprep.subr.mxu0 0.0
    %1163 = vmatpush1.msra.mxu0 0.0
    %1164 = vmatprep.subr.mxu0 0.0
    %1165 = vmatpush1.msra.mxu0 0.0
    %1166 = vmatprep.subr.mxu0 0.0
    %1167 = vmatpush1.msra.mxu0 0.0
    %1168 = vmatprep.subr.mxu0 0.0
    %1169 = vmatpush1.msra.mxu0 0.0
    %1170 = vmatprep.subr.mxu0 0.0
    %1171 = vmatpush1.msra.mxu0 0.0
    %1172 = vmatprep.subr.mxu0 0.0
    %1173 = vmatpush1.msra.mxu0 0.0
    %1174 = vmatprep.subr.mxu0 0.0
    %1175 = vmatpush1.msra.mxu0 0.0
    %1176 = vmatprep.subr.mxu0 0.0
    %1177 = vmatpush1.msra.mxu0 0.0
    %1178 = vmatprep.subr.mxu0 0.0
    %1179 = vmatpush1.msra.mxu0 0.0
    %1180 = vmatprep.subr.mxu0 0.0
    %1181 = vmatpush1.msra.mxu0 0.0
    %1182 = vmatprep.subr.mxu0 0.0
    %1183 = vmatpush1.msra.mxu0 0.0
    %1184 = vmatprep.subr.mxu0 0.0
    %1185 = vmatpush1.msra.mxu0 0.0
    %1186 = vmatprep.subr.mxu0 0.0
    %1187 = vmatpush1.msra.mxu0 0.0
    %1188 = vmatprep.subr.mxu0 0.0
    %1189 = vmatpush1.msra.mxu0 0.0
    %1190 = vmatprep.subr.mxu0 0.0
    %1191 = vmatpush1.msra.mxu0 %v146
    %1192 = vmatprep.subr.mxu0 0.0
    %1193 = vmatpush2.msra.mxu0 0.0
    %1194 = vmatprep.subr.mxu0 0.0
    %1195 = vmatpush2.msra.mxu0 0.0
    %1196 = vmatprep.subr.mxu0 0.0
    %1197 = vmatpush2.msra.mxu0 0.0
    %1198 = vmatprep.subr.mxu0 0.0
    %1199 = vmatpush2.msra.mxu0 0.0
    %1200 = vmatprep.subr.mxu0 0.0
    %1201 = vmatpush2.msra.mxu0 0.0
    %1202 = vmatprep.subr.mxu0 0.0
    %1203 = vmatpush2.msra.mxu0 0.0
    %1204 = vmatprep.subr.mxu0 0.0
    %1205 = vmatpush2.msra.mxu0 0.0
    %1206 = vmatprep.subr.mxu0 0.0
    %1207 = vmatpush2.msra.mxu0 0.0
    %1208 = vmatprep.subr.mxu0 0.0
    %1209 = vmatpush2.msra.mxu0 0.0
    %1210 = vmatprep.subr.mxu0 0.0
    %1211 = vmatpush2.msra.mxu0 0.0
    %1212 = vmatprep.subr.mxu0 0.0
    %1213 = vmatpush2.msra.mxu0 0.0
    %1214 = vmatprep.subr.mxu0 0.0
    %1215 = vmatpush2.msra.mxu0 0.0
    %1216 = vmatprep.subr.mxu0 0.0
    %1217 = vmatpush2.msra.mxu0 0.0
    %1218 = vmatprep.subr.mxu0 0.0
    %1219 = vmatpush2.msra.mxu0 0.0
    %1220 = vmatprep.subr.mxu0 0.0
    %1221 = vmatpush2.msra.mxu0 0.0
    %1222 = vmatprep.subr.mxu0 0.0
    %1223 = vmatpush2.msra.mxu0 0.0
    %1224 = vmatprep.mubr.f32.mxu0 0.0
    %1225 = vmatmul.mubr.f32.gmra.mxu0 %v1158
    %v1226 = vpop.f32.mrf.mxu0
    %v1227 = vadd.f32 0.0, %v1226
    %v1228 = vpop.f32.mrf.mxu0
    %1229 = vdwg.mxu0
    %v1230 = vadd.f32 %v1152, %v1227
    %v1231 = vmul.f32 %v1230, 0.5
    %v1232 = vtanh.pop %v1231
    %v1233 = vmul.f32 %v1232, 0.5
    %v1234 = vadd.f32 %v1233, 0.5
    %v1235 = vtanh.pop %v1230
    %v1236 = vmul.f32 %v1234, %v970
    %1238 = vrot.lane.b32.xlu0 %v1235, 112
    %v1239 = vpop.permute.xlu0 %1238
    %v1241 = vmul.f32 %v1234, %v1239
    %1243 = vrot.lane.b32.xlu0 %v1241, 8
    %v1244 = vpop.permute.xlu0 %1243
    %v1246 = vadd.f32 %v1236, %v1244
    %v1247 = vtanh.pop %v1246
    %1249 = vrot.lane.b32.xlu0 %v1247, 16
    %v1250 = vpop.permute.xlu0 %1249
    %v1252 = vmul.f32 %v1234, %v1250
    %v1253 = vld [vmem:[#allocation2 + $0x4] sm:$0x1]
    %1255 = vrot.lane.b32.xlu0 %v1075, 32
    %v1256 = vpop.permute.xlu0 %1255
    %v1257 = vsel %vm153, %v1256, 0
    %1259 = vmatprep.subr.mxu0 0.0
    %1260 = vmatpush1.msra.mxu0 0.0
    %1261 = vmatprep.subr.mxu0 0.0
    %1262 = vmatpush1.msra.mxu0 0.0
    %1263 = vmatprep.subr.mxu0 0.0
    %1264 = vmatpush1.msra.mxu0 0.0
    %1265 = vmatprep.subr.mxu0 0.0
    %1266 = vmatpush1.msra.mxu0 0.0
    %1267 = vmatprep.subr.mxu0 0.0
    %1268 = vmatpush1.msra.mxu0 0.0
    %1269 = vmatprep.subr.mxu0 0.0
    %1270 = vmatpush1.msra.mxu0 0.0
    %1271 = vmatprep.subr.mxu0 0.0
    %1272 = vmatpush1.msra.mxu0 0.0
    %1273 = vmatprep.subr.mxu0 0.0
    %1274 = vmatpush1.msra.mxu0 0.0
    %1275 = vmatprep.subr.mxu0 0.0
    %1276 = vmatpush1.msra.mxu0 0.0
    %1277 = vmatprep.subr.mxu0 0.0
    %1278 = vmatpush1.msra.mxu0 0.0
    %1279 = vmatprep.subr.mxu0 0.0
    %1280 = vmatpush1.msra.mxu0 0.0
    %1281 = vmatprep.subr.mxu0 0.0
    %1282 = vmatpush1.msra.mxu0 0.0
    %1283 = vmatprep.subr.mxu0 0.0
    %1284 = vmatpush1.msra.mxu0 %v145
    %1285 = vmatprep.subr.mxu0 0.0
    %1286 = vmatpush1.msra.mxu0 %v144
    %1287 = vmatprep.subr.mxu0 0.0
    %1288 = vmatpush1.msra.mxu0 %v143
    %1289 = vmatprep.subr.mxu0 0.0
    %1290 = vmatpush1.msra.mxu0 %v142
    %1291 = vmatprep.subr.mxu0 0.0
    %1292 = vmatpush2.msra.mxu0 0.0
    %1293 = vmatprep.subr.mxu0 0.0
    %1294 = vmatpush2.msra.mxu0 0.0
    %1295 = vmatprep.subr.mxu0 0.0
    %1296 = vmatpush2.msra.mxu0 0.0
    %1297 = vmatprep.subr.mxu0 0.0
    %1298 = vmatpush2.msra.mxu0 0.0
    %1299 = vmatprep.subr.mxu0 0.0
    %1300 = vmatpush2.msra.mxu0 0.0
    %1301 = vmatprep.subr.mxu0 0.0
    %1302 = vmatpush2.msra.mxu0 0.0
    %1303 = vmatprep.subr.mxu0 0.0
    %1304 = vmatpush2.msra.mxu0 0.0
    %1305 = vmatprep.subr.mxu0 0.0
    %1306 = vmatpush2.msra.mxu0 0.0
    %1307 = vmatprep.subr.mxu0 0.0
    %1308 = vmatpush2.msra.mxu0 0.0
    %1309 = vmatprep.subr.mxu0 0.0
    %1310 = vmatpush2.msra.mxu0 0.0
    %1311 = vmatprep.subr.mxu0 0.0
    %1312 = vmatpush2.msra.mxu0 0.0
    %1313 = vmatprep.subr.mxu0 0.0
    %1314 = vmatpush2.msra.mxu0 0.0
    %1315 = vmatprep.subr.mxu0 0.0
    %1316 = vmatpush2.msra.mxu0 0.0
    %1317 = vmatprep.subr.mxu0 0.0
    %1318 = vmatpush2.msra.mxu0 0.0
    %1319 = vmatprep.subr.mxu0 0.0
    %1320 = vmatpush2.msra.mxu0 0.0
    %1321 = vmatprep.subr.mxu0 0.0
    %1322 = vmatpush2.msra.mxu0 0.0
    %1323 = vmatprep.mubr.f32.mxu0 0.0
    %1324 = vmatmul.mubr.f32.gmra.mxu0 %v1257
    %v1325 = vpop.f32.mrf.mxu0
    %v1326 = vadd.f32 0.0, %v1325
    %v1327 = vpop.f32.mrf.mxu0
    %1328 = vdwg.mxu0
    %v1329 = vadd.f32 %v1253, %v1326
    %v1330 = vmul.f32 %v1329, 0.5
    %v1331 = vtanh.pop %v1330
    %v1332 = vmul.f32 %v1331, 0.5
    %v1333 = vadd.f32 %v1332, 0.5
    %v1334 = vtanh.pop %v1329
    %v1335 = vmul.f32 %v1333, %v1069
    %1337 = vrot.lane.b32.xlu0 %v1334, 64
    %v1338 = vpop.permute.xlu0 %1337
    %v1340 = vmul.f32 %v1333, %v1338
    %1342 = vrot.lane.b32.xlu0 %v1340, 32
    %v1343 = vpop.permute.xlu0 %1342
    %v1345 = vadd.f32 %v1335, %v1343
    %v1346 = vtanh.pop %v1345
    %1348 = vrot.lane.b32.xlu0 %v1346, 64
    %v1349 = vpop.permute.xlu0 %1348
    %v1351 = vmul.f32 %v1333, %v1349
    %v1352 = vmul.f32 %v1351, 0.5
    %v1353 = vtanh.pop %v1352
    %v1354 = vmul.f32 %v1353, 0.5
    %v1355 = vadd.f32 %v1354, 0.5
    %1357 = vrot.lane.b32.xlu0 %v1355, 32
    %v1358 = vpop.permute.xlu0 %1357
    %v1359 = vsel %vm153, %v1358, 0
    %1361 = vmatprep.subr.mxu0 0.0
    %1362 = vmatpush1.msra.mxu0 0.0
    %1363 = vmatprep.subr.mxu0 0.0
    %1364 = vmatpush1.msra.mxu0 0.0
    %1365 = vmatprep.subr.mxu0 0.0
    %1366 = vmatpush1.msra.mxu0 0.0
    %1367 = vmatprep.subr.mxu0 0.0
    %1368 = vmatpush1.msra.mxu0 0.0
    %1369 = vmatprep.subr.mxu0 0.0
    %1370 = vmatpush1.msra.mxu0 0.0
    %1371 = vmatprep.subr.mxu0 0.0
    %1372 = vmatpush1.msra.mxu0 0.0
    %1373 = vmatprep.subr.mxu0 0.0
    %1374 = vmatpush1.msra.mxu0 0.0
    %1375 = vmatprep.subr.mxu0 0.0
    %1376 = vmatpush1.msra.mxu0 0.0
    %1377 = vmatprep.subr.mxu0 0.0
    %1378 = vmatpush1.msra.mxu0 0.0
    %1379 = vmatprep.subr.mxu0 0.0
    %1380 = vmatpush1.msra.mxu0 0.0
    %1381 = vmatprep.subr.mxu0 0.0
    %1382 = vmatpush1.msra.mxu0 0.0
    %1383 = vmatprep.subr.mxu0 0.0
    %1384 = vmatpush1.msra.mxu0 0.0
    %1385 = vmatprep.subr.mxu0 0.0
    %1386 = vmatpush1.msra.mxu0 %v150
    %1387 = vmatprep.subr.mxu0 0.0
    %1388 = vmatpush1.msra.mxu0 %v149
    %1389 = vmatprep.subr.mxu0 0.0
    %1390 = vmatpush1.msra.mxu0 %v148
    %1391 = vmatprep.subr.mxu0 0.0
    %1392 = vmatpush1.msra.mxu0 %v147
    %1393 = vmatprep.subr.mxu0 0.0
    %1394 = vmatpush2.msra.mxu0 0.0
    %1395 = vmatprep.subr.mxu0 0.0
    %1396 = vmatpush2.msra.mxu0 0.0
    %1397 = vmatprep.subr.mxu0 0.0
    %1398 = vmatpush2.msra.mxu0 0.0
    %1399 = vmatprep.subr.mxu0 0.0
    %1400 = vmatpush2.msra.mxu0 0.0
    %1401 = vmatprep.subr.mxu0 0.0
    %1402 = vmatpush2.msra.mxu0 0.0
    %1403 = vmatprep.subr.mxu0 0.0
    %1404 = vmatpush2.msra.mxu0 0.0
    %1405 = vmatprep.subr.mxu0 0.0
    %1406 = vmatpush2.msra.mxu0 0.0
    %1407 = vmatprep.subr.mxu0 0.0
    %1408 = vmatpush2.msra.mxu0 0.0
    %1409 = vmatprep.subr.mxu0 0.0
    %1410 = vmatpush2.msra.mxu0 0.0
    %1411 = vmatprep.subr.mxu0 0.0
    %1412 = vmatpush2.msra.mxu0 0.0
    %1413 = vmatprep.subr.mxu0 0.0
    %1414 = vmatpush2.msra.mxu0 0.0
    %1415 = vmatprep.subr.mxu0 0.0
    %1416 = vmatpush2.msra.mxu0 0.0
    %1417 = vmatprep.subr.mxu0 0.0
    %1418 = vmatpush2.msra.mxu0 0.0
    %1419 = vmatprep.subr.mxu0 0.0
    %1420 = vmatpush2.msra.mxu0 0.0
    %1421 = vmatprep.subr.mxu0 0.0
    %1422 = vmatpush2.msra.mxu0 0.0
    %1423 = vmatprep.subr.mxu0 0.0
    %1424 = vmatpush2.msra.mxu0 0.0
    %1425 = vmatprep.mubr.f32.mxu0 0.0
    %1426 = vmatmul.mubr.f32.gmra.mxu0 %v1359
    %v1427 = vpop.f32.mrf.mxu0
    %v1428 = vadd.f32 %v151, %v1427
    %v1429 = vpop.f32.mrf.mxu0
    %1430 = vdwg.mxu0
    %1432 = vrot.lane.b32.xlu0 %v1252, 104
    %v1433 = vpop.permute.xlu0 %1432
    %v1434 = vsel %vm329, %v1433, 0
    %1436 = vmatprep.subr.mxu0 0.0
    %1437 = vmatpush1.msra.mxu0 0.0
    %1438 = vmatprep.subr.mxu0 0.0
    %1439 = vmatpush1.msra.mxu0 0.0
    %1440 = vmatprep.subr.mxu0 0.0
    %1441 = vmatpush1.msra.mxu0 0.0
    %1442 = vmatprep.subr.mxu0 0.0
    %1443 = vmatpush1.msra.mxu0 0.0
    %1444 = vmatprep.subr.mxu0 0.0
    %1445 = vmatpush1.msra.mxu0 0.0
    %1446 = vmatprep.subr.mxu0 0.0
    %1447 = vmatpush1.msra.mxu0 0.0
    %1448 = vmatprep.subr.mxu0 0.0
    %1449 = vmatpush1.msra.mxu0 0.0
    %1450 = vmatprep.subr.mxu0 0.0
    %1451 = vmatpush1.msra.mxu0 0.0
    %1452 = vmatprep.subr.mxu0 0.0
    %1453 = vmatpush1.msra.mxu0 0.0
    %1454 = vmatprep.subr.mxu0 0.0
    %1455 = vmatpush1.msra.mxu0 0.0
    %1456 = vmatprep.subr.mxu0 0.0
    %1457 = vmatpush1.msra.mxu0 0.0
    %1458 = vmatprep.subr.mxu0 0.0
    %1459 = vmatpush1.msra.mxu0 0.0
    %1460 = vmatprep.subr.mxu0 0.0
    %1461 = vmatpush1.msra.mxu0 0.0
    %1462 = vmatprep.subr.mxu0 0.0
    %1463 = vmatpush1.msra.mxu0 0.0
    %1464 = vmatprep.subr.mxu0 0.0
    %1465 = vmatpush1.msra.mxu0 0.0
    %1466 = vmatprep.subr.mxu0 0.0
    %1467 = vmatpush1.msra.mxu0 %v146
    %1468 = vmatprep.subr.mxu0 0.0
    %1469 = vmatpush2.msra.mxu0 0.0
    %1470 = vmatprep.subr.mxu0 0.0
    %1471 = vmatpush2.msra.mxu0 0.0
    %1472 = vmatprep.subr.mxu0 0.0
    %1473 = vmatpush2.msra.mxu0 0.0
    %1474 = vmatprep.subr.mxu0 0.0
    %1475 = vmatpush2.msra.mxu0 0.0
    %1476 = vmatprep.subr.mxu0 0.0
    %1477 = vmatpush2.msra.mxu0 0.0
    %1478 = vmatprep.subr.mxu0 0.0
    %1479 = vmatpush2.msra.mxu0 0.0
    %1480 = vmatprep.subr.mxu0 0.0
    %1481 = vmatpush2.msra.mxu0 0.0
    %1482 = vmatprep.subr.mxu0 0.0
    %1483 = vmatpush2.msra.mxu0 0.0
    %1484 = vmatprep.subr.mxu0 0.0
    %1485 = vmatpush2.msra.mxu0 0.0
    %1486 = vmatprep.subr.mxu0 0.0
    %1487 = vmatpush2.msra.mxu0 0.0
    %1488 = vmatprep.subr.mxu0 0.0
    %1489 = vmatpush2.msra.mxu0 0.0
    %1490 = vmatprep.subr.mxu0 0.0
    %1491 = vmatpush2.msra.mxu0 0.0
    %1492 = vmatprep.subr.mxu0 0.0
    %1493 = vmatpush2.msra.mxu0 0.0
    %1494 = vmatprep.subr.mxu0 0.0
    %1495 = vmatpush2.msra.mxu0 0.0
    %1496 = vmatprep.subr.mxu0 0.0
    %1497 = vmatpush2.msra.mxu0 0.0
    %1498 = vmatprep.subr.mxu0 0.0
    %1499 = vmatpush2.msra.mxu0 0.0
    %1500 = vmatprep.mubr.f32.mxu0 0.0
    %1501 = vmatmul.mubr.f32.gmra.mxu0 %v1434
    %v1502 = vpop.f32.mrf.mxu0
    %v1503 = vadd.f32 0.0, %v1502
    %v1504 = vpop.f32.mrf.mxu0
    %1505 = vdwg.mxu0
    %v1506 = vadd.f32 %v1428, %v1503
    %v1507 = vmul.f32 %v1506, 0.5
    %v1508 = vtanh.pop %v1507
    %v1509 = vmul.f32 %v1508, 0.5
    %v1510 = vadd.f32 %v1509, 0.5
    %v1511 = vtanh.pop %v1506
    %v1512 = vmul.f32 %v1510, %v1246
    %1514 = vrot.lane.b32.xlu0 %v1511, 112
    %v1515 = vpop.permute.xlu0 %1514
    %v1517 = vmul.f32 %v1510, %v1515
    %1519 = vrot.lane.b32.xlu0 %v1517, 8
    %v1520 = vpop.permute.xlu0 %1519
    %v1522 = vadd.f32 %v1512, %v1520
    %v1523 = vtanh.pop %v1522
    %1525 = vrot.lane.b32.xlu0 %v1523, 16
    %v1526 = vpop.permute.xlu0 %1525
    %v1528 = vmul.f32 %v1510, %v1526
    %v1529 = vld [vmem:[#allocation2 + $0x5] sm:$0x1]
    %1531 = vrot.lane.b32.xlu0 %v1351, 32
    %v1532 = vpop.permute.xlu0 %1531
    %v1533 = vsel %vm153, %v1532, 0
    %1535 = vmatprep.subr.mxu0 0.0
    %1536 = vmatpush1.msra.mxu0 0.0
    %1537 = vmatprep.subr.mxu0 0.0
    %1538 = vmatpush1.msra.mxu0 0.0
    %1539 = vmatprep.subr.mxu0 0.0
    %1540 = vmatpush1.msra.mxu0 0.0
    %1541 = vmatprep.subr.mxu0 0.0
    %1542 = vmatpush1.msra.mxu0 0.0
    %1543 = vmatprep.subr.mxu0 0.0
    %1544 = vmatpush1.msra.mxu0 0.0
    %1545 = vmatprep.subr.mxu0 0.0
    %1546 = vmatpush1.msra.mxu0 0.0
    %1547 = vmatprep.subr.mxu0 0.0
    %1548 = vmatpush1.msra.mxu0 0.0
    %1549 = vmatprep.subr.mxu0 0.0
    %1550 = vmatpush1.msra.mxu0 0.0
    %1551 = vmatprep.subr.mxu0 0.0
    %1552 = vmatpush1.msra.mxu0 0.0
    %1553 = vmatprep.subr.mxu0 0.0
    %1554 = vmatpush1.msra.mxu0 0.0
    %1555 = vmatprep.subr.mxu0 0.0
    %1556 = vmatpush1.msra.mxu0 0.0
    %1557 = vmatprep.subr.mxu0 0.0
    %1558 = vmatpush1.msra.mxu0 0.0
    %1559 = vmatprep.subr.mxu0 0.0
    %1560 = vmatpush1.msra.mxu0 %v145
    %1561 = vmatprep.subr.mxu0 0.0
    %1562 = vmatpush1.msra.mxu0 %v144
    %1563 = vmatprep.subr.mxu0 0.0
    %1564 = vmatpush1.msra.mxu0 %v143
    %1565 = vmatprep.subr.mxu0 0.0
    %1566 = vmatpush1.msra.mxu0 %v142
    %1567 = vmatprep.subr.mxu0 0.0
    %1568 = vmatpush2.msra.mxu0 0.0
    %1569 = vmatprep.subr.mxu0 0.0
    %1570 = vmatpush2.msra.mxu0 0.0
    %1571 = vmatprep.subr.mxu0 0.0
    %1572 = vmatpush2.msra.mxu0 0.0
    %1573 = vmatprep.subr.mxu0 0.0
    %1574 = vmatpush2.msra.mxu0 0.0
    %1575 = vmatprep.subr.mxu0 0.0
    %1576 = vmatpush2.msra.mxu0 0.0
    %1577 = vmatprep.subr.mxu0 0.0
    %1578 = vmatpush2.msra.mxu0 0.0
    %1579 = vmatprep.subr.mxu0 0.0
    %1580 = vmatpush2.msra.mxu0 0.0
    %1581 = vmatprep.subr.mxu0 0.0
    %1582 = vmatpush2.msra.mxu0 0.0
    %1583 = vmatprep.subr.mxu0 0.0
    %1584 = vmatpush2.msra.mxu0 0.0
    %1585 = vmatprep.subr.mxu0 0.0
    %1586 = vmatpush2.msra.mxu0 0.0
    %1587 = vmatprep.subr.mxu0 0.0
    %1588 = vmatpush2.msra.mxu0 0.0
    %1589 = vmatprep.subr.mxu0 0.0
    %1590 = vmatpush2.msra.mxu0 0.0
    %1591 = vmatprep.subr.mxu0 0.0
    %1592 = vmatpush2.msra.mxu0 0.0
    %1593 = vmatprep.subr.mxu0 0.0
    %1594 = vmatpush2.msra.mxu0 0.0
    %1595 = vmatprep.subr.mxu0 0.0
    %1596 = vmatpush2.msra.mxu0 0.0
    %1597 = vmatprep.subr.mxu0 0.0
    %1598 = vmatpush2.msra.mxu0 0.0
    %1599 = vmatprep.mubr.f32.mxu0 0.0
    %1600 = vmatmul.mubr.f32.gmra.mxu0 %v1533
    %v1601 = vpop.f32.mrf.mxu0
    %v1602 = vadd.f32 0.0, %v1601
    %v1603 = vpop.f32.mrf.mxu0
    %1604 = vdwg.mxu0
    %v1605 = vadd.f32 %v1529, %v1602
    %v1606 = vmul.f32 %v1605, 0.5
    %v1607 = vtanh.pop %v1606
    %v1608 = vmul.f32 %v1607, 0.5
    %v1609 = vadd.f32 %v1608, 0.5
    %v1610 = vtanh.pop %v1605
    %v1611 = vmul.f32 %v1609, %v1345
    %1613 = vrot.lane.b32.xlu0 %v1610, 64
    %v1614 = vpop.permute.xlu0 %1613
    %v1616 = vmul.f32 %v1609, %v1614
    %1618 = vrot.lane.b32.xlu0 %v1616, 32
    %v1619 = vpop.permute.xlu0 %1618
    %v1621 = vadd.f32 %v1611, %v1619
    %v1622 = vtanh.pop %v1621
    %1624 = vrot.lane.b32.xlu0 %v1622, 64
    %v1625 = vpop.permute.xlu0 %1624
    %v1627 = vmul.f32 %v1609, %v1625
    %v1628 = vmul.f32 %v1627, 0.5
    %v1629 = vtanh.pop %v1628
    %v1630 = vmul.f32 %v1629, 0.5
    %v1631 = vadd.f32 %v1630, 0.5
    %1633 = vrot.lane.b32.xlu0 %v1631, 32
    %v1634 = vpop.permute.xlu0 %1633
    %v1635 = vsel %vm153, %v1634, 0
    %1637 = vmatprep.subr.mxu0 0.0
    %1638 = vmatpush1.msra.mxu0 0.0
    %1639 = vmatprep.subr.mxu0 0.0
    %1640 = vmatpush1.msra.mxu0 0.0
    %1641 = vmatprep.subr.mxu0 0.0
    %1642 = vmatpush1.msra.mxu0 0.0
    %1643 = vmatprep.subr.mxu0 0.0
    %1644 = vmatpush1.msra.mxu0 0.0
    %1645 = vmatprep.subr.mxu0 0.0
    %1646 = vmatpush1.msra.mxu0 0.0
    %1647 = vmatprep.subr.mxu0 0.0
    %1648 = vmatpush1.msra.mxu0 0.0
    %1649 = vmatprep.subr.mxu0 0.0
    %1650 = vmatpush1.msra.mxu0 0.0
    %1651 = vmatprep.subr.mxu0 0.0
    %1652 = vmatpush1.msra.mxu0 0.0
    %1653 = vmatprep.subr.mxu0 0.0
    %1654 = vmatpush1.msra.mxu0 0.0
    %1655 = vmatprep.subr.mxu0 0.0
    %1656 = vmatpush1.msra.mxu0 0.0
    %1657 = vmatprep.subr.mxu0 0.0
    %1658 = vmatpush1.msra.mxu0 0.0
    %1659 = vmatprep.subr.mxu0 0.0
    %1660 = vmatpush1.msra.mxu0 0.0
    %1661 = vmatprep.subr.mxu0 0.0
    %1662 = vmatpush1.msra.mxu0 %v150
    %1663 = vmatprep.subr.mxu0 0.0
    %1664 = vmatpush1.msra.mxu0 %v149
    %1665 = vmatprep.subr.mxu0 0.0
    %1666 = vmatpush1.msra.mxu0 %v148
    %1667 = vmatprep.subr.mxu0 0.0
    %1668 = vmatpush1.msra.mxu0 %v147
    %1669 = vmatprep.subr.mxu0 0.0
    %1670 = vmatpush2.msra.mxu0 0.0
    %1671 = vmatprep.subr.mxu0 0.0
    %1672 = vmatpush2.msra.mxu0 0.0
    %1673 = vmatprep.subr.mxu0 0.0
    %1674 = vmatpush2.msra.mxu0 0.0
    %1675 = vmatprep.subr.mxu0 0.0
    %1676 = vmatpush2.msra.mxu0 0.0
    %1677 = vmatprep.subr.mxu0 0.0
    %1678 = vmatpush2.msra.mxu0 0.0
    %1679 = vmatprep.subr.mxu0 0.0
    %1680 = vmatpush2.msra.mxu0 0.0
    %1681 = vmatprep.subr.mxu0 0.0
    %1682 = vmatpush2.msra.mxu0 0.0
    %1683 = vmatprep.subr.mxu0 0.0
    %1684 = vmatpush2.msra.mxu0 0.0
    %1685 = vmatprep.subr.mxu0 0.0
    %1686 = vmatpush2.msra.mxu0 0.0
    %1687 = vmatprep.subr.mxu0 0.0
    %1688 = vmatpush2.msra.mxu0 0.0
    %1689 = vmatprep.subr.mxu0 0.0
    %1690 = vmatpush2.msra.mxu0 0.0
    %1691 = vmatprep.subr.mxu0 0.0
    %1692 = vmatpush2.msra.mxu0 0.0
    %1693 = vmatprep.subr.mxu0 0.0
    %1694 = vmatpush2.msra.mxu0 0.0
    %1695 = vmatprep.subr.mxu0 0.0
    %1696 = vmatpush2.msra.mxu0 0.0
    %1697 = vmatprep.subr.mxu0 0.0
    %1698 = vmatpush2.msra.mxu0 0.0
    %1699 = vmatprep.subr.mxu0 0.0
    %1700 = vmatpush2.msra.mxu0 0.0
    %1701 = vmatprep.mubr.f32.mxu0 0.0
    %1702 = vmatmul.mubr.f32.gmra.mxu0 %v1635
    %v1703 = vpop.f32.mrf.mxu0
    %v1704 = vadd.f32 %v151, %v1703
    %v1705 = vpop.f32.mrf.mxu0
    %1706 = vdwg.mxu0
    %1708 = vrot.lane.b32.xlu0 %v1528, 104
    %v1709 = vpop.permute.xlu0 %1708
    %v1710 = vsel %vm329, %v1709, 0
    %1712 = vmatprep.subr.mxu0 0.0
    %1713 = vmatpush1.msra.mxu0 0.0
    %1714 = vmatprep.subr.mxu0 0.0
    %1715 = vmatpush1.msra.mxu0 0.0
    %1716 = vmatprep.subr.mxu0 0.0
    %1717 = vmatpush1.msra.mxu0 0.0
    %1718 = vmatprep.subr.mxu0 0.0
    %1719 = vmatpush1.msra.mxu0 0.0
    %1720 = vmatprep.subr.mxu0 0.0
    %1721 = vmatpush1.msra.mxu0 0.0
    %1722 = vmatprep.subr.mxu0 0.0
    %1723 = vmatpush1.msra.mxu0 0.0
    %1724 = vmatprep.subr.mxu0 0.0
    %1725 = vmatpush1.msra.mxu0 0.0
    %1726 = vmatprep.subr.mxu0 0.0
    %1727 = vmatpush1.msra.mxu0 0.0
    %1728 = vmatprep.subr.mxu0 0.0
    %1729 = vmatpush1.msra.mxu0 0.0
    %1730 = vmatprep.subr.mxu0 0.0
    %1731 = vmatpush1.msra.mxu0 0.0
    %1732 = vmatprep.subr.mxu0 0.0
    %1733 = vmatpush1.msra.mxu0 0.0
    %1734 = vmatprep.subr.mxu0 0.0
    %1735 = vmatpush1.msra.mxu0 0.0
    %1736 = vmatprep.subr.mxu0 0.0
    %1737 = vmatpush1.msra.mxu0 0.0
    %1738 = vmatprep.subr.mxu0 0.0
    %1739 = vmatpush1.msra.mxu0 0.0
    %1740 = vmatprep.subr.mxu0 0.0
    %1741 = vmatpush1.msra.mxu0 0.0
    %1742 = vmatprep.subr.mxu0 0.0
    %1743 = vmatpush1.msra.mxu0 %v146
    %1744 = vmatprep.subr.mxu0 0.0
    %1745 = vmatpush2.msra.mxu0 0.0
    %1746 = vmatprep.subr.mxu0 0.0
    %1747 = vmatpush2.msra.mxu0 0.0
    %1748 = vmatprep.subr.mxu0 0.0
    %1749 = vmatpush2.msra.mxu0 0.0
    %1750 = vmatprep.subr.mxu0 0.0
    %1751 = vmatpush2.msra.mxu0 0.0
    %1752 = vmatprep.subr.mxu0 0.0
    %1753 = vmatpush2.msra.mxu0 0.0
    %1754 = vmatprep.subr.mxu0 0.0
    %1755 = vmatpush2.msra.mxu0 0.0
    %1756 = vmatprep.subr.mxu0 0.0
    %1757 = vmatpush2.msra.mxu0 0.0
    %1758 = vmatprep.subr.mxu0 0.0
    %1759 = vmatpush2.msra.mxu0 0.0
    %1760 = vmatprep.subr.mxu0 0.0
    %1761 = vmatpush2.msra.mxu0 0.0
    %1762 = vmatprep.subr.mxu0 0.0
    %1763 = vmatpush2.msra.mxu0 0.0
    %1764 = vmatprep.subr.mxu0 0.0
    %1765 = vmatpush2.msra.mxu0 0.0
    %1766 = vmatprep.subr.mxu0 0.0
    %1767 = vmatpush2.msra.mxu0 0.0
    %1768 = vmatprep.subr.mxu0 0.0
    %1769 = vmatpush2.msra.mxu0 0.0
    %1770 = vmatprep.subr.mxu0 0.0
    %1771 = vmatpush2.msra.mxu0 0.0
    %1772 = vmatprep.subr.mxu0 0.0
    %1773 = vmatpush2.msra.mxu0 0.0
    %1774 = vmatprep.subr.mxu0 0.0
    %1775 = vmatpush2.msra.mxu0 0.0
    %1776 = vmatprep.mubr.f32.mxu0 0.0
    %1777 = vmatmul.mubr.f32.gmra.mxu0 %v1710
    %v1778 = vpop.f32.mrf.mxu0
    %v1779 = vadd.f32 0.0, %v1778
    %v1780 = vpop.f32.mrf.mxu0
    %1781 = vdwg.mxu0
    %v1782 = vadd.f32 %v1704, %v1779
    %v1783 = vmul.f32 %v1782, 0.5
    %v1784 = vtanh.pop %v1783
    %v1785 = vmul.f32 %v1784, 0.5
    %v1786 = vadd.f32 %v1785, 0.5
    %v1787 = vtanh.pop %v1782
    %v1788 = vmul.f32 %v1786, %v1522
    %1790 = vrot.lane.b32.xlu0 %v1787, 112
    %v1791 = vpop.permute.xlu0 %1790
    %v1793 = vmul.f32 %v1786, %v1791
    %1795 = vrot.lane.b32.xlu0 %v1793, 8
    %v1796 = vpop.permute.xlu0 %1795
    %v1798 = vadd.f32 %v1788, %v1796
    %v1799 = vtanh.pop %v1798
    %1801 = vrot.lane.b32.xlu0 %v1799, 16
    %v1802 = vpop.permute.xlu0 %1801
    %v1804 = vmul.f32 %v1786, %v1802
    %v1805 = vld [vmem:[#allocation2 + $0x6] sm:$0x1]
    %1807 = vrot.lane.b32.xlu0 %v1627, 32
    %v1808 = vpop.permute.xlu0 %1807
    %v1809 = vsel %vm153, %v1808, 0
    %1811 = vmatprep.subr.mxu0 0.0
    %1812 = vmatpush1.msra.mxu0 0.0
    %1813 = vmatprep.subr.mxu0 0.0
    %1814 = vmatpush1.msra.mxu0 0.0
    %1815 = vmatprep.subr.mxu0 0.0
    %1816 = vmatpush1.msra.mxu0 0.0
    %1817 = vmatprep.subr.mxu0 0.0
    %1818 = vmatpush1.msra.mxu0 0.0
    %1819 = vmatprep.subr.mxu0 0.0
    %1820 = vmatpush1.msra.mxu0 0.0
    %1821 = vmatprep.subr.mxu0 0.0
    %1822 = vmatpush1.msra.mxu0 0.0
    %1823 = vmatprep.subr.mxu0 0.0
    %1824 = vmatpush1.msra.mxu0 0.0
    %1825 = vmatprep.subr.mxu0 0.0
    %1826 = vmatpush1.msra.mxu0 0.0
    %1827 = vmatprep.subr.mxu0 0.0
    %1828 = vmatpush1.msra.mxu0 0.0
    %1829 = vmatprep.subr.mxu0 0.0
    %1830 = vmatpush1.msra.mxu0 0.0
    %1831 = vmatprep.subr.mxu0 0.0
    %1832 = vmatpush1.msra.mxu0 0.0
    %1833 = vmatprep.subr.mxu0 0.0
    %1834 = vmatpush1.msra.mxu0 0.0
    %1835 = vmatprep.subr.mxu0 0.0
    %1836 = vmatpush1.msra.mxu0 %v145
    %1837 = vmatprep.subr.mxu0 0.0
    %1838 = vmatpush1.msra.mxu0 %v144
    %1839 = vmatprep.subr.mxu0 0.0
    %1840 = vmatpush1.msra.mxu0 %v143
    %1841 = vmatprep.subr.mxu0 0.0
    %1842 = vmatpush1.msra.mxu0 %v142
    %1843 = vmatprep.subr.mxu0 0.0
    %1844 = vmatpush2.msra.mxu0 0.0
    %1845 = vmatprep.subr.mxu0 0.0
    %1846 = vmatpush2.msra.mxu0 0.0
    %1847 = vmatprep.subr.mxu0 0.0
    %1848 = vmatpush2.msra.mxu0 0.0
    %1849 = vmatprep.subr.mxu0 0.0
    %1850 = vmatpush2.msra.mxu0 0.0
    %1851 = vmatprep.subr.mxu0 0.0
    %1852 = vmatpush2.msra.mxu0 0.0
    %1853 = vmatprep.subr.mxu0 0.0
    %1854 = vmatpush2.msra.mxu0 0.0
    %1855 = vmatprep.subr.mxu0 0.0
    %1856 = vmatpush2.msra.mxu0 0.0
    %1857 = vmatprep.subr.mxu0 0.0
    %1858 = vmatpush2.msra.mxu0 0.0
    %1859 = vmatprep.subr.mxu0 0.0
    %1860 = vmatpush2.msra.mxu0 0.0
    %1861 = vmatprep.subr.mxu0 0.0
    %1862 = vmatpush2.msra.mxu0 0.0
    %1863 = vmatprep.subr.mxu0 0.0
    %1864 = vmatpush2.msra.mxu0 0.0
    %1865 = vmatprep.subr.mxu0 0.0
    %1866 = vmatpush2.msra.mxu0 0.0
    %1867 = vmatprep.subr.mxu0 0.0
    %1868 = vmatpush2.msra.mxu0 0.0
    %1869 = vmatprep.subr.mxu0 0.0
    %1870 = vmatpush2.msra.mxu0 0.0
    %1871 = vmatprep.subr.mxu0 0.0
    %1872 = vmatpush2.msra.mxu0 0.0
    %1873 = vmatprep.subr.mxu0 0.0
    %1874 = vmatpush2.msra.mxu0 0.0
    %1875 = vmatprep.mubr.f32.mxu0 0.0
    %1876 = vmatmul.mubr.f32.gmra.mxu0 %v1809
    %v1877 = vpop.f32.mrf.mxu0
    %v1878 = vadd.f32 0.0, %v1877
    %v1879 = vpop.f32.mrf.mxu0
    %1880 = vdwg.mxu0
    %v1881 = vadd.f32 %v1805, %v1878
    %v1882 = vmul.f32 %v1881, 0.5
    %v1883 = vtanh.pop %v1882
    %v1884 = vmul.f32 %v1883, 0.5
    %v1885 = vadd.f32 %v1884, 0.5
    %v1886 = vtanh.pop %v1881
    %v1887 = vmul.f32 %v1885, %v1621
    %1889 = vrot.lane.b32.xlu0 %v1886, 64
    %v1890 = vpop.permute.xlu0 %1889
    %v1892 = vmul.f32 %v1885, %v1890
    %1894 = vrot.lane.b32.xlu0 %v1892, 32
    %v1895 = vpop.permute.xlu0 %1894
    %v1897 = vadd.f32 %v1887, %v1895
    %v1898 = vtanh.pop %v1897
    %1900 = vrot.lane.b32.xlu0 %v1898, 64
    %v1901 = vpop.permute.xlu0 %1900
    %v1903 = vmul.f32 %v1885, %v1901
    %v1904 = vmul.f32 %v1903, 0.5
    %v1905 = vtanh.pop %v1904
    %v1906 = vmul.f32 %v1905, 0.5
    %v1907 = vadd.f32 %v1906, 0.5
    %1909 = vrot.lane.b32.xlu0 %v1907, 32
    %v1910 = vpop.permute.xlu0 %1909
    %v1911 = vsel %vm153, %v1910, 0
    %1913 = vmatprep.subr.mxu0 0.0
    %1914 = vmatpush1.msra.mxu0 0.0
    %1915 = vmatprep.subr.mxu0 0.0
    %1916 = vmatpush1.msra.mxu0 0.0
    %1917 = vmatprep.subr.mxu0 0.0
    %1918 = vmatpush1.msra.mxu0 0.0
    %1919 = vmatprep.subr.mxu0 0.0
    %1920 = vmatpush1.msra.mxu0 0.0
    %1921 = vmatprep.subr.mxu0 0.0
    %1922 = vmatpush1.msra.mxu0 0.0
    %1923 = vmatprep.subr.mxu0 0.0
    %1924 = vmatpush1.msra.mxu0 0.0
    %1925 = vmatprep.subr.mxu0 0.0
    %1926 = vmatpush1.msra.mxu0 0.0
    %1927 = vmatprep.subr.mxu0 0.0
    %1928 = vmatpush1.msra.mxu0 0.0
    %1929 = vmatprep.subr.mxu0 0.0
    %1930 = vmatpush1.msra.mxu0 0.0
    %1931 = vmatprep.subr.mxu0 0.0
    %1932 = vmatpush1.msra.mxu0 0.0
    %1933 = vmatprep.subr.mxu0 0.0
    %1934 = vmatpush1.msra.mxu0 0.0
    %1935 = vmatprep.subr.mxu0 0.0
    %1936 = vmatpush1.msra.mxu0 0.0
    %1937 = vmatprep.subr.mxu0 0.0
    %1938 = vmatpush1.msra.mxu0 %v150
    %1939 = vmatprep.subr.mxu0 0.0
    %1940 = vmatpush1.msra.mxu0 %v149
    %1941 = vmatprep.subr.mxu0 0.0
    %1942 = vmatpush1.msra.mxu0 %v148
    %1943 = vmatprep.subr.mxu0 0.0
    %1944 = vmatpush1.msra.mxu0 %v147
    %1945 = vmatprep.subr.mxu0 0.0
    %1946 = vmatpush2.msra.mxu0 0.0
    %1947 = vmatprep.subr.mxu0 0.0
    %1948 = vmatpush2.msra.mxu0 0.0
    %1949 = vmatprep.subr.mxu0 0.0
    %1950 = vmatpush2.msra.mxu0 0.0
    %1951 = vmatprep.subr.mxu0 0.0
    %1952 = vmatpush2.msra.mxu0 0.0
    %1953 = vmatprep.subr.mxu0 0.0
    %1954 = vmatpush2.msra.mxu0 0.0
    %1955 = vmatprep.subr.mxu0 0.0
    %1956 = vmatpush2.msra.mxu0 0.0
    %1957 = vmatprep.subr.mxu0 0.0
    %1958 = vmatpush2.msra.mxu0 0.0
    %1959 = vmatprep.subr.mxu0 0.0
    %1960 = vmatpush2.msra.mxu0 0.0
    %1961 = vmatprep.subr.mxu0 0.0
    %1962 = vmatpush2.msra.mxu0 0.0
    %1963 = vmatprep.subr.mxu0 0.0
    %1964 = vmatpush2.msra.mxu0 0.0
    %1965 = vmatprep.subr.mxu0 0.0
    %1966 = vmatpush2.msra.mxu0 0.0
    %1967 = vmatprep.subr.mxu0 0.0
    %1968 = vmatpush2.msra.mxu0 0.0
    %1969 = vmatprep.subr.mxu0 0.0
    %1970 = vmatpush2.msra.mxu0 0.0
    %1971 = vmatprep.subr.mxu0 0.0
    %1972 = vmatpush2.msra.mxu0 0.0
    %1973 = vmatprep.subr.mxu0 0.0
    %1974 = vmatpush2.msra.mxu0 0.0
    %1975 = vmatprep.subr.mxu0 0.0
    %1976 = vmatpush2.msra.mxu0 0.0
    %1977 = vmatprep.mubr.f32.mxu0 0.0
    %1978 = vmatmul.mubr.f32.gmra.mxu0 %v1911
    %v1979 = vpop.f32.mrf.mxu0
    %v1980 = vadd.f32 %v151, %v1979
    %v1981 = vpop.f32.mrf.mxu0
    %1982 = vdwg.mxu0
    %1984 = vrot.lane.b32.xlu0 %v1804, 104
    %v1985 = vpop.permute.xlu0 %1984
    %v1986 = vsel %vm329, %v1985, 0
    %1988 = vmatprep.subr.mxu0 0.0
    %1989 = vmatpush1.msra.mxu0 0.0
    %1990 = vmatprep.subr.mxu0 0.0
    %1991 = vmatpush1.msra.mxu0 0.0
    %1992 = vmatprep.subr.mxu0 0.0
    %1993 = vmatpush1.msra.mxu0 0.0
    %1994 = vmatprep.subr.mxu0 0.0
    %1995 = vmatpush1.msra.mxu0 0.0
    %1996 = vmatprep.subr.mxu0 0.0
    %1997 = vmatpush1.msra.mxu0 0.0
    %1998 = vmatprep.subr.mxu0 0.0
    %1999 = vmatpush1.msra.mxu0 0.0
    %2000 = vmatprep.subr.mxu0 0.0
    %2001 = vmatpush1.msra.mxu0 0.0
    %2002 = vmatprep.subr.mxu0 0.0
    %2003 = vmatpush1.msra.mxu0 0.0
    %2004 = vmatprep.subr.mxu0 0.0
    %2005 = vmatpush1.msra.mxu0 0.0
    %2006 = vmatprep.subr.mxu0 0.0
    %2007 = vmatpush1.msra.mxu0 0.0
    %2008 = vmatprep.subr.mxu0 0.0
    %2009 = vmatpush1.msra.mxu0 0.0
    %2010 = vmatprep.subr.mxu0 0.0
    %2011 = vmatpush1.msra.mxu0 0.0
    %2012 = vmatprep.subr.mxu0 0.0
    %2013 = vmatpush1.msra.mxu0 0.0
    %2014 = vmatprep.subr.mxu0 0.0
    %2015 = vmatpush1.msra.mxu0 0.0
    %2016 = vmatprep.subr.mxu0 0.0
    %2017 = vmatpush1.msra.mxu0 0.0
    %2018 = vmatprep.subr.mxu0 0.0
    %2019 = vmatpush1.msra.mxu0 %v146
    %2020 = vmatprep.subr.mxu0 0.0
    %2021 = vmatpush2.msra.mxu0 0.0
    %2022 = vmatprep.subr.mxu0 0.0
    %2023 = vmatpush2.msra.mxu0 0.0
    %2024 = vmatprep.subr.mxu0 0.0
    %2025 = vmatpush2.msra.mxu0 0.0
    %2026 = vmatprep.subr.mxu0 0.0
    %2027 = vmatpush2.msra.mxu0 0.0
    %2028 = vmatprep.subr.mxu0 0.0
    %2029 = vmatpush2.msra.mxu0 0.0
    %2030 = vmatprep.subr.mxu0 0.0
    %2031 = vmatpush2.msra.mxu0 0.0
    %2032 = vmatprep.subr.mxu0 0.0
    %2033 = vmatpush2.msra.mxu0 0.0
    %2034 = vmatprep.subr.mxu0 0.0
    %2035 = vmatpush2.msra.mxu0 0.0
    %2036 = vmatprep.subr.mxu0 0.0
    %2037 = vmatpush2.msra.mxu0 0.0
    %2038 = vmatprep.subr.mxu0 0.0
    %2039 = vmatpush2.msra.mxu0 0.0
    %2040 = vmatprep.subr.mxu0 0.0
    %2041 = vmatpush2.msra.mxu0 0.0
    %2042 = vmatprep.subr.mxu0 0.0
    %2043 = vmatpush2.msra.mxu0 0.0
    %2044 = vmatprep.subr.mxu0 0.0
    %2045 = vmatpush2.msra.mxu0 0.0
    %2046 = vmatprep.subr.mxu0 0.0
    %2047 = vmatpush2.msra.mxu0 0.0
    %2048 = vmatprep.subr.mxu0 0.0
    %2049 = vmatpush2.msra.mxu0 0.0
    %2050 = vmatprep.subr.mxu0 0.0
    %2051 = vmatpush2.msra.mxu0 0.0
    %2052 = vmatprep.mubr.f32.mxu0 0.0
    %2053 = vmatmul.mubr.f32.gmra.mxu0 %v1986
    %v2054 = vpop.f32.mrf.mxu0
    %v2055 = vadd.f32 0.0, %v2054
    %v2056 = vpop.f32.mrf.mxu0
    %2057 = vdwg.mxu0
    %v2058 = vadd.f32 %v1980, %v2055
    %v2059 = vmul.f32 %v2058, 0.5
    %v2060 = vtanh.pop %v2059
    %v2061 = vmul.f32 %v2060, 0.5
    %v2062 = vadd.f32 %v2061, 0.5
    %v2063 = vtanh.pop %v2058
    %v2064 = vmul.f32 %v2062, %v1798
    %2066 = vrot.lane.b32.xlu0 %v2063, 112
    %v2067 = vpop.permute.xlu0 %2066
    %v2069 = vmul.f32 %v2062, %v2067
    %2071 = vrot.lane.b32.xlu0 %v2069, 8
    %v2072 = vpop.permute.xlu0 %2071
    %v2074 = vadd.f32 %v2064, %v2072
    %v2075 = vtanh.pop %v2074
    %2077 = vrot.lane.b32.xlu0 %v2075, 16
    %v2078 = vpop.permute.xlu0 %2077
    %v2080 = vmul.f32 %v2062, %v2078
    %v2081 = vld [vmem:[#allocation2 + $0x7] sm:$0x1]
    %2083 = vrot.lane.b32.xlu0 %v1903, 32
    %v2084 = vpop.permute.xlu0 %2083
    %v2085 = vsel %vm153, %v2084, 0
    %2087 = vmatprep.subr.mxu0 0.0
    %2088 = vmatpush1.msra.mxu0 0.0
    %2089 = vmatprep.subr.mxu0 0.0
    %2090 = vmatpush1.msra.mxu0 0.0
    %2091 = vmatprep.subr.mxu0 0.0
    %2092 = vmatpush1.msra.mxu0 0.0
    %2093 = vmatprep.subr.mxu0 0.0
    %2094 = vmatpush1.msra.mxu0 0.0
    %2095 = vmatprep.subr.mxu0 0.0
    %2096 = vmatpush1.msra.mxu0 0.0
    %2097 = vmatprep.subr.mxu0 0.0
    %2098 = vmatpush1.msra.mxu0 0.0
    %2099 = vmatprep.subr.mxu0 0.0
    %2100 = vmatpush1.msra.mxu0 0.0
    %2101 = vmatprep.subr.mxu0 0.0
    %2102 = vmatpush1.msra.mxu0 0.0
    %2103 = vmatprep.subr.mxu0 0.0
    %2104 = vmatpush1.msra.mxu0 0.0
    %2105 = vmatprep.subr.mxu0 0.0
    %2106 = vmatpush1.msra.mxu0 0.0
    %2107 = vmatprep.subr.mxu0 0.0
    %2108 = vmatpush1.msra.mxu0 0.0
    %2109 = vmatprep.subr.mxu0 0.0
    %2110 = vmatpush1.msra.mxu0 0.0
    %2111 = vmatprep.subr.mxu0 0.0
    %2112 = vmatpush1.msra.mxu0 %v145
    %2113 = vmatprep.subr.mxu0 0.0
    %2114 = vmatpush1.msra.mxu0 %v144
    %2115 = vmatprep.subr.mxu0 0.0
    %2116 = vmatpush1.msra.mxu0 %v143
    %2117 = vmatprep.subr.mxu0 0.0
    %2118 = vmatpush1.msra.mxu0 %v142
    %2119 = vmatprep.subr.mxu0 0.0
    %2120 = vmatpush2.msra.mxu0 0.0
    %2121 = vmatprep.subr.mxu0 0.0
    %2122 = vmatpush2.msra.mxu0 0.0
    %2123 = vmatprep.subr.mxu0 0.0
    %2124 = vmatpush2.msra.mxu0 0.0
    %2125 = vmatprep.subr.mxu0 0.0
    %2126 = vmatpush2.msra.mxu0 0.0
    %2127 = vmatprep.subr.mxu0 0.0
    %2128 = vmatpush2.msra.mxu0 0.0
    %2129 = vmatprep.subr.mxu0 0.0
    %2130 = vmatpush2.msra.mxu0 0.0
    %2131 = vmatprep.subr.mxu0 0.0
    %2132 = vmatpush2.msra.mxu0 0.0
    %2133 = vmatprep.subr.mxu0 0.0
    %2134 = vmatpush2.msra.mxu0 0.0
    %2135 = vmatprep.subr.mxu0 0.0
    %2136 = vmatpush2.msra.mxu0 0.0
    %2137 = vmatprep.subr.mxu0 0.0
    %2138 = vmatpush2.msra.mxu0 0.0
    %2139 = vmatprep.subr.mxu0 0.0
    %2140 = vmatpush2.msra.mxu0 0.0
    %2141 = vmatprep.subr.mxu0 0.0
    %2142 = vmatpush2.msra.mxu0 0.0
    %2143 = vmatprep.subr.mxu0 0.0
    %2144 = vmatpush2.msra.mxu0 0.0
    %2145 = vmatprep.subr.mxu0 0.0
    %2146 = vmatpush2.msra.mxu0 0.0
    %2147 = vmatprep.subr.mxu0 0.0
    %2148 = vmatpush2.msra.mxu0 0.0
    %2149 = vmatprep.subr.mxu0 0.0
    %2150 = vmatpush2.msra.mxu0 0.0
    %2151 = vmatprep.mubr.f32.mxu0 0.0
    %2152 = vmatmul.mubr.f32.gmra.mxu0 %v2085
    %v2153 = vpop.f32.mrf.mxu0
    %v2154 = vadd.f32 0.0, %v2153
    %v2155 = vpop.f32.mrf.mxu0
    %2156 = vdwg.mxu0
    %v2157 = vadd.f32 %v2081, %v2154
    %v2158 = vmul.f32 %v2157, 0.5
    %v2159 = vtanh.pop %v2158
    %v2160 = vmul.f32 %v2159, 0.5
    %v2161 = vadd.f32 %v2160, 0.5
    %v2162 = vtanh.pop %v2157
    %v2163 = vmul.f32 %v2161, %v1897
    %2165 = vrot.lane.b32.xlu0 %v2162, 64
    %v2166 = vpop.permute.xlu0 %2165
    %v2168 = vmul.f32 %v2161, %v2166
    %2170 = vrot.lane.b32.xlu0 %v2168, 32
    %v2171 = vpop.permute.xlu0 %2170
    %v2173 = vadd.f32 %v2163, %v2171
    %v2174 = vtanh.pop %v2173
    %2176 = vrot.lane.b32.xlu0 %v2174, 64
    %v2177 = vpop.permute.xlu0 %2176
    %v2179 = vmul.f32 %v2161, %v2177
    %v2180 = vmul.f32 %v2179, 0.5
    %v2181 = vtanh.pop %v2180
    %v2182 = vmul.f32 %v2181, 0.5
    %v2183 = vadd.f32 %v2182, 0.5
    %2185 = vrot.lane.b32.xlu0 %v2183, 32
    %v2186 = vpop.permute.xlu0 %2185
    %v2187 = vsel %vm153, %v2186, 0
    %2189 = vmatprep.subr.mxu0 0.0
    %2190 = vmatpush1.msra.mxu0 0.0
    %2191 = vmatprep.subr.mxu0 0.0
    %2192 = vmatpush1.msra.mxu0 0.0
    %2193 = vmatprep.subr.mxu0 0.0
    %2194 = vmatpush1.msra.mxu0 0.0
    %2195 = vmatprep.subr.mxu0 0.0
    %2196 = vmatpush1.msra.mxu0 0.0
    %2197 = vmatprep.subr.mxu0 0.0
    %2198 = vmatpush1.msra.mxu0 0.0
    %2199 = vmatprep.subr.mxu0 0.0
    %2200 = vmatpush1.msra.mxu0 0.0
    %2201 = vmatprep.subr.mxu0 0.0
    %2202 = vmatpush1.msra.mxu0 0.0
    %2203 = vmatprep.subr.mxu0 0.0
    %2204 = vmatpush1.msra.mxu0 0.0
    %2205 = vmatprep.subr.mxu0 0.0
    %2206 = vmatpush1.msra.mxu0 0.0
    %2207 = vmatprep.subr.mxu0 0.0
    %2208 = vmatpush1.msra.mxu0 0.0
    %2209 = vmatprep.subr.mxu0 0.0
    %2210 = vmatpush1.msra.mxu0 0.0
    %2211 = vmatprep.subr.mxu0 0.0
    %2212 = vmatpush1.msra.mxu0 0.0
    %2213 = vmatprep.subr.mxu0 0.0
    %2214 = vmatpush1.msra.mxu0 %v150
    %2215 = vmatprep.subr.mxu0 0.0
    %2216 = vmatpush1.msra.mxu0 %v149
    %2217 = vmatprep.subr.mxu0 0.0
    %2218 = vmatpush1.msra.mxu0 %v148
    %2219 = vmatprep.subr.mxu0 0.0
    %2220 = vmatpush1.msra.mxu0 %v147
    %2221 = vmatprep.subr.mxu0 0.0
    %2222 = vmatpush2.msra.mxu0 0.0
    %2223 = vmatprep.subr.mxu0 0.0
    %2224 = vmatpush2.msra.mxu0 0.0
    %2225 = vmatprep.subr.mxu0 0.0
    %2226 = vmatpush2.msra.mxu0 0.0
    %2227 = vmatprep.subr.mxu0 0.0
    %2228 = vmatpush2.msra.mxu0 0.0
    %2229 = vmatprep.subr.mxu0 0.0
    %2230 = vmatpush2.msra.mxu0 0.0
    %2231 = vmatprep.subr.mxu0 0.0
    %2232 = vmatpush2.msra.mxu0 0.0
    %2233 = vmatprep.subr.mxu0 0.0
    %2234 = vmatpush2.msra.mxu0 0.0
    %2235 = vmatprep.subr.mxu0 0.0
    %2236 = vmatpush2.msra.mxu0 0.0
    %2237 = vmatprep.subr.mxu0 0.0
    %2238 = vmatpush2.msra.mxu0 0.0
    %2239 = vmatprep.subr.mxu0 0.0
    %2240 = vmatpush2.msra.mxu0 0.0
    %2241 = vmatprep.subr.mxu0 0.0
    %2242 = vmatpush2.msra.mxu0 0.0
    %2243 = vmatprep.subr.mxu0 0.0
    %2244 = vmatpush2.msra.mxu0 0.0
    %2245 = vmatprep.subr.mxu0 0.0
    %2246 = vmatpush2.msra.mxu0 0.0
    %2247 = vmatprep.subr.mxu0 0.0
    %2248 = vmatpush2.msra.mxu0 0.0
    %2249 = vmatprep.subr.mxu0 0.0
    %2250 = vmatpush2.msra.mxu0 0.0
    %2251 = vmatprep.subr.mxu0 0.0
    %2252 = vmatpush2.msra.mxu0 0.0
    %2253 = vmatprep.mubr.f32.mxu0 0.0
    %2254 = vmatmul.mubr.f32.gmra.mxu0 %v2187
    %v2255 = vpop.f32.mrf.mxu0
    %v2256 = vadd.f32 %v151, %v2255
    %v2257 = vpop.f32.mrf.mxu0
    %2258 = vdwg.mxu0
    %2260 = vrot.lane.b32.xlu0 %v2080, 104
    %v2261 = vpop.permute.xlu0 %2260
    %v2262 = vsel %vm329, %v2261, 0
    %2264 = vmatprep.subr.mxu0 0.0
    %2265 = vmatpush1.msra.mxu0 0.0
    %2266 = vmatprep.subr.mxu0 0.0
    %2267 = vmatpush1.msra.mxu0 0.0
    %2268 = vmatprep.subr.mxu0 0.0
    %2269 = vmatpush1.msra.mxu0 0.0
    %2270 = vmatprep.subr.mxu0 0.0
    %2271 = vmatpush1.msra.mxu0 0.0
    %2272 = vmatprep.subr.mxu0 0.0
    %2273 = vmatpush1.msra.mxu0 0.0
    %2274 = vmatprep.subr.mxu0 0.0
    %2275 = vmatpush1.msra.mxu0 0.0
    %2276 = vmatprep.subr.mxu0 0.0
    %2277 = vmatpush1.msra.mxu0 0.0
    %2278 = vmatprep.subr.mxu0 0.0
    %2279 = vmatpush1.msra.mxu0 0.0
    %2280 = vmatprep.subr.mxu0 0.0
    %2281 = vmatpush1.msra.mxu0 0.0
    %2282 = vmatprep.subr.mxu0 0.0
    %2283 = vmatpush1.msra.mxu0 0.0
    %2284 = vmatprep.subr.mxu0 0.0
    %2285 = vmatpush1.msra.mxu0 0.0
    %2286 = vmatprep.subr.mxu0 0.0
    %2287 = vmatpush1.msra.mxu0 0.0
    %2288 = vmatprep.subr.mxu0 0.0
    %2289 = vmatpush1.msra.mxu0 0.0
    %2290 = vmatprep.subr.mxu0 0.0
    %2291 = vmatpush1.msra.mxu0 0.0
    %2292 = vmatprep.subr.mxu0 0.0
    %2293 = vmatpush1.msra.mxu0 0.0
    %2294 = vmatprep.subr.mxu0 0.0
    %2295 = vmatpush1.msra.mxu0 %v146
    %2296 = vmatprep.subr.mxu0 0.0
    %2297 = vmatpush2.msra.mxu0 0.0
    %2298 = vmatprep.subr.mxu0 0.0
    %2299 = vmatpush2.msra.mxu0 0.0
    %2300 = vmatprep.subr.mxu0 0.0
    %2301 = vmatpush2.msra.mxu0 0.0
    %2302 = vmatprep.subr.mxu0 0.0
    %2303 = vmatpush2.msra.mxu0 0.0
    %2304 = vmatprep.subr.mxu0 0.0
    %2305 = vmatpush2.msra.mxu0 0.0
    %2306 = vmatprep.subr.mxu0 0.0
    %2307 = vmatpush2.msra.mxu0 0.0
    %2308 = vmatprep.subr.mxu0 0.0
    %2309 = vmatpush2.msra.mxu0 0.0
    %2310 = vmatprep.subr.mxu0 0.0
    %2311 = vmatpush2.msra.mxu0 0.0
    %2312 = vmatprep.subr.mxu0 0.0
    %2313 = vmatpush2.msra.mxu0 0.0
    %2314 = vmatprep.subr.mxu0 0.0
    %2315 = vmatpush2.msra.mxu0 0.0
    %2316 = vmatprep.subr.mxu0 0.0
    %2317 = vmatpush2.msra.mxu0 0.0
    %2318 = vmatprep.subr.mxu0 0.0
    %2319 = vmatpush2.msra.mxu0 0.0
    %2320 = vmatprep.subr.mxu0 0.0
    %2321 = vmatpush2.msra.mxu0 0.0
    %2322 = vmatprep.subr.mxu0 0.0
    %2323 = vmatpush2.msra.mxu0 0.0
    %2324 = vmatprep.subr.mxu0 0.0
    %2325 = vmatpush2.msra.mxu0 0.0
    %2326 = vmatprep.subr.mxu0 0.0
    %2327 = vmatpush2.msra.mxu0 0.0
    %2328 = vmatprep.mubr.f32.mxu0 0.0
    %2329 = vmatmul.mubr.f32.gmra.mxu0 %v2262
    %v2330 = vpop.f32.mrf.mxu0
    %v2331 = vadd.f32 0.0, %v2330
    %v2332 = vpop.f32.mrf.mxu0
    %2333 = vdwg.mxu0
    %v2334 = vadd.f32 %v2256, %v2331
    %v2335 = vmul.f32 %v2334, 0.5
    %v2336 = vtanh.pop %v2335
    %v2337 = vmul.f32 %v2336, 0.5
    %v2338 = vadd.f32 %v2337, 0.5
    %v2339 = vtanh.pop %v2334
    %v2340 = vmul.f32 %v2338, %v2074
    %2342 = vrot.lane.b32.xlu0 %v2339, 112
    %v2343 = vpop.permute.xlu0 %2342
    %v2345 = vmul.f32 %v2338, %v2343
    %2347 = vrot.lane.b32.xlu0 %v2345, 8
    %v2348 = vpop.permute.xlu0 %2347
    %v2350 = vadd.f32 %v2340, %v2348
    %v2351 = vtanh.pop %v2350
    %2353 = vrot.lane.b32.xlu0 %v2351, 16
    %v2354 = vpop.permute.xlu0 %2353
    %v2356 = vmul.f32 %v2338, %v2354
    %v2357 = vtanh.pop %v2356
    %2359 = vrot.lane.b32.xlu0 %v2357, 104
    %v2360 = vpop.permute.xlu0 %2359
    %vm2362 = vcmask 57344
    %2363 = vst.msk [vmem:[#allocation11] sm:$0x1] %vm2362, %v2360
    // Predicated region
    $region46: #{tpu_custom_call.1} parent=1 // pred_check
      _
    $region47: #{tpu_custom_call.1} parent=1 // pred_check_branch
      %2365 = sbr.rel (0) target = $region49
    $region48: #{tpu_custom_call.1} parent=1 // pred_region
      %s2367 = ssub.s32 16, 16
      %2368 = vsyncadd [#allocation5], %s2367
      %s2370 = sshll.u32 [#allocation11], 4
      %s2371 = int_to_ptr.vmem [resolvable:$true] %s2370
      %2373 = dma.vmem_to_hbm [thread:$0]  %s2371, 16, %s7, [#allocation5]
    $region49: #{tpu_custom_call.1} parent=1 // pred_fallthru
      _
    // Predicated region
    $region50: #{tpu_custom_call.1} parent=1 // pred_check
      _
    $region51: #{tpu_custom_call.1} parent=1 // pred_check_branch
      %2375 = sbr.rel (0) target = $region53
    $region52: #{tpu_custom_call.1} parent=1 // pred_region
      %2376 = dma.done [#allocation5], 16
    $region53: #{tpu_custom_call.1} parent=1 // pred_fallthru
      _
    %2377 = vsyncpa [#allocation4], 1
    %2378 = vsyncpa [#allocation7], 1
    %2379 = vsyncpa [#allocation10], 1
    %2380 = vsyncpa [#allocation5], 1

</llo_original>
